<compile_context>
chip_gen: v7x
topology: tpu7x:2x2x1
jax: 0.10.0
libtpu: 0.0.40
codegen_flags: <defaults>
</compile_context>

<pallas_src>
import math

import jax
import jax.numpy as jnp
from jax.experimental import pallas as pl
from jax.experimental.pallas import tpu as pltpu


# --------------------------------------------------------------------------
# helpers shared by the kernel and the pure-JAX reference
# --------------------------------------------------------------------------
def _layer_norm(x, g, b, eps=1e-5):
    mu = jnp.mean(x, axis=-1, keepdims=True)
    var = jnp.mean((x - mu) ** 2, axis=-1, keepdims=True)
    return (x - mu) * jax.lax.rsqrt(var + eps) * g + b


def _softmax_ref(x):
    m = jnp.max(x, axis=-1, keepdims=True)
    e = jnp.exp(x - m)
    return e / jnp.sum(e, axis=-1, keepdims=True)


def _gelu_exact(x):
    # exact (erf) GELU, matching torch.nn.GELU() default
    return 0.5 * x * (1.0 + jax.lax.erf(x * (1.0 / math.sqrt(2.0))))


# --------------------------------------------------------------------------
# Pallas kernel: grid = (num_layers, Hd // ffn_chunk)
#   chunk 0 of each layer runs LN1 + MHA + residual + LN2 (stashed to scratch)
#   every chunk runs one K-tile of the FFN, accumulating into x_out.
# --------------------------------------------------------------------------
def make_encoder_kernel(B, T, E, H, Dh, Hd, ffn_chunk):
    scale = 1.0 / math.sqrt(Dh)

    def kernel(x_in_ref,
               ln1_g_ref, ln1_b_ref,
               wq_ref, bq_ref, wk_ref, bk_ref, wv_ref, bv_ref,
               wo_ref, bo_ref,
               ln2_g_ref, ln2_b_ref,
               w1_ref, b1_ref, w2_ref, b2_ref,
               x_out_ref, probs_ref,
               xn2_ref):
        l = pl.program_id(0)   # layer (sequential)
        c = pl.program_id(1)   # FFN hidden-dim chunk (reduction axis, last)

        # ------------- once per layer: attention + LN2 prep (chunk 0) -------
        @pl.when(c == 0)
        def _attention_block():
            # Seed the resident activation block from HBM exactly once.
            @pl.when(l == 0)
            def _seed():
                pltpu.sync_copy(x_in_ref, x_out_ref)

            x = x_out_ref[...]                                   # (B, T, E) f32

            # ---- LN1 + packed multi-head self-attention ----
            xn = _layer_norm(x, ln1_g_ref[...], ln1_b_ref[...])  # (1,1,E) bcast
            xn2d = xn.reshape(B * T, E).astype(jnp.bfloat16)

            # bf16 x bf16 matmuls, f32 accumulation (one per Q/K/V slab).
            q_all = jnp.dot(xn2d, wq_ref[0],
                            preferred_element_type=jnp.float32) + bq_ref[0]
            k_all = jnp.dot(xn2d, wk_ref[0],
                            preferred_element_type=jnp.float32) + bk_ref[0]
            v_all = jnp.dot(xn2d, wv_ref[0],
                            preferred_element_type=jnp.float32) + bv_ref[0]

            def to_heads(m):     # (B*T, H*Dh) -> (H*B, T, Dh), g = h*B + b
                m = m.reshape(B * T, H, Dh)
                m = pltpu.einshape("thd->htd", m)   # single relayout per tensor
                return m.reshape(H * B, T, Dh)

            q = to_heads(q_all)
            k = to_heads(k_all)
            v = to_heads(v_all)

            # Attention core batched over the merged (head, batch) axis.
            # (Contraction dim is only Dh; kept in f32 — not the hot path.)
            s = jnp.einsum('btd,bsd->bts', q, k,
                           preferred_element_type=jnp.float32) * scale
            s = s - jnp.max(s, axis=-1, keepdims=True)
            e = jnp.exp(s)
            p = e * pl.reciprocal(jnp.sum(e, axis=-1, keepdims=True),
                                  approx=True)

            # All heads of this layer's sa_probs in a single store.
            probs_ref[0] = p                                     # (H*B, T, T)

            o = jnp.einsum('bts,bsd->btd', p, v,
                           preferred_element_type=jnp.float32)   # (H*B, T, Dh)

            # Merge heads back with one relayout, then one fused (H*Dh,E) proj.
            o = pltpu.einshape("htd->thd", o.reshape(H, B * T, Dh))
            o_cat = o.reshape(B * T, H * Dh).astype(jnp.bfloat16)
            sa = jnp.dot(o_cat, wo_ref[0],
                         preferred_element_type=jnp.float32) + bo_ref[0]
            x1 = x + sa.reshape(B, T, E)                         # residual 1

            # ---- LN2, stashed once in bf16 for all FFN chunks ----
            xn2 = _layer_norm(x1, ln2_g_ref[...], ln2_b_ref[...])
            xn2_ref[...] = xn2.reshape(B * T, E).astype(jnp.bfloat16)

            # Seed the FFN accumulator with residual + second-layer bias.
            x_out_ref[...] = x1 + b2_ref[...]

        # ------------- every grid step: one FFN hidden-dim chunk ------------
        h1 = jnp.dot(xn2_ref[...], w1_ref[0],
                     preferred_element_type=jnp.float32) + b1_ref[0]
        h1 = _gelu_exact(h1).astype(jnp.bfloat16)
        x_out_ref[...] += jnp.dot(
            h1, w2_ref[0], preferred_element_type=jnp.float32).reshape(B, T, E)

    return kernel


# --------------------------------------------------------------------------
# wrapper-side parameter packing (folding + bf16 streaming)
# --------------------------------------------------------------------------
def pack_params(params, weight_dtype=jnp.bfloat16):
    qkv_w = params['qkv_w']       # (L, H, E, 3*Dh)
    qkv_b = params['qkv_b']       # (L, H, 3*Dh)
    hproj_w = params['hproj_w']   # (L, H, Dh, E)
    hproj_b = params['hproj_b']   # (L, H, E)
    mha_w = params['mha_w']       # (L, H, E, E)  per-head row block of (H*E, E)
    mha_b = params['mha_b']       # (L, 1, E)
    L, H, E, threeDh = qkv_w.shape
    Dh = threeDh // 3

    def slab(w_part, b_part):     # (L,H,E,Dh),(L,H,Dh) -> (L,E,H*Dh),(L,1,H*Dh)
        w = jnp.transpose(w_part, (0, 2, 1, 3)).reshape(L, E, H * Dh)
        b = b_part.reshape(L, 1, H * Dh)
        return w, b

    wq, bq = slab(qkv_w[..., 0 * Dh:1 * Dh], qkv_b[..., 0 * Dh:1 * Dh])
    wk, bk = slab(qkv_w[..., 1 * Dh:2 * Dh], qkv_b[..., 1 * Dh:2 * Dh])
    wv, bv = slab(qkv_w[..., 2 * Dh:3 * Dh], qkv_b[..., 2 * Dh:3 * Dh])

    # Fold the per-head (Dh -> E) projection into the (H*E -> E) projection.
    wo = jnp.einsum('lhde,lhef->lhdf', hproj_w, mha_w).reshape(L, H * Dh, E)
    bo = (jnp.einsum('lhe,lhef->lf', hproj_b, mha_w)
          + mha_b[:, 0, :]).reshape(L, 1, E)

    cast = lambda a: a.astype(weight_dtype)
    return dict(
        ln1_g=params['ln1_g'], ln1_b=params['ln1_b'],
        ln2_g=params['ln2_g'], ln2_b=params['ln2_b'],
        wq=cast(wq), bq=bq, wk=cast(wk), bk=bk, wv=cast(wv), bv=bv,
        wo=cast(wo), bo=bo,
        w1=cast(params['ffn_w1']), b1=params['ffn_b1'],
        w2=cast(params['ffn_w2']), b2=params['ffn_b2'],
    )


def _pick_vmem_limit():
    try:
        cap = pltpu.get_tpu_info().vmem_capacity_bytes
    except Exception:
        cap = 64 * 1024 * 1024
    # 25% headroom for compiler scratch; never ask for more than 96 MiB.
    return int(min(cap * 3 // 4, 96 * 1024 * 1024))


def transformer_encoder(x, params, *, num_heads, hidden_dim, ffn_chunk=512,
                        weight_dtype=jnp.bfloat16):
    B, T, E = x.shape
    H = num_heads
    Dh = E // H
    Hd = hidden_dim
    L = params['qkv_w'].shape[0]
    n_chunks = Hd // ffn_chunk
    assert n_chunks * ffn_chunk == Hd

    kp = pack_params(params, weight_dtype)
    kernel = make_encoder_kernel(B, T, E, H, Dh, Hd, ffn_chunk)

    in_arrays = [x,
                 kp['ln1_g'], kp['ln1_b'],
                 kp['wq'], kp['bq'], kp['wk'], kp['bk'], kp['wv'], kp['bv'],
                 kp['wo'], kp['bo'],
                 kp['ln2_g'], kp['ln2_b'],
                 kp['w1'], kp['b1'], kp['w2'], kp['b2']]

    def layer_spec(a):            # whole-layer block, streamed per l, reused per c
        return pl.BlockSpec((1,) + a.shape[1:], lambda l, c: (l, 0, 0))

    in_specs = [
        pl.BlockSpec(memory_space=pl.ANY),                      # x: raw HBM ref
        layer_spec(kp['ln1_g']), layer_spec(kp['ln1_b']),
        layer_spec(kp['wq']), layer_spec(kp['bq']),
        layer_spec(kp['wk']), layer_spec(kp['bk']),
        layer_spec(kp['wv']), layer_spec(kp['bv']),
        layer_spec(kp['wo']), layer_spec(kp['bo']),
        layer_spec(kp['ln2_g']), layer_spec(kp['ln2_b']),
        pl.BlockSpec((1, E, ffn_chunk), lambda l, c: (l, 0, c)),  # w1 K-tile
        pl.BlockSpec((1, 1, ffn_chunk), lambda l, c: (l, 0, c)),  # b1 K-tile
        pl.BlockSpec((1, ffn_chunk, E), lambda l, c: (l, c, 0)),  # w2 K-tile
        layer_spec(kp['b2']),
    ]

    out_shape = (jax.ShapeDtypeStruct((B, T, E), jnp.float32),
                 jax.ShapeDtypeStruct((L, H * B, T, T), jnp.float32))
    out_specs = (pl.BlockSpec((B, T, E), lambda l, c: (0, 0, 0)),
                 pl.BlockSpec((1, H * B, T, T), lambda l, c: (l, 0, 0, 0)))

    x_out, probs_hb = pl.pallas_call(
        kernel,
        out_shape=out_shape,
        grid_spec=pltpu.PrefetchScalarGridSpec(
            num_scalar_prefetch=0,
            grid=(L, n_chunks),
            in_specs=in_specs,
            out_specs=out_specs,
            scratch_shapes=[pltpu.VMEM((B * T, E), jnp.bfloat16)]),
        input_output_aliases={0: 0},              # x buffer reused for x_out
        compiler_params=pltpu.CompilerParams(
            dimension_semantics=("arbitrary", "arbitrary"),
            vmem_limit_bytes=_pick_vmem_limit()),
    )(*in_arrays)

    # (L, H*B, T, T) with g = h*B + b  ->  (L, B, H, T, T): wrapper plumbing.
    probs = jnp.transpose(probs_hb.reshape(L, H, B, T, T), (0, 2, 1, 3, 4))
    return x_out, probs


# --------------------------------------------------------------------------
# deterministic synthetic parameters (PyTorch-structured)
# --------------------------------------------------------------------------
def init_params(key, L, H, E, Dh, Hd):
    ks = jax.random.split(key, 10)
    w = lambda k, shape: 0.02 * jax.random.normal(k, shape, jnp.float32)
    return dict(
        ln1_g=jnp.ones((L, 1, E), jnp.float32),
        ln1_b=jnp.zeros((L, 1, E), jnp.float32),
        ln2_g=jnp.ones((L, 1, E), jnp.float32),
        ln2_b=jnp.zeros((L, 1, E), jnp.float32),
        qkv_w=w(ks[0], (L, H, E, 3 * Dh)),
        qkv_b=w(ks[1], (L, H, 3 * Dh)),
        hproj_w=w(ks[2], (L, H, Dh, E)),
        hproj_b=w(ks[3], (L, H, E)),
        mha_w=w(ks[4], (L, H, E, E)),   # == (L, H*E, E) viewed per head
        mha_b=w(ks[5], (L, 1, E)),
        ffn_w1=w(ks[6], (L, E, Hd)),
        ffn_b1=w(ks[7], (L, 1, Hd)),
        ffn_w2=w(ks[8], (L, Hd, E)),
        ffn_b2=w(ks[9], (L, 1, E)),
    )


# --------------------------------------------------------------------------
# pure-JAX reference mirroring the PyTorch forward exactly (f32 weights)
# --------------------------------------------------------------------------
def reference(x, params, num_heads):
    L = params['qkv_w'].shape[0]
    B, T, E = x.shape
    H = num_heads
    Dh = E // H
    probs_all = []
    for l in range(L):
        x_res = x
        xn = _layer_norm(x, params['ln1_g'][l, 0], params['ln1_b'][l, 0])
        heads, probs = [], []
        for h in range(H):
            qkv = xn @ params['qkv_w'][l, h] + params['qkv_b'][l, h]
            q, k, v = qkv[..., :Dh], qkv[..., Dh:2 * Dh], qkv[..., 2 * Dh:]
            attn = jnp.einsum('btd,bsd->bts', q, k) * (1.0 / math.sqrt(Dh))
            attn = _softmax_ref(attn)
            probs.append(attn)
            o = jnp.einsum('bts,bsd->btd', attn, v)
            heads.append(o @ params['hproj_w'][l, h] + params['hproj_b'][l, h])
        cat = jnp.concatenate(heads, axis=-1)                 # (B, T, H*E)
        mha_w_full = params['mha_w'][l].reshape(H * E, E)
        sa = cat @ mha_w_full + params['mha_b'][l, 0]
        x = x_res + sa
        x_res = x
        xn2 = _layer_norm(x, params['ln2_g'][l, 0], params['ln2_b'][l, 0])
        h1 = _gelu_exact(xn2 @ params['ffn_w1'][l] + params['ffn_b1'][l, 0])
        x = x_res + (h1 @ params['ffn_w2'][l] + params['ffn_b2'][l, 0])
        probs_all.append(jnp.stack(probs, axis=1))            # (B, H, T, T)
    return x, jnp.stack(probs_all, axis=0)                    # (L, B, H, T, T)


if __name__ == "__main__":
    # Small shapes consistent with the module: B=2, T=num_patches+1=8,
    # embed_dim=32, num_heads=4 (head_dim=8), num_layers=2, FFN hidden=3072.
    B, T, E, H, L = 2, 8, 32, 4, 2
    Hd = 3072

    key = jax.random.PRNGKey(0)
    kx, kp = jax.random.split(key)
    x = jax.random.normal(kx, (B, T, E), jnp.float32)
    params = init_params(kp, L, H, E, E // H, Hd)

    # Reference first: x's buffer is donated to the kernel (io aliasing).
    ref_out, ref_probs = reference(x, params, num_heads=H)
    ref_out, ref_probs = jax.block_until_ready((ref_out, ref_probs))

    out, probs = jax.block_until_ready(
        transformer_encoder(x, params, num_heads=H, hidden_dim=Hd))

    assert out.shape == (B, T, E)
    assert probs.shape == (L, B, H, T, T)
    # bf16 matmul pipeline vs f32 reference: keep a bf16-appropriate tolerance.
    assert float(jnp.max(jnp.abs(out - ref_out))) < 1e-2
    assert float(jnp.max(jnp.abs(probs - ref_probs))) < 5e-3

    print("KERNEL_OK")
</pallas_src>

<mosaic_0001>
module attributes {stable_mosaic.version = 11 : i64} {
  func.func @kernel(%arg0: i32, %arg1: i32, %arg2: memref<2x8x32xf32, #tpu.memory_space<any>>, %arg3: memref<1x1x32xf32, #tpu.memory_space<vmem>>, %arg4: memref<1x1x32xf32, #tpu.memory_space<vmem>>, %arg5: memref<1x32x32xbf16, #tpu.memory_space<vmem>>, %arg6: memref<1x1x32xf32, #tpu.memory_space<vmem>>, %arg7: memref<1x32x32xbf16, #tpu.memory_space<vmem>>, %arg8: memref<1x1x32xf32, #tpu.memory_space<vmem>>, %arg9: memref<1x32x32xbf16, #tpu.memory_space<vmem>>, %arg10: memref<1x1x32xf32, #tpu.memory_space<vmem>>, %arg11: memref<1x32x32xbf16, #tpu.memory_space<vmem>>, %arg12: memref<1x1x32xf32, #tpu.memory_space<vmem>>, %arg13: memref<1x1x32xf32, #tpu.memory_space<vmem>>, %arg14: memref<1x1x32xf32, #tpu.memory_space<vmem>>, %arg15: memref<1x32x512xbf16, #tpu.memory_space<vmem>>, %arg16: memref<1x1x512xf32, #tpu.memory_space<vmem>>, %arg17: memref<1x512x32xbf16, #tpu.memory_space<vmem>>, %arg18: memref<1x1x32xf32, #tpu.memory_space<vmem>>, %arg19: memref<2x8x32xf32, #tpu.memory_space<vmem>>, %arg20: memref<1x8x8x8xf32, #tpu.memory_space<vmem>>, %arg21: memref<16x32xbf16, #tpu.memory_space<vmem>>) attributes {dimension_semantics = [#tpu.dimension_semantics<arbitrary>, #tpu.dimension_semantics<arbitrary>], iteration_bounds = array<i64: 2, 6>, scalar_prefetch = 0 : i64, scratch_operands = 1 : i64, tpu.core_type = #tpu.core_type<tc>, window_params = [{}, {transform_indices = @transform_1, window_bounds = array<i64: 1, 1, 32>}, {transform_indices = @transform_2, window_bounds = array<i64: 1, 1, 32>}, {transform_indices = @transform_3, window_bounds = array<i64: 1, 32, 32>}, {transform_indices = @transform_4, window_bounds = array<i64: 1, 1, 32>}, {transform_indices = @transform_5, window_bounds = array<i64: 1, 32, 32>}, {transform_indices = @transform_6, window_bounds = array<i64: 1, 1, 32>}, {transform_indices = @transform_7, window_bounds = array<i64: 1, 32, 32>}, {transform_indices = @transform_8, window_bounds = array<i64: 1, 1, 32>}, {transform_indices = @transform_9, window_bounds = array<i64: 1, 32, 32>}, {transform_indices = @transform_10, window_bounds = array<i64: 1, 1, 32>}, {transform_indices = @transform_11, window_bounds = array<i64: 1, 1, 32>}, {transform_indices = @transform_12, window_bounds = array<i64: 1, 1, 32>}, {transform_indices = @transform_13, window_bounds = array<i64: 1, 32, 512>}, {transform_indices = @transform_14, window_bounds = array<i64: 1, 1, 512>}, {transform_indices = @transform_15, window_bounds = array<i64: 1, 512, 32>}, {transform_indices = @transform_16, window_bounds = array<i64: 1, 1, 32>}, {pipeline_mode = #tpu.pipeline_mode<synchronous>, transform_indices = @transform_17, window_bounds = array<i64: 2, 8, 32>}, {transform_indices = @transform_18, window_bounds = array<i64: 1, 8, 8, 8>}]} {
    %c0_i32 = arith.constant 0 : i32
    %0 = arith.cmpi eq, %arg1, %c0_i32 : i32
    %1 = arith.extui %0 : i1 to i32
    %c0_i32_0 = arith.constant 0 : i32
    %2 = arith.cmpi ne, %1, %c0_i32_0 : i32
    scf.if %2 {
      %c0_i32_21 = arith.constant 0 : i32
      %27 = arith.cmpi eq, %arg0, %c0_i32_21 : i32
      %28 = arith.extui %27 : i1 to i32
      %c0_i32_22 = arith.constant 0 : i32
      %29 = arith.cmpi ne, %28, %c0_i32_22 : i32
      scf.if %29 {
        "tpu.region"() ({
          %148 = tpu.sem_alloc : memref<!tpu.dma_semaphore, #tpu.memory_space<semaphore_mem>>
          tpu.enqueue_dma source(%arg2 : memref<2x8x32xf32, #tpu.memory_space<any>>) target(%arg19 : memref<2x8x32xf32, #tpu.memory_space<vmem>>) target_semaphore(%148 : memref<!tpu.dma_semaphore, #tpu.memory_space<semaphore_mem>>)
          tpu.wait_dma2 semaphore(%148 : memref<!tpu.dma_semaphore, #tpu.memory_space<semaphore_mem>>) src(%arg2 : memref<2x8x32xf32, #tpu.memory_space<any>>) dst(%arg19 : memref<2x8x32xf32, #tpu.memory_space<vmem>>)
          tpu.yield
        }) : () -> ()
      } else {
      }
      %c0_23 = arith.constant 0 : index
      %c0_24 = arith.constant 0 : index
      %c0_25 = arith.constant 0 : index
      %30 = vector.load %arg19[%c0_23, %c0_24, %c0_25] : memref<2x8x32xf32, #tpu.memory_space<vmem>>, vector<2x8x32xf32>
      %c0_26 = arith.constant 0 : index
      %c0_27 = arith.constant 0 : index
      %c0_28 = arith.constant 0 : index
      %31 = vector.load %arg3[%c0_26, %c0_27, %c0_28] : memref<1x1x32xf32, #tpu.memory_space<vmem>>, vector<1x1x32xf32>
      %c0_29 = arith.constant 0 : index
      %c0_30 = arith.constant 0 : index
      %c0_31 = arith.constant 0 : index
      %32 = vector.load %arg4[%c0_29, %c0_30, %c0_31] : memref<1x1x32xf32, #tpu.memory_space<vmem>>, vector<1x1x32xf32>
      %cst_32 = arith.constant dense<0.000000e+00> : vector<2x8xf32>
      %33 = vector.multi_reduction <add>, %30, %cst_32 [2] : vector<2x8x32xf32> to vector<2x8xf32>
      %34 = vector.shape_cast %33 : vector<2x8xf32> to vector<2x8x1xf32>
      %cst_33 = arith.constant 3.200000e+01 : f32
      %35 = vector.broadcast %cst_33 : f32 to vector<2x8x1xf32>
      %36 = arith.divf %34, %35 : vector<2x8x1xf32>
      %37 = vector.broadcast %36 : vector<2x8x1xf32> to vector<2x8x32xf32>
      %38 = arith.subf %30, %37 : vector<2x8x32xf32>
      %39 = arith.mulf %38, %38 : vector<2x8x32xf32>
      %cst_34 = arith.constant dense<0.000000e+00> : vector<2x8xf32>
      %40 = vector.multi_reduction <add>, %39, %cst_34 [2] : vector<2x8x32xf32> to vector<2x8xf32>
      %41 = vector.shape_cast %40 : vector<2x8xf32> to vector<2x8x1xf32>
      %cst_35 = arith.constant 3.200000e+01 : f32
      %42 = vector.broadcast %cst_35 : f32 to vector<2x8x1xf32>
      %43 = arith.divf %41, %42 : vector<2x8x1xf32>
      %44 = vector.broadcast %36 : vector<2x8x1xf32> to vector<2x8x32xf32>
      %45 = arith.subf %30, %44 : vector<2x8x32xf32>
      %cst_36 = arith.constant 9.99999974E-6 : f32
      %46 = vector.broadcast %cst_36 : f32 to vector<2x8x1xf32>
      %47 = arith.addf %43, %46 : vector<2x8x1xf32>
      %48 = math.rsqrt %47 : vector<2x8x1xf32>
      %49 = vector.broadcast %48 : vector<2x8x1xf32> to vector<2x8x32xf32>
      %50 = arith.mulf %45, %49 : vector<2x8x32xf32>
      %51 = vector.broadcast %31 : vector<1x1x32xf32> to vector<2x8x32xf32>
      %52 = arith.mulf %50, %51 : vector<2x8x32xf32>
      %53 = vector.broadcast %32 : vector<1x1x32xf32> to vector<2x8x32xf32>
      %54 = arith.addf %52, %53 : vector<2x8x32xf32>
      %55 = vector.shape_cast %54 : vector<2x8x32xf32> to vector<16x32xf32>
      %56 = arith.truncf %55 : vector<16x32xf32> to vector<16x32xbf16>
      %c0_37 = arith.constant 0 : index
      %c0_38 = arith.constant 0 : index
      %c0_39 = arith.constant 0 : index
      %57 = vector.load %arg5[%c0_37, %c0_38, %c0_39] : memref<1x32x32xbf16, #tpu.memory_space<vmem>>, vector<1x32x32xbf16>
      %58 = vector.shape_cast %57 : vector<1x32x32xbf16> to vector<32x32xbf16>
      %cst_40 = arith.constant dense<0.000000e+00> : vector<16x32xf32>
      %59 = tpu.matmul %56, %58, %cst_40 {dimension_numbers = #tpu.dot_dimension_numbers<[1], [0], [0], [1], [0, 0, 1, 1], [], []>} : vector<16x32xbf16>, vector<32x32xbf16>, vector<16x32xf32> -> vector<16x32xf32>
      %c0_41 = arith.constant 0 : index
      %c0_42 = arith.constant 0 : index
      %c0_43 = arith.constant 0 : index
      %60 = vector.load %arg6[%c0_41, %c0_42, %c0_43] : memref<1x1x32xf32, #tpu.memory_space<vmem>>, vector<1x1x32xf32>
      %61 = vector.shape_cast %60 : vector<1x1x32xf32> to vector<1x32xf32>
      %62 = vector.broadcast %61 : vector<1x32xf32> to vector<16x32xf32>
      %63 = arith.addf %59, %62 : vector<16x32xf32>
      %c0_44 = arith.constant 0 : index
      %c0_45 = arith.constant 0 : index
      %c0_46 = arith.constant 0 : index
      %64 = vector.load %arg7[%c0_44, %c0_45, %c0_46] : memref<1x32x32xbf16, #tpu.memory_space<vmem>>, vector<1x32x32xbf16>
      %65 = vector.shape_cast %64 : vector<1x32x32xbf16> to vector<32x32xbf16>
      %cst_47 = arith.constant dense<0.000000e+00> : vector<16x32xf32>
      %66 = tpu.matmul %56, %65, %cst_47 {dimension_numbers = #tpu.dot_dimension_numbers<[1], [0], [0], [1], [0, 0, 1, 1], [], []>} : vector<16x32xbf16>, vector<32x32xbf16>, vector<16x32xf32> -> vector<16x32xf32>
      %c0_48 = arith.constant 0 : index
      %c0_49 = arith.constant 0 : index
      %c0_50 = arith.constant 0 : index
      %67 = vector.load %arg8[%c0_48, %c0_49, %c0_50] : memref<1x1x32xf32, #tpu.memory_space<vmem>>, vector<1x1x32xf32>
      %68 = vector.shape_cast %67 : vector<1x1x32xf32> to vector<1x32xf32>
      %69 = vector.broadcast %68 : vector<1x32xf32> to vector<16x32xf32>
      %70 = arith.addf %66, %69 : vector<16x32xf32>
      %c0_51 = arith.constant 0 : index
      %c0_52 = arith.constant 0 : index
      %c0_53 = arith.constant 0 : index
      %71 = vector.load %arg9[%c0_51, %c0_52, %c0_53] : memref<1x32x32xbf16, #tpu.memory_space<vmem>>, vector<1x32x32xbf16>
      %72 = vector.shape_cast %71 : vector<1x32x32xbf16> to vector<32x32xbf16>
      %cst_54 = arith.constant dense<0.000000e+00> : vector<16x32xf32>
      %73 = tpu.matmul %56, %72, %cst_54 {dimension_numbers = #tpu.dot_dimension_numbers<[1], [0], [0], [1], [0, 0, 1, 1], [], []>} : vector<16x32xbf16>, vector<32x32xbf16>, vector<16x32xf32> -> vector<16x32xf32>
      %c0_55 = arith.constant 0 : index
      %c0_56 = arith.constant 0 : index
      %c0_57 = arith.constant 0 : index
      %74 = vector.load %arg10[%c0_55, %c0_56, %c0_57] : memref<1x1x32xf32, #tpu.memory_space<vmem>>, vector<1x1x32xf32>
      %75 = vector.shape_cast %74 : vector<1x1x32xf32> to vector<1x32xf32>
      %76 = vector.broadcast %75 : vector<1x32xf32> to vector<16x32xf32>
      %77 = arith.addf %73, %76 : vector<16x32xf32>
      %78 = vector.shape_cast %63 : vector<16x32xf32> to vector<16x4x8xf32>
      %79 = tpu.transpose %78, [1, 0, 2] : vector<16x4x8xf32> -> vector<4x16x8xf32>
      %80 = vector.shape_cast %79 : vector<4x16x8xf32> to vector<8x8x8xf32>
      %81 = vector.shape_cast %70 : vector<16x32xf32> to vector<16x4x8xf32>
      %82 = tpu.transpose %81, [1, 0, 2] : vector<16x4x8xf32> -> vector<4x16x8xf32>
      %83 = vector.shape_cast %82 : vector<4x16x8xf32> to vector<8x8x8xf32>
      %84 = vector.shape_cast %77 : vector<16x32xf32> to vector<16x4x8xf32>
      %85 = tpu.transpose %84, [1, 0, 2] : vector<16x4x8xf32> -> vector<4x16x8xf32>
      %86 = vector.shape_cast %85 : vector<4x16x8xf32> to vector<8x8x8xf32>
      "tpu.trace_start"() <{level = 10 : i32, message = "btd,bsd->bts"}> : () -> ()
      %cst_58 = arith.constant dense<0.000000e+00> : vector<8x8x8xf32>
      %87 = tpu.matmul %80, %83, %cst_58 {dimension_numbers = #tpu.dot_dimension_numbers<[2], [2], [1], [1], [0, 0, 0, 1, 1, 1], [0], [0]>} : vector<8x8x8xf32>, vector<8x8x8xf32>, vector<8x8x8xf32> -> vector<8x8x8xf32>
      "tpu.trace_stop"() : () -> ()
      %cst_59 = arith.constant 0.353553385 : f32
      %88 = vector.broadcast %cst_59 : f32 to vector<8x8x8xf32>
      %89 = arith.mulf %87, %88 : vector<8x8x8xf32>
      %cst_60 = arith.constant dense<0xFF800000> : vector<8x8xf32>
      %90 = vector.multi_reduction <maximumf>, %89, %cst_60 [2] : vector<8x8x8xf32> to vector<8x8xf32>
      %91 = vector.shape_cast %90 : vector<8x8xf32> to vector<8x8x1xf32>
      %92 = vector.broadcast %91 : vector<8x8x1xf32> to vector<8x8x8xf32>
      %93 = arith.subf %89, %92 : vector<8x8x8xf32>
      %94 = math.exp %93 : vector<8x8x8xf32>
      %cst_61 = arith.constant dense<0.000000e+00> : vector<8x8xf32>
      %95 = vector.multi_reduction <add>, %94, %cst_61 [2] : vector<8x8x8xf32> to vector<8x8xf32>
      %96 = vector.shape_cast %95 : vector<8x8xf32> to vector<8x8x1xf32>
      %97 = tpu.reciprocal %96 {approx = true} : vector<8x8x1xf32> -> vector<8x8x1xf32>
      %98 = vector.broadcast %97 : vector<8x8x1xf32> to vector<8x8x8xf32>
      %99 = arith.mulf %94, %98 : vector<8x8x8xf32>
      %c0_62 = arith.constant 0 : index
      %c0_63 = arith.constant 0 : index
      %c0_64 = arith.constant 0 : index
      %c0_65 = arith.constant 0 : index
      %100 = vector.load %arg20[%c0_62, %c0_63, %c0_64, %c0_65] : memref<1x8x8x8xf32, #tpu.memory_space<vmem>>, vector<1x8x8x8xf32>
      %101 = vector.shape_cast %100 : vector<1x8x8x8xf32> to vector<8x8x8xf32>
      %102 = vector.shape_cast %99 : vector<8x8x8xf32> to vector<1x8x8x8xf32>
      tpu.vector_store %arg20[%c0_62, %c0_63, %c0_64, %c0_65], %102 {strides = array<i32>} : memref<1x8x8x8xf32, #tpu.memory_space<vmem>>, vector<1x8x8x8xf32>,
      "tpu.trace_start"() <{level = 10 : i32, message = "bts,bsd->btd"}> : () -> ()
      %cst_66 = arith.constant dense<0.000000e+00> : vector<8x8x8xf32>
      %103 = tpu.matmul %99, %86, %cst_66 {dimension_numbers = #tpu.dot_dimension_numbers<[2], [1], [1], [2], [0, 0, 0, 1, 1, 2], [0], [0]>} : vector<8x8x8xf32>, vector<8x8x8xf32>, vector<8x8x8xf32> -> vector<8x8x8xf32>
      "tpu.trace_stop"() : () -> ()
      %104 = vector.shape_cast %103 : vector<8x8x8xf32> to vector<4x16x8xf32>
      %105 = tpu.transpose %104, [1, 0, 2] : vector<4x16x8xf32> -> vector<16x4x8xf32>
      %106 = vector.shape_cast %105 : vector<16x4x8xf32> to vector<16x32xf32>
      %107 = arith.truncf %106 : vector<16x32xf32> to vector<16x32xbf16>
      %c0_67 = arith.constant 0 : index
      %c0_68 = arith.constant 0 : index
      %c0_69 = arith.constant 0 : index
      %108 = vector.load %arg11[%c0_67, %c0_68, %c0_69] : memref<1x32x32xbf16, #tpu.memory_space<vmem>>, vector<1x32x32xbf16>
      %109 = vector.shape_cast %108 : vector<1x32x32xbf16> to vector<32x32xbf16>
      %cst_70 = arith.constant dense<0.000000e+00> : vector<16x32xf32>
      %110 = tpu.matmul %107, %109, %cst_70 {dimension_numbers = #tpu.dot_dimension_numbers<[1], [0], [0], [1], [0, 0, 1, 1], [], []>} : vector<16x32xbf16>, vector<32x32xbf16>, vector<16x32xf32> -> vector<16x32xf32>
      %c0_71 = arith.constant 0 : index
      %c0_72 = arith.constant 0 : index
      %c0_73 = arith.constant 0 : index
      %111 = vector.load %arg12[%c0_71, %c0_72, %c0_73] : memref<1x1x32xf32, #tpu.memory_space<vmem>>, vector<1x1x32xf32>
      %112 = vector.shape_cast %111 : vector<1x1x32xf32> to vector<1x32xf32>
      %113 = vector.broadcast %112 : vector<1x32xf32> to vector<16x32xf32>
      %114 = arith.addf %110, %113 : vector<16x32xf32>
      %115 = vector.shape_cast %114 : vector<16x32xf32> to vector<2x8x32xf32>
      %116 = arith.addf %30, %115 : vector<2x8x32xf32>
      %c0_74 = arith.constant 0 : index
      %c0_75 = arith.constant 0 : index
      %c0_76 = arith.constant 0 : index
      %117 = vector.load %arg13[%c0_74, %c0_75, %c0_76] : memref<1x1x32xf32, #tpu.memory_space<vmem>>, vector<1x1x32xf32>
      %c0_77 = arith.constant 0 : index
      %c0_78 = arith.constant 0 : index
      %c0_79 = arith.constant 0 : index
      %118 = vector.load %arg14[%c0_77, %c0_78, %c0_79] : memref<1x1x32xf32, #tpu.memory_space<vmem>>, vector<1x1x32xf32>
      %cst_80 = arith.constant dense<0.000000e+00> : vector<2x8xf32>
      %119 = vector.multi_reduction <add>, %116, %cst_80 [2] : vector<2x8x32xf32> to vector<2x8xf32>
      %120 = vector.shape_cast %119 : vector<2x8xf32> to vector<2x8x1xf32>
      %cst_81 = arith.constant 3.200000e+01 : f32
      %121 = vector.broadcast %cst_81 : f32 to vector<2x8x1xf32>
      %122 = arith.divf %120, %121 : vector<2x8x1xf32>
      %123 = vector.broadcast %122 : vector<2x8x1xf32> to vector<2x8x32xf32>
      %124 = arith.subf %116, %123 : vector<2x8x32xf32>
      %125 = arith.mulf %124, %124 : vector<2x8x32xf32>
      %cst_82 = arith.constant dense<0.000000e+00> : vector<2x8xf32>
      %126 = vector.multi_reduction <add>, %125, %cst_82 [2] : vector<2x8x32xf32> to vector<2x8xf32>
      %127 = vector.shape_cast %126 : vector<2x8xf32> to vector<2x8x1xf32>
      %cst_83 = arith.constant 3.200000e+01 : f32
      %128 = vector.broadcast %cst_83 : f32 to vector<2x8x1xf32>
      %129 = arith.divf %127, %128 : vector<2x8x1xf32>
      %130 = vector.broadcast %122 : vector<2x8x1xf32> to vector<2x8x32xf32>
      %131 = arith.subf %116, %130 : vector<2x8x32xf32>
      %cst_84 = arith.constant 9.99999974E-6 : f32
      %132 = vector.broadcast %cst_84 : f32 to vector<2x8x1xf32>
      %133 = arith.addf %129, %132 : vector<2x8x1xf32>
      %134 = math.rsqrt %133 : vector<2x8x1xf32>
      %135 = vector.broadcast %134 : vector<2x8x1xf32> to vector<2x8x32xf32>
      %136 = arith.mulf %131, %135 : vector<2x8x32xf32>
      %137 = vector.broadcast %117 : vector<1x1x32xf32> to vector<2x8x32xf32>
      %138 = arith.mulf %136, %137 : vector<2x8x32xf32>
      %139 = vector.broadcast %118 : vector<1x1x32xf32> to vector<2x8x32xf32>
      %140 = arith.addf %138, %139 : vector<2x8x32xf32>
      %141 = vector.shape_cast %140 : vector<2x8x32xf32> to vector<16x32xf32>
      %142 = arith.truncf %141 : vector<16x32xf32> to vector<16x32xbf16>
      %c0_85 = arith.constant 0 : index
      %c0_86 = arith.constant 0 : index
      %143 = vector.load %arg21[%c0_85, %c0_86] : memref<16x32xbf16, #tpu.memory_space<vmem>>, vector<16x32xbf16>
      tpu.vector_store %arg21[%c0_85, %c0_86], %142 {strides = array<i32>} : memref<16x32xbf16, #tpu.memory_space<vmem>>, vector<16x32xbf16>,
      %c0_87 = arith.constant 0 : index
      %c0_88 = arith.constant 0 : index
      %c0_89 = arith.constant 0 : index
      %144 = vector.load %arg18[%c0_87, %c0_88, %c0_89] : memref<1x1x32xf32, #tpu.memory_space<vmem>>, vector<1x1x32xf32>
      %145 = vector.broadcast %144 : vector<1x1x32xf32> to vector<2x8x32xf32>
      %146 = arith.addf %116, %145 : vector<2x8x32xf32>
      %c0_90 = arith.constant 0 : index
      %c0_91 = arith.constant 0 : index
      %c0_92 = arith.constant 0 : index
      %147 = vector.load %arg19[%c0_90, %c0_91, %c0_92] : memref<2x8x32xf32, #tpu.memory_space<vmem>>, vector<2x8x32xf32>
      tpu.vector_store %arg19[%c0_90, %c0_91, %c0_92], %146 {strides = array<i32>} : memref<2x8x32xf32, #tpu.memory_space<vmem>>, vector<2x8x32xf32>,
    } else {
    }
    %c0 = arith.constant 0 : index
    %c0_1 = arith.constant 0 : index
    %3 = vector.load %arg21[%c0, %c0_1] : memref<16x32xbf16, #tpu.memory_space<vmem>>, vector<16x32xbf16>
    %c0_2 = arith.constant 0 : index
    %c0_3 = arith.constant 0 : index
    %c0_4 = arith.constant 0 : index
    %4 = vector.load %arg15[%c0_2, %c0_3, %c0_4] : memref<1x32x512xbf16, #tpu.memory_space<vmem>>, vector<1x32x512xbf16>
    %5 = vector.shape_cast %4 : vector<1x32x512xbf16> to vector<32x512xbf16>
    %cst = arith.constant dense<0.000000e+00> : vector<16x512xf32>
    %6 = tpu.matmul %3, %5, %cst {dimension_numbers = #tpu.dot_dimension_numbers<[1], [0], [0], [1], [0, 0, 1, 1], [], []>} : vector<16x32xbf16>, vector<32x512xbf16>, vector<16x512xf32> -> vector<16x512xf32>
    %c0_5 = arith.constant 0 : index
    %c0_6 = arith.constant 0 : index
    %c0_7 = arith.constant 0 : index
    %7 = vector.load %arg16[%c0_5, %c0_6, %c0_7] : memref<1x1x512xf32, #tpu.memory_space<vmem>>, vector<1x1x512xf32>
    %8 = vector.shape_cast %7 : vector<1x1x512xf32> to vector<1x512xf32>
    %9 = vector.broadcast %8 : vector<1x512xf32> to vector<16x512xf32>
    %10 = arith.addf %6, %9 : vector<16x512xf32>
    %cst_8 = arith.constant 5.000000e-01 : f32
    %11 = vector.broadcast %cst_8 : f32 to vector<16x512xf32>
    %12 = arith.mulf %11, %10 : vector<16x512xf32>
    %cst_9 = arith.constant 0.707106769 : f32
    %13 = vector.broadcast %cst_9 : f32 to vector<16x512xf32>
    %14 = arith.mulf %10, %13 : vector<16x512xf32>
    %15 = math.erf %14 : vector<16x512xf32>
    %cst_10 = arith.constant 1.000000e+00 : f32
    %16 = vector.broadcast %cst_10 : f32 to vector<16x512xf32>
    %17 = arith.addf %16, %15 : vector<16x512xf32>
    %18 = arith.mulf %12, %17 : vector<16x512xf32>
    %19 = arith.truncf %18 : vector<16x512xf32> to vector<16x512xbf16>
    %c0_11 = arith.constant 0 : index
    %c0_12 = arith.constant 0 : index
    %c0_13 = arith.constant 0 : index
    %20 = vector.load %arg19[%c0_11, %c0_12, %c0_13] : memref<2x8x32xf32, #tpu.memory_space<vmem>>, vector<2x8x32xf32>
    %c0_14 = arith.constant 0 : index
    %c0_15 = arith.constant 0 : index
    %c0_16 = arith.constant 0 : index
    %21 = vector.load %arg17[%c0_14, %c0_15, %c0_16] : memref<1x512x32xbf16, #tpu.memory_space<vmem>>, vector<1x512x32xbf16>
    %22 = vector.shape_cast %21 : vector<1x512x32xbf16> to vector<512x32xbf16>
    %cst_17 = arith.constant dense<0.000000e+00> : vector<16x32xf32>
    %23 = tpu.matmul %19, %22, %cst_17 {dimension_numbers = #tpu.dot_dimension_numbers<[1], [0], [0], [1], [0, 0, 1, 1], [], []>} : vector<16x512xbf16>, vector<512x32xbf16>, vector<16x32xf32> -> vector<16x32xf32>
    %24 = vector.shape_cast %23 : vector<16x32xf32> to vector<2x8x32xf32>
    %25 = arith.addf %20, %24 : vector<2x8x32xf32>
    %c0_18 = arith.constant 0 : index
    %c0_19 = arith.constant 0 : index
    %c0_20 = arith.constant 0 : index
    %26 = vector.load %arg19[%c0_18, %c0_19, %c0_20] : memref<2x8x32xf32, #tpu.memory_space<vmem>>, vector<2x8x32xf32>
    tpu.vector_store %arg19[%c0_18, %c0_19, %c0_20], %25 {strides = array<i32>} : memref<2x8x32xf32, #tpu.memory_space<vmem>>, vector<2x8x32xf32>,
    return
  }
  func.func @transform_1(%arg0: i32, %arg1: i32) -> (i32, i32, i32) {
    %c0_i32 = arith.constant 0 : i32
    %c0_i32_0 = arith.constant 0 : i32
    %c0_i32_1 = arith.constant 0 : i32
    return %arg0, %c0_i32, %c0_i32_0 : i32, i32, i32
  }
  func.func @transform_2(%arg0: i32, %arg1: i32) -> (i32, i32, i32) {
    %c0_i32 = arith.constant 0 : i32
    %c0_i32_0 = arith.constant 0 : i32
    %c0_i32_1 = arith.constant 0 : i32
    return %arg0, %c0_i32, %c0_i32_0 : i32, i32, i32
  }
  func.func @transform_3(%arg0: i32, %arg1: i32) -> (i32, i32, i32) {
    %c0_i32 = arith.constant 0 : i32
    %c0_i32_0 = arith.constant 0 : i32
    %c0_i32_1 = arith.constant 0 : i32
    return %arg0, %c0_i32, %c0_i32_0 : i32, i32, i32
  }
  func.func @transform_4(%arg0: i32, %arg1: i32) -> (i32, i32, i32) {
    %c0_i32 = arith.constant 0 : i32
    %c0_i32_0 = arith.constant 0 : i32
    %c0_i32_1 = arith.constant 0 : i32
    return %arg0, %c0_i32, %c0_i32_0 : i32, i32, i32
  }
  func.func @transform_5(%arg0: i32, %arg1: i32) -> (i32, i32, i32) {
    %c0_i32 = arith.constant 0 : i32
    %c0_i32_0 = arith.constant 0 : i32
    %c0_i32_1 = arith.constant 0 : i32
    return %arg0, %c0_i32, %c0_i32_0 : i32, i32, i32
  }
  func.func @transform_6(%arg0: i32, %arg1: i32) -> (i32, i32, i32) {
    %c0_i32 = arith.constant 0 : i32
    %c0_i32_0 = arith.constant 0 : i32
    %c0_i32_1 = arith.constant 0 : i32
    return %arg0, %c0_i32, %c0_i32_0 : i32, i32, i32
  }
  func.func @transform_7(%arg0: i32, %arg1: i32) -> (i32, i32, i32) {
    %c0_i32 = arith.constant 0 : i32
    %c0_i32_0 = arith.constant 0 : i32
    %c0_i32_1 = arith.constant 0 : i32
    return %arg0, %c0_i32, %c0_i32_0 : i32, i32, i32
  }
  func.func @transform_8(%arg0: i32, %arg1: i32) -> (i32, i32, i32) {
    %c0_i32 = arith.constant 0 : i32
    %c0_i32_0 = arith.constant 0 : i32
    %c0_i32_1 = arith.constant 0 : i32
    return %arg0, %c0_i32, %c0_i32_0 : i32, i32, i32
  }
  func.func @transform_9(%arg0: i32, %arg1: i32) -> (i32, i32, i32) {
    %c0_i32 = arith.constant 0 : i32
    %c0_i32_0 = arith.constant 0 : i32
    %c0_i32_1 = arith.constant 0 : i32
    return %arg0, %c0_i32, %c0_i32_0 : i32, i32, i32
  }
  func.func @transform_10(%arg0: i32, %arg1: i32) -> (i32, i32, i32) {
    %c0_i32 = arith.constant 0 : i32
    %c0_i32_0 = arith.constant 0 : i32
    %c0_i32_1 = arith.constant 0 : i32
    return %arg0, %c0_i32, %c0_i32_0 : i32, i32, i32
  }
  func.func @transform_11(%arg0: i32, %arg1: i32) -> (i32, i32, i32) {
    %c0_i32 = arith.constant 0 : i32
    %c0_i32_0 = arith.constant 0 : i32
    %c0_i32_1 = arith.constant 0 : i32
    return %arg0, %c0_i32, %c0_i32_0 : i32, i32, i32
  }
  func.func @transform_12(%arg0: i32, %arg1: i32) -> (i32, i32, i32) {
    %c0_i32 = arith.constant 0 : i32
    %c0_i32_0 = arith.constant 0 : i32
    %c0_i32_1 = arith.constant 0 : i32
    return %arg0, %c0_i32, %c0_i32_0 : i32, i32, i32
  }
  func.func @transform_13(%arg0: i32, %arg1: i32) -> (i32, i32, i32) {
    %c0_i32 = arith.constant 0 : i32
    %c0_i32_0 = arith.constant 0 : i32
    return %arg0, %c0_i32, %arg1 : i32, i32, i32
  }
  func.func @transform_14(%arg0: i32, %arg1: i32) -> (i32, i32, i32) {
    %c0_i32 = arith.constant 0 : i32
    %c0_i32_0 = arith.constant 0 : i32
    return %arg0, %c0_i32, %arg1 : i32, i32, i32
  }
  func.func @transform_15(%arg0: i32, %arg1: i32) -> (i32, i32, i32) {
    %c0_i32 = arith.constant 0 : i32
    %c0_i32_0 = arith.constant 0 : i32
    return %arg0, %arg1, %c0_i32 : i32, i32, i32
  }
  func.func @transform_16(%arg0: i32, %arg1: i32) -> (i32, i32, i32) {
    %c0_i32 = arith.constant 0 : i32
    %c0_i32_0 = arith.constant 0 : i32
    %c0_i32_1 = arith.constant 0 : i32
    return %arg0, %c0_i32, %c0_i32_0 : i32, i32, i32
  }
  func.func @transform_17(%arg0: i32, %arg1: i32) -> (i32, i32, i32) {
    %c0_i32 = arith.constant 0 : i32
    %c0_i32_0 = arith.constant 0 : i32
    %c0_i32_1 = arith.constant 0 : i32
    %c0_i32_2 = arith.constant 0 : i32
    return %c0_i32, %c0_i32_0, %c0_i32_1 : i32, i32, i32
  }
  func.func @transform_18(%arg0: i32, %arg1: i32) -> (i32, i32, i32, i32) {
    %c0_i32 = arith.constant 0 : i32
    %c0_i32_0 = arith.constant 0 : i32
    %c0_i32_1 = arith.constant 0 : i32
    %c0_i32_2 = arith.constant 0 : i32
    return %arg0, %c0_i32, %c0_i32_0, %c0_i32_1 : i32, i32, i32, i32
  }
}

</mosaic_0001>

<llo_original>
// kernel: tpu_custom_call.1
$region0: #{tpu_custom_call.1}
  #allocation0 [shape = 'u32[]', space=smem, size = 0x4, offset = 0x4, fixed_abs, tag = 'smem constant byte address 0x4 - core index']
  #allocation1 [shape = 'u32[144,128]{1,0:T(1,128)}', space=vmem, size = 0x12000, scoped, tag = 'internal scratch']
  #allocation2 [shape = 'bf16[16,32]{1,0:T(16,128)(2,1)}', space=vmem, size = 0x1000, scoped, tag = 'scratch operand']
  #allocation9 [shape = 's32[]', space=sflag, size = 0x4, offset = 0, fixed_abs, tag = 'sflag constant byte address 0x0 - dummy sync flag']
  #allocation10 [shape = 's32[]', space=sflag, size = 0x4, offset = 0, fixed_abs, tag = 'sflag constant byte address 0x0 - dummy sync flag']
  #allocation11 [shape = 'u32[]', space=smem, size = 0x4, offset = 0x44, fixed_abs, tag = 'smem constant byte address 0x44 - assertion arg 0']
  #allocation12 [shape = 'u32[]', space=smem, size = 0x4, offset = 0x48, fixed_abs, tag = 'smem constant byte address 0x48 - assertion arg 1']
  %s0 = inlined_call_operand.hbm [shape: f32[2,8,32], index: 0, kind: input, shape index: {}, may-alias: {0,17}]
  %s1 = inlined_call_operand.vmem [shape: f32[2,1,32], index: 1, kind: input, shape index: {}]
  %s2 = inlined_call_operand.vmem [shape: f32[2,1,32], index: 2, kind: input, shape index: {}]
  %s3 = inlined_call_operand.vmem [shape: bf16[2,32,32], index: 3, kind: input, shape index: {}]
  %s4 = inlined_call_operand.vmem [shape: f32[2,1,32], index: 4, kind: input, shape index: {}]
  %s5 = inlined_call_operand.vmem [shape: bf16[2,32,32], index: 5, kind: input, shape index: {}]
  %s6 = inlined_call_operand.vmem [shape: f32[2,1,32], index: 6, kind: input, shape index: {}]
  %s7 = inlined_call_operand.vmem [shape: bf16[2,32,32], index: 7, kind: input, shape index: {}]
  %s8 = inlined_call_operand.vmem [shape: f32[2,1,32], index: 8, kind: input, shape index: {}]
  %s9 = inlined_call_operand.vmem [shape: bf16[2,32,32], index: 9, kind: input, shape index: {}]
  %s10 = inlined_call_operand.vmem [shape: f32[2,1,32], index: 10, kind: input, shape index: {}]
  %s11 = inlined_call_operand.vmem [shape: f32[2,1,32], index: 11, kind: input, shape index: {}]
  %s12 = inlined_call_operand.vmem [shape: f32[2,1,32], index: 12, kind: input, shape index: {}]
  %s13 = inlined_call_operand.vmem [shape: bf16[2,32,3072], index: 13, kind: input, shape index: {}]
  %s14 = inlined_call_operand.vmem [shape: f32[2,1,3072], index: 14, kind: input, shape index: {}]
  %s15 = inlined_call_operand.vmem [shape: bf16[2,3072,32], index: 15, kind: input, shape index: {}]
  %s16 = inlined_call_operand.vmem [shape: f32[2,1,32], index: 16, kind: input, shape index: {}]
  %s17 = inlined_call_operand.hbm [shape: f32[2,8,32], index: 17, kind: output, shape index: {0}, may-alias: {0,17}]
  %s18 = inlined_call_operand.hbm [shape: f32[2,8,8,8], index: 18, kind: output, shape index: {1}]
  %19 = xla_tuple %s17, %s18
  %s20 = sld [smem:[#allocation0]]
  $region141: #{tpu_custom_call.1} parent=0
    _
  %s22 = ssub.s32 1, %s20
  %s23 = scalar_select 0, %s22, %s20
  $region1: #{tpu_custom_call.1} parent=0
    #allocation3 [shape = 'u8[65536]{0}', space=vmem, size = 0x10000, scoped, tag = 'input window, operand 13']
    #allocation4 [shape = 'u8[8192]{0}', space=vmem, size = 0x2000, scoped, tag = 'output window, operand 0, single buffered']
    #allocation5 [shape = 's32[2]{0}', space=sflag, size = 0x8, scoped, tag = 'scoped memory for tpu_custom_call.1']
    #allocation6 [shape = 'u8[65536]{0}', space=vmem, size = 0x10000, scoped, tag = 'output window, operand 1']
    #allocation7 [shape = 's32[2]{0}', space=sflag, size = 0x8, scoped, tag = 'scoped memory for tpu_custom_call.1']
    %24 = vsyncpa [#allocation5], 0
    %25 = vsyncpa [#allocation7], 0
    %s26 = scalar_lea.sflag [#allocation7], 1
    %27 = vsyncpa %s26, 0
    loop: start=0, step=1, limit=14
    $region2: #{tpu_custom_call.1} parent=1 // loop_pre_header
      _
    $region3: #{tpu_custom_call.1} parent=1 // loop_header
      %s29 = sphi 0, %s33
      %p30 = scmp.ge.s32.totalorder %s29, 14
      %s36 = sphi 0, %s48
      %s37 = sphi 0, %s44
      %s38 = sphi 0, %s36
      %s39 = sphi 0, %s37
      %s40 = sphi 0, %s38
      %s41 = sphi 0, %s39
      %s51 = sphi 0, %s53
      %s54 = sphi 0, %s51
      %s55 = sphi 0, %s54
      %s71 = sphi 0, %s55
      %s77 = sphi 0, %s79
      %s80 = sphi 0, %s77
      %s81 = sphi 0, %s80
      %s97 = sphi 0, %s81
      %s103 = sphi 0, %s105
      %s106 = sphi 0, %s103
      %s107 = sphi 0, %s106
      %s123 = sphi 0, %s107
      %s129 = sphi 0, %s131
      %s132 = sphi 0, %s129
      %s133 = sphi 0, %s132
      %s149 = sphi 0, %s133
      %s155 = sphi 0, %s157
      %s158 = sphi 0, %s155
      %s159 = sphi 0, %s158
      %s175 = sphi 0, %s159
      %s181 = sphi 0, %s183
      %s184 = sphi 0, %s181
      %s185 = sphi 0, %s184
      %s201 = sphi 0, %s185
      %s207 = sphi 0, %s209
      %s210 = sphi 0, %s207
      %s211 = sphi 0, %s210
      %s227 = sphi 0, %s211
      %s233 = sphi 0, %s235
      %s236 = sphi 0, %s233
      %s237 = sphi 0, %s236
      %s253 = sphi 0, %s237
      %s259 = sphi 0, %s261
      %s262 = sphi 0, %s259
      %s263 = sphi 0, %s262
      %s279 = sphi 0, %s263
      %s285 = sphi 0, %s287
      %s288 = sphi 0, %s285
      %s289 = sphi 0, %s288
      %s305 = sphi 0, %s289
      %s311 = sphi 0, %s313
      %s314 = sphi 0, %s311
      %s315 = sphi 0, %s314
      %s331 = sphi 0, %s315
      %s337 = sphi 0, %s339
      %s340 = sphi 0, %s337
      %s341 = sphi 0, %s340
      %s357 = sphi 0, %s341
      %s365 = sphi 0, %s367
      %s368 = sphi 0, %s365
      %s369 = sphi 0, %s368
      %s385 = sphi 0, %s369
      %s393 = sphi 0, %s395
      %s396 = sphi 0, %s393
      %s397 = sphi 0, %s396
      %s413 = sphi 0, %s397
      %s421 = sphi 0, %s423
      %s424 = sphi 0, %s421
      %s425 = sphi 0, %s424
      %s441 = sphi 0, %s425
      %s447 = sphi 0, %s449
      %s450 = sphi 0, %s447
      %s451 = sphi 0, %s450
      %s467 = sphi 0, %s451
      %s471 = sphi 0, %s471
      %s473 = sphi 0, %s471
      %s474 = sphi 0, %s473
      %s488 = sphi 0, %s474
      %s494 = sphi 0, %s496
      %s497 = sphi 0, %s494
      %s498 = sphi 0, %s497
      %s514 = sphi 0, %s498
    $region4: #{tpu_custom_call.1} parent=1 // loop_header_branch
      %32 = sbr.rel (%p30) target = $region8
    $region5: #{tpu_custom_call.1} parent=1 // loop_body
      %s34 = ssub.s32 %s29, 1
      %s35 = ssub.s32 %s29, 2
      %s42 = sadd.s32 1, %s37
      %p43 = scmp.ge.s32.totalorder %s42, 6
      %s44 = scalar_select %p43, 0, %s42
      %s45 = sadd.s32 1, %s36
      %s46 = scalar_select %p43, %s45, %s36
      %p47 = scmp.ge.s32.totalorder %s46, 2
      %s48 = scalar_select %p47, 0, %s46
      %s49 = ssub.s32 %s36, %s48
      %p50 = scmp.eq.s32.totalorder %s49, 0
      %s52 = sadd.s32 %s51, 1
      %s53 = scalar_select %p50, %s51, %s52
      %p56 = pneg %p50
      %p57 = scmp.eq.s32.totalorder %s29, 11
      %p58 = por %p56, %p57
      %p59 = scmp.ne.s32.totalorder %s51, %s54
      %p60 = scmp.eq.s32.totalorder %s29, 0
      %p61 = por %p59, %p60
      %p62 = scmp.ne.s32.totalorder %s51, %s54
      %p63 = scmp.eq.s32.totalorder %s34, 11
      %p64 = por %p62, %p63
      %p65 = scmp.ne.s32.totalorder %s54, %s55
      %p66 = scmp.eq.s32.totalorder %s34, 0
      %p67 = por %p65, %p66
      %p68 = scmp.ne.s32.totalorder %s54, %s55
      %p69 = scmp.eq.s32.totalorder %s35, 11
      %p70 = por %p68, %p69
      %p72 = scmp.ne.s32.totalorder %s55, %s71
      %p73 = scmp.eq.s32.totalorder %s35, 0
      %p74 = por %p72, %p73
      %s75 = ssub.s32 %s36, %s48
      %p76 = scmp.eq.s32.totalorder %s75, 0
      %s78 = sadd.s32 %s77, 1
      %s79 = scalar_select %p76, %s77, %s78
      %p82 = pneg %p76
      %p83 = scmp.eq.s32.totalorder %s29, 11
      %p84 = por %p82, %p83
      %p85 = scmp.ne.s32.totalorder %s77, %s80
      %p86 = scmp.eq.s32.totalorder %s29, 0
      %p87 = por %p85, %p86
      %p88 = scmp.ne.s32.totalorder %s77, %s80
      %p89 = scmp.eq.s32.totalorder %s34, 11
      %p90 = por %p88, %p89
      %p91 = scmp.ne.s32.totalorder %s80, %s81
      %p92 = scmp.eq.s32.totalorder %s34, 0
      %p93 = por %p91, %p92
      %p94 = scmp.ne.s32.totalorder %s80, %s81
      %p95 = scmp.eq.s32.totalorder %s35, 11
      %p96 = por %p94, %p95
      %p98 = scmp.ne.s32.totalorder %s81, %s97
      %p99 = scmp.eq.s32.totalorder %s35, 0
      %p100 = por %p98, %p99
      %s101 = ssub.s32 %s36, %s48
      %p102 = scmp.eq.s32.totalorder %s101, 0
      %s104 = sadd.s32 %s103, 1
      %s105 = scalar_select %p102, %s103, %s104
      %p108 = pneg %p102
      %p109 = scmp.eq.s32.totalorder %s29, 11
      %p110 = por %p108, %p109
      %p111 = scmp.ne.s32.totalorder %s103, %s106
      %p112 = scmp.eq.s32.totalorder %s29, 0
      %p113 = por %p111, %p112
      %p114 = scmp.ne.s32.totalorder %s103, %s106
      %p115 = scmp.eq.s32.totalorder %s34, 11
      %p116 = por %p114, %p115
      %p117 = scmp.ne.s32.totalorder %s106, %s107
      %p118 = scmp.eq.s32.totalorder %s34, 0
      %p119 = por %p117, %p118
      %p120 = scmp.ne.s32.totalorder %s106, %s107
      %p121 = scmp.eq.s32.totalorder %s35, 11
      %p122 = por %p120, %p121
      %p124 = scmp.ne.s32.totalorder %s107, %s123
      %p125 = scmp.eq.s32.totalorder %s35, 0
      %p126 = por %p124, %p125
      %s127 = ssub.s32 %s36, %s48
      %p128 = scmp.eq.s32.totalorder %s127, 0
      %s130 = sadd.s32 %s129, 1
      %s131 = scalar_select %p128, %s129, %s130
      %p134 = pneg %p128
      %p135 = scmp.eq.s32.totalorder %s29, 11
      %p136 = por %p134, %p135
      %p137 = scmp.ne.s32.totalorder %s129, %s132
      %p138 = scmp.eq.s32.totalorder %s29, 0
      %p139 = por %p137, %p138
      %p140 = scmp.ne.s32.totalorder %s129, %s132
      %p141 = scmp.eq.s32.totalorder %s34, 11
      %p142 = por %p140, %p141
      %p143 = scmp.ne.s32.totalorder %s132, %s133
      %p144 = scmp.eq.s32.totalorder %s34, 0
      %p145 = por %p143, %p144
      %p146 = scmp.ne.s32.totalorder %s132, %s133
      %p147 = scmp.eq.s32.totalorder %s35, 11
      %p148 = por %p146, %p147
      %p150 = scmp.ne.s32.totalorder %s133, %s149
      %p151 = scmp.eq.s32.totalorder %s35, 0
      %p152 = por %p150, %p151
      %s153 = ssub.s32 %s36, %s48
      %p154 = scmp.eq.s32.totalorder %s153, 0
      %s156 = sadd.s32 %s155, 1
      %s157 = scalar_select %p154, %s155, %s156
      %p160 = pneg %p154
      %p161 = scmp.eq.s32.totalorder %s29, 11
      %p162 = por %p160, %p161
      %p163 = scmp.ne.s32.totalorder %s155, %s158
      %p164 = scmp.eq.s32.totalorder %s29, 0
      %p165 = por %p163, %p164
      %p166 = scmp.ne.s32.totalorder %s155, %s158
      %p167 = scmp.eq.s32.totalorder %s34, 11
      %p168 = por %p166, %p167
      %p169 = scmp.ne.s32.totalorder %s158, %s159
      %p170 = scmp.eq.s32.totalorder %s34, 0
      %p171 = por %p169, %p170
      %p172 = scmp.ne.s32.totalorder %s158, %s159
      %p173 = scmp.eq.s32.totalorder %s35, 11
      %p174 = por %p172, %p173
      %p176 = scmp.ne.s32.totalorder %s159, %s175
      %p177 = scmp.eq.s32.totalorder %s35, 0
      %p178 = por %p176, %p177
      %s179 = ssub.s32 %s36, %s48
      %p180 = scmp.eq.s32.totalorder %s179, 0
      %s182 = sadd.s32 %s181, 1
      %s183 = scalar_select %p180, %s181, %s182
      %p186 = pneg %p180
      %p187 = scmp.eq.s32.totalorder %s29, 11
      %p188 = por %p186, %p187
      %p189 = scmp.ne.s32.totalorder %s181, %s184
      %p190 = scmp.eq.s32.totalorder %s29, 0
      %p191 = por %p189, %p190
      %p192 = scmp.ne.s32.totalorder %s181, %s184
      %p193 = scmp.eq.s32.totalorder %s34, 11
      %p194 = por %p192, %p193
      %p195 = scmp.ne.s32.totalorder %s184, %s185
      %p196 = scmp.eq.s32.totalorder %s34, 0
      %p197 = por %p195, %p196
      %p198 = scmp.ne.s32.totalorder %s184, %s185
      %p199 = scmp.eq.s32.totalorder %s35, 11
      %p200 = por %p198, %p199
      %p202 = scmp.ne.s32.totalorder %s185, %s201
      %p203 = scmp.eq.s32.totalorder %s35, 0
      %p204 = por %p202, %p203
      %s205 = ssub.s32 %s36, %s48
      %p206 = scmp.eq.s32.totalorder %s205, 0
      %s208 = sadd.s32 %s207, 1
      %s209 = scalar_select %p206, %s207, %s208
      %p212 = pneg %p206
      %p213 = scmp.eq.s32.totalorder %s29, 11
      %p214 = por %p212, %p213
      %p215 = scmp.ne.s32.totalorder %s207, %s210
      %p216 = scmp.eq.s32.totalorder %s29, 0
      %p217 = por %p215, %p216
      %p218 = scmp.ne.s32.totalorder %s207, %s210
      %p219 = scmp.eq.s32.totalorder %s34, 11
      %p220 = por %p218, %p219
      %p221 = scmp.ne.s32.totalorder %s210, %s211
      %p222 = scmp.eq.s32.totalorder %s34, 0
      %p223 = por %p221, %p222
      %p224 = scmp.ne.s32.totalorder %s210, %s211
      %p225 = scmp.eq.s32.totalorder %s35, 11
      %p226 = por %p224, %p225
      %p228 = scmp.ne.s32.totalorder %s211, %s227
      %p229 = scmp.eq.s32.totalorder %s35, 0
      %p230 = por %p228, %p229
      %s231 = ssub.s32 %s36, %s48
      %p232 = scmp.eq.s32.totalorder %s231, 0
      %s234 = sadd.s32 %s233, 1
      %s235 = scalar_select %p232, %s233, %s234
      %p238 = pneg %p232
      %p239 = scmp.eq.s32.totalorder %s29, 11
      %p240 = por %p238, %p239
      %p241 = scmp.ne.s32.totalorder %s233, %s236
      %p242 = scmp.eq.s32.totalorder %s29, 0
      %p243 = por %p241, %p242
      %p244 = scmp.ne.s32.totalorder %s233, %s236
      %p245 = scmp.eq.s32.totalorder %s34, 11
      %p246 = por %p244, %p245
      %p247 = scmp.ne.s32.totalorder %s236, %s237
      %p248 = scmp.eq.s32.totalorder %s34, 0
      %p249 = por %p247, %p248
      %p250 = scmp.ne.s32.totalorder %s236, %s237
      %p251 = scmp.eq.s32.totalorder %s35, 11
      %p252 = por %p250, %p251
      %p254 = scmp.ne.s32.totalorder %s237, %s253
      %p255 = scmp.eq.s32.totalorder %s35, 0
      %p256 = por %p254, %p255
      %s257 = ssub.s32 %s36, %s48
      %p258 = scmp.eq.s32.totalorder %s257, 0
      %s260 = sadd.s32 %s259, 1
      %s261 = scalar_select %p258, %s259, %s260
      %p264 = pneg %p258
      %p265 = scmp.eq.s32.totalorder %s29, 11
      %p266 = por %p264, %p265
      %p267 = scmp.ne.s32.totalorder %s259, %s262
      %p268 = scmp.eq.s32.totalorder %s29, 0
      %p269 = por %p267, %p268
      %p270 = scmp.ne.s32.totalorder %s259, %s262
      %p271 = scmp.eq.s32.totalorder %s34, 11
      %p272 = por %p270, %p271
      %p273 = scmp.ne.s32.totalorder %s262, %s263
      %p274 = scmp.eq.s32.totalorder %s34, 0
      %p275 = por %p273, %p274
      %p276 = scmp.ne.s32.totalorder %s262, %s263
      %p277 = scmp.eq.s32.totalorder %s35, 11
      %p278 = por %p276, %p277
      %p280 = scmp.ne.s32.totalorder %s263, %s279
      %p281 = scmp.eq.s32.totalorder %s35, 0
      %p282 = por %p280, %p281
      %s283 = ssub.s32 %s36, %s48
      %p284 = scmp.eq.s32.totalorder %s283, 0
      %s286 = sadd.s32 %s285, 1
      %s287 = scalar_select %p284, %s285, %s286
      %p290 = pneg %p284
      %p291 = scmp.eq.s32.totalorder %s29, 11
      %p292 = por %p290, %p291
      %p293 = scmp.ne.s32.totalorder %s285, %s288
      %p294 = scmp.eq.s32.totalorder %s29, 0
      %p295 = por %p293, %p294
      %p296 = scmp.ne.s32.totalorder %s285, %s288
      %p297 = scmp.eq.s32.totalorder %s34, 11
      %p298 = por %p296, %p297
      %p299 = scmp.ne.s32.totalorder %s288, %s289
      %p300 = scmp.eq.s32.totalorder %s34, 0
      %p301 = por %p299, %p300
      %p302 = scmp.ne.s32.totalorder %s288, %s289
      %p303 = scmp.eq.s32.totalorder %s35, 11
      %p304 = por %p302, %p303
      %p306 = scmp.ne.s32.totalorder %s289, %s305
      %p307 = scmp.eq.s32.totalorder %s35, 0
      %p308 = por %p306, %p307
      %s309 = ssub.s32 %s36, %s48
      %p310 = scmp.eq.s32.totalorder %s309, 0
      %s312 = sadd.s32 %s311, 1
      %s313 = scalar_select %p310, %s311, %s312
      %p316 = pneg %p310
      %p317 = scmp.eq.s32.totalorder %s29, 11
      %p318 = por %p316, %p317
      %p319 = scmp.ne.s32.totalorder %s311, %s314
      %p320 = scmp.eq.s32.totalorder %s29, 0
      %p321 = por %p319, %p320
      %p322 = scmp.ne.s32.totalorder %s311, %s314
      %p323 = scmp.eq.s32.totalorder %s34, 11
      %p324 = por %p322, %p323
      %p325 = scmp.ne.s32.totalorder %s314, %s315
      %p326 = scmp.eq.s32.totalorder %s34, 0
      %p327 = por %p325, %p326
      %p328 = scmp.ne.s32.totalorder %s314, %s315
      %p329 = scmp.eq.s32.totalorder %s35, 11
      %p330 = por %p328, %p329
      %p332 = scmp.ne.s32.totalorder %s315, %s331
      %p333 = scmp.eq.s32.totalorder %s35, 0
      %p334 = por %p332, %p333
      %s335 = ssub.s32 %s36, %s48
      %p336 = scmp.eq.s32.totalorder %s335, 0
      %s338 = sadd.s32 %s337, 1
      %s339 = scalar_select %p336, %s337, %s338
      %p342 = pneg %p336
      %p343 = scmp.eq.s32.totalorder %s29, 11
      %p344 = por %p342, %p343
      %p345 = scmp.ne.s32.totalorder %s337, %s340
      %p346 = scmp.eq.s32.totalorder %s29, 0
      %p347 = por %p345, %p346
      %p348 = scmp.ne.s32.totalorder %s337, %s340
      %p349 = scmp.eq.s32.totalorder %s34, 11
      %p350 = por %p348, %p349
      %p351 = scmp.ne.s32.totalorder %s340, %s341
      %p352 = scmp.eq.s32.totalorder %s34, 0
      %p353 = por %p351, %p352
      %p354 = scmp.ne.s32.totalorder %s340, %s341
      %p355 = scmp.eq.s32.totalorder %s35, 11
      %p356 = por %p354, %p355
      %p358 = scmp.ne.s32.totalorder %s341, %s357
      %p359 = scmp.eq.s32.totalorder %s35, 0
      %p360 = por %p358, %p359
      %s361 = ssub.s32 %s36, %s48
      %s362 = ssub.s32 %s37, %s44
      %s363 = sor.u32 %s361, %s362
      %p364 = scmp.eq.s32.totalorder %s363, 0
      %s366 = sadd.s32 %s365, 1
      %s367 = scalar_select %p364, %s365, %s366
      %p370 = pneg %p364
      %p371 = scmp.eq.s32.totalorder %s29, 11
      %p372 = por %p370, %p371
      %p373 = scmp.ne.s32.totalorder %s365, %s368
      %p374 = scmp.eq.s32.totalorder %s29, 0
      %p375 = por %p373, %p374
      %p376 = scmp.ne.s32.totalorder %s365, %s368
      %p377 = scmp.eq.s32.totalorder %s34, 11
      %p378 = por %p376, %p377
      %p379 = scmp.ne.s32.totalorder %s368, %s369
      %p380 = scmp.eq.s32.totalorder %s34, 0
      %p381 = por %p379, %p380
      %p382 = scmp.ne.s32.totalorder %s368, %s369
      %p383 = scmp.eq.s32.totalorder %s35, 11
      %p384 = por %p382, %p383
      %p386 = scmp.ne.s32.totalorder %s369, %s385
      %p387 = scmp.eq.s32.totalorder %s35, 0
      %p388 = por %p386, %p387
      %s389 = ssub.s32 %s36, %s48
      %s390 = ssub.s32 %s37, %s44
      %s391 = sor.u32 %s389, %s390
      %p392 = scmp.eq.s32.totalorder %s391, 0
      %s394 = sadd.s32 %s393, 1
      %s395 = scalar_select %p392, %s393, %s394
      %p398 = pneg %p392
      %p399 = scmp.eq.s32.totalorder %s29, 11
      %p400 = por %p398, %p399
      %p401 = scmp.ne.s32.totalorder %s393, %s396
      %p402 = scmp.eq.s32.totalorder %s29, 0
      %p403 = por %p401, %p402
      %p404 = scmp.ne.s32.totalorder %s393, %s396
      %p405 = scmp.eq.s32.totalorder %s34, 11
      %p406 = por %p404, %p405
      %p407 = scmp.ne.s32.totalorder %s396, %s397
      %p408 = scmp.eq.s32.totalorder %s34, 0
      %p409 = por %p407, %p408
      %p410 = scmp.ne.s32.totalorder %s396, %s397
      %p411 = scmp.eq.s32.totalorder %s35, 11
      %p412 = por %p410, %p411
      %p414 = scmp.ne.s32.totalorder %s397, %s413
      %p415 = scmp.eq.s32.totalorder %s35, 0
      %p416 = por %p414, %p415
      %s417 = ssub.s32 %s36, %s48
      %s418 = ssub.s32 %s37, %s44
      %s419 = sor.u32 %s417, %s418
      %p420 = scmp.eq.s32.totalorder %s419, 0
      %s422 = sadd.s32 %s421, 1
      %s423 = scalar_select %p420, %s421, %s422
      %p426 = pneg %p420
      %p427 = scmp.eq.s32.totalorder %s29, 11
      %p428 = por %p426, %p427
      %p429 = scmp.ne.s32.totalorder %s421, %s424
      %p430 = scmp.eq.s32.totalorder %s29, 0
      %p431 = por %p429, %p430
      %p432 = scmp.ne.s32.totalorder %s421, %s424
      %p433 = scmp.eq.s32.totalorder %s34, 11
      %p434 = por %p432, %p433
      %p435 = scmp.ne.s32.totalorder %s424, %s425
      %p436 = scmp.eq.s32.totalorder %s34, 0
      %p437 = por %p435, %p436
      %p438 = scmp.ne.s32.totalorder %s424, %s425
      %p439 = scmp.eq.s32.totalorder %s35, 11
      %p440 = por %p438, %p439
      %p442 = scmp.ne.s32.totalorder %s425, %s441
      %p443 = scmp.eq.s32.totalorder %s35, 0
      %p444 = por %p442, %p443
      %s445 = ssub.s32 %s36, %s48
      %p446 = scmp.eq.s32.totalorder %s445, 0
      %s448 = sadd.s32 %s447, 1
      %s449 = scalar_select %p446, %s447, %s448
      %p452 = pneg %p446
      %p453 = scmp.eq.s32.totalorder %s29, 11
      %p454 = por %p452, %p453
      %p455 = scmp.ne.s32.totalorder %s447, %s450
      %p456 = scmp.eq.s32.totalorder %s29, 0
      %p457 = por %p455, %p456
      %p458 = scmp.ne.s32.totalorder %s447, %s450
      %p459 = scmp.eq.s32.totalorder %s34, 11
      %p460 = por %p458, %p459
      %p461 = scmp.ne.s32.totalorder %s450, %s451
      %p462 = scmp.eq.s32.totalorder %s34, 0
      %p463 = por %p461, %p462
      %p464 = scmp.ne.s32.totalorder %s450, %s451
      %p465 = scmp.eq.s32.totalorder %s35, 11
      %p466 = por %p464, %p465
      %p468 = scmp.ne.s32.totalorder %s451, %s467
      %p469 = scmp.eq.s32.totalorder %s35, 0
      %p470 = por %p468, %p469
      %s472 = sadd.s32 %s471, 1
      %p475 = scmp.eq.s32.totalorder %s29, 11
      %p476 = scmp.ne.s32.totalorder %s471, %s473
      %p477 = scmp.eq.s32.totalorder %s29, 0
      %p478 = por %p476, %p477
      %p479 = scmp.ne.s32.totalorder %s471, %s473
      %p480 = scmp.eq.s32.totalorder %s34, 11
      %p481 = por %p479, %p480
      %p482 = scmp.ne.s32.totalorder %s473, %s474
      %p483 = scmp.eq.s32.totalorder %s34, 0
      %p484 = por %p482, %p483
      %p485 = scmp.ne.s32.totalorder %s473, %s474
      %p486 = scmp.eq.s32.totalorder %s35, 11
      %p487 = por %p485, %p486
      %p489 = scmp.ne.s32.totalorder %s474, %s488
      %p490 = scmp.eq.s32.totalorder %s35, 0
      %p491 = por %p489, %p490
      %s492 = ssub.s32 %s36, %s48
      %p493 = scmp.eq.s32.totalorder %s492, 0
      %s495 = sadd.s32 %s494, 1
      %s496 = scalar_select %p493, %s494, %s495
      %p499 = pneg %p493
      %p500 = scmp.eq.s32.totalorder %s29, 11
      %p501 = por %p499, %p500
      %p502 = scmp.ne.s32.totalorder %s494, %s497
      %p503 = scmp.eq.s32.totalorder %s29, 0
      %p504 = por %p502, %p503
      %p505 = scmp.ne.s32.totalorder %s494, %s497
      %p506 = scmp.eq.s32.totalorder %s34, 11
      %p507 = por %p505, %p506
      %p508 = scmp.ne.s32.totalorder %s497, %s498
      %p509 = scmp.eq.s32.totalorder %s34, 0
      %p510 = por %p508, %p509
      %p511 = scmp.ne.s32.totalorder %s497, %s498
      %p512 = scmp.eq.s32.totalorder %s35, 11
      %p513 = por %p511, %p512
      %p515 = scmp.ne.s32.totalorder %s498, %s514
      %p516 = scmp.eq.s32.totalorder %s35, 0
      %p517 = por %p515, %p516
      %p518 = scmp.le.s32.totalorder 1, %s29
      %p519 = scmp.lt.s32.totalorder %s29, 13
      %p520 = pnand %p518, %p519
      %p521 = pneg %p520
      // Predicated region
      $region9: #{tpu_custom_call.1} parent=5 // pred_check
        _
      $region10: #{tpu_custom_call.1} parent=5 // pred_check_branch
        %523 = sbr.rel (%p520) target = $region12
      $region11: #{tpu_custom_call.1} parent=5 // pred_region
        %s524 = ssub.s32 %s29, 1
      $region12: #{tpu_custom_call.1} parent=5 // pred_fallthru
        _
      %p525 = scmp.lt.s32.totalorder %s29, 12
      // Predicated region
      $region13: #{tpu_custom_call.1} parent=5 // pred_check
        %p526 = pneg %p525
      $region14: #{tpu_custom_call.1} parent=5 // pred_check_branch
        %528 = sbr.rel (%p526) target = $region16
      $region15: #{tpu_custom_call.1} parent=5 // pred_region
        // Predicated region
        $region17: #{tpu_custom_call.1} parent=15 // pred_check
          %p529 = pneg %p61
        $region18: #{tpu_custom_call.1} parent=15 // pred_check_branch
          %531 = sbr.rel (%p529) target = $region20
        $region19: #{tpu_custom_call.1} parent=15 // pred_region
          %p532 = scmp.lt.s32.totalorder %s36, 1
          %s533 = scalar_select %p532, %s36, 1
          %s534 = scalar_lea.vmem %s1, %s533
        $region20: #{tpu_custom_call.1} parent=15 // pred_fallthru
          _
        // Predicated region
        $region21: #{tpu_custom_call.1} parent=15 // pred_check
          %p535 = pneg %p87
        $region22: #{tpu_custom_call.1} parent=15 // pred_check_branch
          %537 = sbr.rel (%p535) target = $region24
        $region23: #{tpu_custom_call.1} parent=15 // pred_region
          %p538 = scmp.lt.s32.totalorder %s36, 1
          %s539 = scalar_select %p538, %s36, 1
          %s540 = scalar_lea.vmem %s2, %s539
        $region24: #{tpu_custom_call.1} parent=15 // pred_fallthru
          _
        // Predicated region
        $region25: #{tpu_custom_call.1} parent=15 // pred_check
          %p541 = pneg %p113
        $region26: #{tpu_custom_call.1} parent=15 // pred_check_branch
          %543 = sbr.rel (%p541) target = $region28
        $region27: #{tpu_custom_call.1} parent=15 // pred_region
          %p544 = scmp.lt.s32.totalorder %s36, 1
          %s545 = scalar_select %p544, %s36, 1
          %s546 = smul.addr %s545, 4
          %s547 = smul.addr %s546, 4
          %s548 = scalar_lea.vmem %s3, %s547
        $region28: #{tpu_custom_call.1} parent=15 // pred_fallthru
          _
        // Predicated region
        $region29: #{tpu_custom_call.1} parent=15 // pred_check
          %p549 = pneg %p139
        $region30: #{tpu_custom_call.1} parent=15 // pred_check_branch
          %551 = sbr.rel (%p549) target = $region32
        $region31: #{tpu_custom_call.1} parent=15 // pred_region
          %p552 = scmp.lt.s32.totalorder %s36, 1
          %s553 = scalar_select %p552, %s36, 1
          %s554 = scalar_lea.vmem %s4, %s553
        $region32: #{tpu_custom_call.1} parent=15 // pred_fallthru
          _
        // Predicated region
        $region33: #{tpu_custom_call.1} parent=15 // pred_check
          %p555 = pneg %p165
        $region34: #{tpu_custom_call.1} parent=15 // pred_check_branch
          %557 = sbr.rel (%p555) target = $region36
        $region35: #{tpu_custom_call.1} parent=15 // pred_region
          %p558 = scmp.lt.s32.totalorder %s36, 1
          %s559 = scalar_select %p558, %s36, 1
          %s560 = smul.addr %s559, 4
          %s561 = smul.addr %s560, 4
          %s562 = scalar_lea.vmem %s5, %s561
        $region36: #{tpu_custom_call.1} parent=15 // pred_fallthru
          _
        // Predicated region
        $region37: #{tpu_custom_call.1} parent=15 // pred_check
          %p563 = pneg %p191
        $region38: #{tpu_custom_call.1} parent=15 // pred_check_branch
          %565 = sbr.rel (%p563) target = $region40
        $region39: #{tpu_custom_call.1} parent=15 // pred_region
          %p566 = scmp.lt.s32.totalorder %s36, 1
          %s567 = scalar_select %p566, %s36, 1
          %s568 = scalar_lea.vmem %s6, %s567
        $region40: #{tpu_custom_call.1} parent=15 // pred_fallthru
          _
        // Predicated region
        $region41: #{tpu_custom_call.1} parent=15 // pred_check
          %p569 = pneg %p217
        $region42: #{tpu_custom_call.1} parent=15 // pred_check_branch
          %571 = sbr.rel (%p569) target = $region44
        $region43: #{tpu_custom_call.1} parent=15 // pred_region
          %p572 = scmp.lt.s32.totalorder %s36, 1
          %s573 = scalar_select %p572, %s36, 1
          %s574 = smul.addr %s573, 4
          %s575 = smul.addr %s574, 4
          %s576 = scalar_lea.vmem %s7, %s575
        $region44: #{tpu_custom_call.1} parent=15 // pred_fallthru
          _
        // Predicated region
        $region45: #{tpu_custom_call.1} parent=15 // pred_check
          %p577 = pneg %p243
        $region46: #{tpu_custom_call.1} parent=15 // pred_check_branch
          %579 = sbr.rel (%p577) target = $region48
        $region47: #{tpu_custom_call.1} parent=15 // pred_region
          %p580 = scmp.lt.s32.totalorder %s36, 1
          %s581 = scalar_select %p580, %s36, 1
          %s582 = scalar_lea.vmem %s8, %s581
        $region48: #{tpu_custom_call.1} parent=15 // pred_fallthru
          _
        // Predicated region
        $region49: #{tpu_custom_call.1} parent=15 // pred_check
          %p583 = pneg %p269
        $region50: #{tpu_custom_call.1} parent=15 // pred_check_branch
          %585 = sbr.rel (%p583) target = $region52
        $region51: #{tpu_custom_call.1} parent=15 // pred_region
          %p586 = scmp.lt.s32.totalorder %s36, 1
          %s587 = scalar_select %p586, %s36, 1
          %s588 = smul.addr %s587, 4
          %s589 = smul.addr %s588, 4
          %s590 = scalar_lea.vmem %s9, %s589
        $region52: #{tpu_custom_call.1} parent=15 // pred_fallthru
          _
        // Predicated region
        $region53: #{tpu_custom_call.1} parent=15 // pred_check
          %p591 = pneg %p295
        $region54: #{tpu_custom_call.1} parent=15 // pred_check_branch
          %593 = sbr.rel (%p591) target = $region56
        $region55: #{tpu_custom_call.1} parent=15 // pred_region
          %p594 = scmp.lt.s32.totalorder %s36, 1
          %s595 = scalar_select %p594, %s36, 1
          %s596 = scalar_lea.vmem %s10, %s595
        $region56: #{tpu_custom_call.1} parent=15 // pred_fallthru
          _
        // Predicated region
        $region57: #{tpu_custom_call.1} parent=15 // pred_check
          %p597 = pneg %p321
        $region58: #{tpu_custom_call.1} parent=15 // pred_check_branch
          %599 = sbr.rel (%p597) target = $region60
        $region59: #{tpu_custom_call.1} parent=15 // pred_region
          %p600 = scmp.lt.s32.totalorder %s36, 1
          %s601 = scalar_select %p600, %s36, 1
          %s602 = scalar_lea.vmem %s11, %s601
        $region60: #{tpu_custom_call.1} parent=15 // pred_fallthru
          _
        // Predicated region
        $region61: #{tpu_custom_call.1} parent=15 // pred_check
          %p603 = pneg %p347
        $region62: #{tpu_custom_call.1} parent=15 // pred_check_branch
          %605 = sbr.rel (%p603) target = $region64
        $region63: #{tpu_custom_call.1} parent=15 // pred_region
          %p606 = scmp.lt.s32.totalorder %s36, 1
          %s607 = scalar_select %p606, %s36, 1
          %s608 = scalar_lea.vmem %s12, %s607
        $region64: #{tpu_custom_call.1} parent=15 // pred_fallthru
          _
        // Predicated region
        $region65: #{tpu_custom_call.1} parent=15 // pred_check
          %p609 = pneg %p375
        $region66: #{tpu_custom_call.1} parent=15 // pred_check_branch
          %611 = sbr.rel (%p609) target = $region68
        $region67: #{tpu_custom_call.1} parent=15 // pred_region
          %s612 = sand.u32 %s365, 1
          %s613 = sand.u32 %s365, 1
          %s614 = smul.addr %s613, 64
          %s615 = scalar_lea.vmem [#allocation3], %s614
          %s616 = smul.u32 4, %s37
          %s617 = smul.addr %s36, 96
          %s618 = sadd.s32 %s616, %s617
          %s619 = smul.addr %s618, 4
          %s620 = scalar_lea.vmem %s13, %s619
          // Predicated region
          $region69: #{tpu_custom_call.1} parent=67 // pred_check
            _
          $region70: #{tpu_custom_call.1} parent=67 // pred_check_branch
            %622 = sbr.rel (0) target = $region72
          $region71: #{tpu_custom_call.1} parent=67 // pred_region
            // Predicated region
            $region73: #{tpu_custom_call.1} parent=71 // pred_check
              _
            $region74: #{tpu_custom_call.1} parent=71 // pred_check_branch
              %624 = sbr.rel (0) target = $region76
            $region75: #{tpu_custom_call.1} parent=71 // pred_region
              loop: start=0, step=1, limit=1
              $region77: #{tpu_custom_call.1} parent=75 // loop_pre_header
                _
              $region78: #{tpu_custom_call.1} parent=75 // loop_header
                %s626 = sphi 0, %s630
                %p627 = scmp.ge.s32.totalorder %s626, 1
                %s631 = sphi %s620, %s620
                %s632 = sphi %s615, %s615
              $region79: #{tpu_custom_call.1} parent=75 // loop_header_branch
                %629 = sbr.rel (%p627) target = $region83
              $region80: #{tpu_custom_call.1} parent=75 // loop_body
                %v633 = vld [vmem:[%s631] sm:$0xff]
                %634 = vst [vmem:[%s632] sm:$0xff] %v633
                %v635 = vld [vmem:[%s631 + $0x8] sm:$0xff]
                %636 = vst [vmem:[%s632 + $0x8] sm:$0xff] %v635
                %v637 = vld [vmem:[%s631 + $0x60] sm:$0xff]
                %638 = vst [vmem:[%s632 + $0x10] sm:$0xff] %v637
                %v639 = vld [vmem:[%s631 + $0x68] sm:$0xff]
                %640 = vst [vmem:[%s632 + $0x18] sm:$0xff] %v639
                %v641 = vld [vmem:[%s631 + $0xc0] sm:$0xff]
                %642 = vst [vmem:[%s632 + $0x20] sm:$0xff] %v641
                %v643 = vld [vmem:[%s631 + $0xc8] sm:$0xff]
                %644 = vst [vmem:[%s632 + $0x28] sm:$0xff] %v643
                %v645 = vld [vmem:[%s631 + $0x120] sm:$0xff]
                %646 = vst [vmem:[%s632 + $0x30] sm:$0xff] %v645
                %v647 = vld [vmem:[%s631 + $0x128] sm:$0xff]
                %648 = vst [vmem:[%s632 + $0x38] sm:$0xff] %v647
              $region81: #{tpu_custom_call.1} parent=75 // loop_footer
                %s630 = sadd.s32 1, %s626
              $region82: #{tpu_custom_call.1} parent=75 // loop_footer_branch
                %625 = sbr.rel target = $region78
              $region83: #{tpu_custom_call.1} parent=75 // loop_exit
                _
            $region76: #{tpu_custom_call.1} parent=71 // pred_fallthru
              _
            // Predicated region
            $region84: #{tpu_custom_call.1} parent=71 // pred_check
              _
            $region85: #{tpu_custom_call.1} parent=71 // pred_check_branch
              %650 = sbr.rel target = $region87
            $region86: #{tpu_custom_call.1} parent=71 // pred_region
              _
            $region87: #{tpu_custom_call.1} parent=71 // pred_fallthru
              _
          $region72: #{tpu_custom_call.1} parent=67 // pred_fallthru
            _
          %651 = vnop
        $region68: #{tpu_custom_call.1} parent=15 // pred_fallthru
          _
        // Predicated region
        $region88: #{tpu_custom_call.1} parent=15 // pred_check
          %p652 = pneg %p403
        $region89: #{tpu_custom_call.1} parent=15 // pred_check_branch
          %654 = sbr.rel (%p652) target = $region91
        $region90: #{tpu_custom_call.1} parent=15 // pred_region
          %s655 = smul.u32 4, %s37
          %p656 = scmp.lt.s32.totalorder %s36, 1
          %s657 = scalar_select %p656, %s36, 1
          %p658 = scmp.lt.s32.totalorder %s655, 23
          %s659 = scalar_select %p658, %s655, 23
          %s660 = smul.addr %s657, 24
          %s661 = sadd.s32 %s659, %s660
          %s662 = scalar_lea.vmem %s14, %s661
          %s663 = smul.u32 4, %s37
        $region91: #{tpu_custom_call.1} parent=15 // pred_fallthru
          _
        // Predicated region
        $region92: #{tpu_custom_call.1} parent=15 // pred_check
          %p664 = pneg %p431
        $region93: #{tpu_custom_call.1} parent=15 // pred_check_branch
          %666 = sbr.rel (%p664) target = $region95
        $region94: #{tpu_custom_call.1} parent=15 // pred_region
          %s667 = smul.u32 64, %s37
          %p668 = scmp.lt.s32.totalorder %s36, 1
          %s669 = scalar_select %p668, %s36, 1
          %p670 = scmp.lt.s32.totalorder %s667, 383
          %s671 = scalar_select %p670, %s667, 383
          %s672 = smul.addr %s669, 384
          %s673 = sadd.s32 %s671, %s672
          %s674 = smul.addr %s673, 4
          %s675 = scalar_lea.vmem %s15, %s674
          %s676 = smul.u32 64, %s37
        $region95: #{tpu_custom_call.1} parent=15 // pred_fallthru
          _
        // Predicated region
        $region96: #{tpu_custom_call.1} parent=15 // pred_check
          %p677 = pneg %p457
        $region97: #{tpu_custom_call.1} parent=15 // pred_check_branch
          %679 = sbr.rel (%p677) target = $region99
        $region98: #{tpu_custom_call.1} parent=15 // pred_region
          %p680 = scmp.lt.s32.totalorder %s36, 1
          %s681 = scalar_select %p680, %s36, 1
          %s682 = scalar_lea.vmem %s16, %s681
        $region99: #{tpu_custom_call.1} parent=15 // pred_fallthru
          _
      $region16: #{tpu_custom_call.1} parent=5 // pred_fallthru
        _
      %p683 = scmp.le.s32.totalorder 1, %s29
      %p684 = scmp.lt.s32.totalorder %s29, 13
      %p685 = pnand %p683, %p684
      %p686 = pneg %p685
      // Predicated region
      $region100: #{tpu_custom_call.1} parent=5 // pred_check
        _
      $region101: #{tpu_custom_call.1} parent=5 // pred_check_branch
        %688 = sbr.rel (%p685) target = $region103
      $region102: #{tpu_custom_call.1} parent=5 // pred_region
        %s689 = ssub.s32 %s29, 1
        %s690 = sand.u32 %s368, 1
        %s691 = sand.u32 %s368, 1
        %s692 = smul.addr %s691, 64
        %s693 = scalar_lea.vmem [#allocation3], %s692
        // Predicated region
        $region104: #{tpu_custom_call.1} parent=102 // pred_check
          %p694 = pneg %p381
        $region105: #{tpu_custom_call.1} parent=102 // pred_check_branch
          %696 = sbr.rel (%p694) target = $region107
        $region106: #{tpu_custom_call.1} parent=102 // pred_region
          _
        $region107: #{tpu_custom_call.1} parent=102 // pred_fallthru
          _
        %p697 = scmp.lt.s32.totalorder %s38, 1
        %s698 = scalar_select %p697, %s38, 1
        %s699 = scalar_lea.vmem %s1, %s698
        %p700 = pneg %p67
        %p701 = pneg %p64
        %p702 = scmp.lt.s32.totalorder %s38, 1
        %s703 = scalar_select %p702, %s38, 1
        %s704 = scalar_lea.vmem %s2, %s703
        %p705 = pneg %p93
        %p706 = pneg %p90
        %p707 = scmp.lt.s32.totalorder %s38, 1
        %s708 = scalar_select %p707, %s38, 1
        %s709 = smul.addr %s708, 4
        %s710 = smul.addr %s709, 4
        %s711 = scalar_lea.vmem %s3, %s710
        %p712 = pneg %p119
        %p713 = pneg %p116
        %p714 = scmp.lt.s32.totalorder %s38, 1
        %s715 = scalar_select %p714, %s38, 1
        %s716 = scalar_lea.vmem %s4, %s715
        %p717 = pneg %p145
        %p718 = pneg %p142
        %p719 = scmp.lt.s32.totalorder %s38, 1
        %s720 = scalar_select %p719, %s38, 1
        %s721 = smul.addr %s720, 4
        %s722 = smul.addr %s721, 4
        %s723 = scalar_lea.vmem %s5, %s722
        %p724 = pneg %p171
        %p725 = pneg %p168
        %p726 = scmp.lt.s32.totalorder %s38, 1
        %s727 = scalar_select %p726, %s38, 1
        %s728 = scalar_lea.vmem %s6, %s727
        %p729 = pneg %p197
        %p730 = pneg %p194
        %p731 = scmp.lt.s32.totalorder %s38, 1
        %s732 = scalar_select %p731, %s38, 1
        %s733 = smul.addr %s732, 4
        %s734 = smul.addr %s733, 4
        %s735 = scalar_lea.vmem %s7, %s734
        %p736 = pneg %p223
        %p737 = pneg %p220
        %p738 = scmp.lt.s32.totalorder %s38, 1
        %s739 = scalar_select %p738, %s38, 1
        %s740 = scalar_lea.vmem %s8, %s739
        %p741 = pneg %p249
        %p742 = pneg %p246
        %p743 = scmp.lt.s32.totalorder %s38, 1
        %s744 = scalar_select %p743, %s38, 1
        %s745 = smul.addr %s744, 4
        %s746 = smul.addr %s745, 4
        %s747 = scalar_lea.vmem %s9, %s746
        %p748 = pneg %p275
        %p749 = pneg %p272
        %p750 = scmp.lt.s32.totalorder %s38, 1
        %s751 = scalar_select %p750, %s38, 1
        %s752 = scalar_lea.vmem %s10, %s751
        %p753 = pneg %p301
        %p754 = pneg %p298
        %p755 = scmp.lt.s32.totalorder %s38, 1
        %s756 = scalar_select %p755, %s38, 1
        %s757 = scalar_lea.vmem %s11, %s756
        %p758 = pneg %p327
        %p759 = pneg %p324
        %p760 = scmp.lt.s32.totalorder %s38, 1
        %s761 = scalar_select %p760, %s38, 1
        %s762 = scalar_lea.vmem %s12, %s761
        %p763 = pneg %p353
        %p764 = pneg %p350
        %s765 = sand.u32 %s368, 1
        %s766 = sand.u32 %s368, 1
        %s767 = smul.addr %s766, 64
        %s768 = scalar_lea.vmem [#allocation3], %s767
        %p769 = pneg %p381
        %p770 = pneg %p378
        %s771 = smul.u32 4, %s39
        %p772 = scmp.lt.s32.totalorder %s38, 1
        %s773 = scalar_select %p772, %s38, 1
        %p774 = scmp.lt.s32.totalorder %s771, 23
        %s775 = scalar_select %p774, %s771, 23
        %s776 = smul.addr %s773, 24
        %s777 = sadd.s32 %s775, %s776
        %s778 = scalar_lea.vmem %s14, %s777
        %p779 = pneg %p409
        %p780 = pneg %p406
        %s781 = smul.u32 64, %s39
        %p782 = scmp.lt.s32.totalorder %s38, 1
        %s783 = scalar_select %p782, %s38, 1
        %p784 = scmp.lt.s32.totalorder %s781, 383
        %s785 = scalar_select %p784, %s781, 383
        %s786 = smul.addr %s783, 384
        %s787 = sadd.s32 %s785, %s786
        %s788 = smul.addr %s787, 4
        %s789 = scalar_lea.vmem %s15, %s788
        %p790 = pneg %p437
        %p791 = pneg %p434
        %p792 = scmp.lt.s32.totalorder %s38, 1
        %s793 = scalar_select %p792, %s38, 1
        %s794 = scalar_lea.vmem %s16, %s793
        %p795 = pneg %p463
        %p796 = pneg %p460
        %p797 = pneg %p484
        %p798 = pneg %p481
        %p799 = pneg %p510
        %p800 = pneg %p507
        %s801 = sand.u32 %s497, 1
        %s802 = scalar_lea.sflag [#allocation7], %s801
        %s803 = sand.u32 %s497, 1
        %s804 = smul.addr %s803, 64
        %s805 = scalar_lea.vmem [#allocation6], %s804
        %p806 = scmp.lt.s32.totalorder %s38, 1
        %s807 = scalar_select %p806, %s38, 1
        %s808 = scalar_lea.vmem %s1, %s807
        %p809 = scmp.lt.s32.totalorder %s38, 1
        %s810 = scalar_select %p809, %s38, 1
        %s811 = scalar_lea.vmem %s2, %s810
        %p812 = scmp.lt.s32.totalorder %s38, 1
        %s813 = scalar_select %p812, %s38, 1
        %s814 = smul.addr %s813, 4
        %s815 = smul.addr %s814, 4
        %s816 = scalar_lea.vmem %s3, %s815
        %p817 = scmp.lt.s32.totalorder %s38, 1
        %s818 = scalar_select %p817, %s38, 1
        %s819 = scalar_lea.vmem %s4, %s818
        %p820 = scmp.lt.s32.totalorder %s38, 1
        %s821 = scalar_select %p820, %s38, 1
        %s822 = smul.addr %s821, 4
        %s823 = smul.addr %s822, 4
        %s824 = scalar_lea.vmem %s5, %s823
        %p825 = scmp.lt.s32.totalorder %s38, 1
        %s826 = scalar_select %p825, %s38, 1
        %s827 = scalar_lea.vmem %s6, %s826
        %p828 = scmp.lt.s32.totalorder %s38, 1
        %s829 = scalar_select %p828, %s38, 1
        %s830 = smul.addr %s829, 4
        %s831 = smul.addr %s830, 4
        %s832 = scalar_lea.vmem %s7, %s831
        %p833 = scmp.lt.s32.totalorder %s38, 1
        %s834 = scalar_select %p833, %s38, 1
        %s835 = scalar_lea.vmem %s8, %s834
        %p836 = scmp.lt.s32.totalorder %s38, 1
        %s837 = scalar_select %p836, %s38, 1
        %s838 = smul.addr %s837, 4
        %s839 = smul.addr %s838, 4
        %s840 = scalar_lea.vmem %s9, %s839
        %p841 = scmp.lt.s32.totalorder %s38, 1
        %s842 = scalar_select %p841, %s38, 1
        %s843 = scalar_lea.vmem %s10, %s842
        %p844 = scmp.lt.s32.totalorder %s38, 1
        %s845 = scalar_select %p844, %s38, 1
        %s846 = scalar_lea.vmem %s11, %s845
        %p847 = scmp.lt.s32.totalorder %s38, 1
        %s848 = scalar_select %p847, %s38, 1
        %s849 = scalar_lea.vmem %s12, %s848
        %s850 = smul.u32 4, %s39
        %s851 = smul.u32 4, %s39
        %p852 = scmp.lt.s32.totalorder %s38, 1
        %s853 = scalar_select %p852, %s38, 1
        %p854 = scmp.lt.s32.totalorder %s851, 23
        %s855 = scalar_select %p854, %s851, 23
        %s856 = smul.addr %s853, 24
        %s857 = sadd.s32 %s855, %s856
        %s858 = scalar_lea.vmem %s14, %s857
        %s859 = smul.u32 4, %s39
        %s860 = smul.u32 64, %s39
        %p861 = scmp.lt.s32.totalorder %s38, 1
        %s862 = scalar_select %p861, %s38, 1
        %p863 = scmp.lt.s32.totalorder %s860, 383
        %s864 = scalar_select %p863, %s860, 383
        %s865 = smul.addr %s862, 384
        %s866 = sadd.s32 %s864, %s865
        %s867 = smul.addr %s866, 4
        %s868 = scalar_lea.vmem %s15, %s867
        %s869 = smul.u32 64, %s39
        %p870 = scmp.lt.s32.totalorder %s38, 1
        %s871 = scalar_select %p870, %s38, 1
        %s872 = scalar_lea.vmem %s16, %s871
        %p874 = scmp.eq.s32.totalorder %s39, 0
        // Predicated region
        $region108: #{tpu_custom_call.1} parent=102 // pred_check
          %p875 = pneg %p874
        $region109: #{tpu_custom_call.1} parent=102 // pred_check_branch
          %877 = sbr.rel (%p875) target = $region111
        $region110: #{tpu_custom_call.1} parent=102 // pred_region
          %p878 = scmp.eq.s32.totalorder %s38, 0
          // Predicated region
          $region112: #{tpu_custom_call.1} parent=110 // pred_check
            %p879 = pneg %p878
          $region113: #{tpu_custom_call.1} parent=110 // pred_check_branch
            %881 = sbr.rel (%p879) target = $region115
          $region114: #{tpu_custom_call.1} parent=110 // pred_region
            $region116: #{tpu_custom_call.1} parent=114
              #allocation8 [shape = 's32[1]{0}', space=sflag, size = 0x4, scoped, tag = 'scoped memory for tpu_custom_call.1']
              // Predicated region
              $region117: #{tpu_custom_call.1} parent=116 // pred_check
                _
              $region118: #{tpu_custom_call.1} parent=116 // pred_check_branch
                %883 = sbr.rel target = $region120
              $region119: #{tpu_custom_call.1} parent=116 // pred_region
                %884 = sst [smem:[#allocation11]] [#allocation10]
                %885 = sst [smem:[#allocation12]] [#allocation9]
              $region120: #{tpu_custom_call.1} parent=116 // pred_fallthru
                _
              %887 = shalt.err (0)
              %s889 = sshll.u32 [#allocation4], 4
              %s890 = int_to_ptr.vmem [resolvable:$true] %s889
              %892 = dma.hbm_to_vmem [thread:$0]  %s0, 256, %s890, [#allocation8]
              %s893 = smul.u32 2, 8
              %s894 = smul.u32 %s893, 1
              %s895 = sshll.u32 %s894, 4
              %896 = dma.done [#allocation8], %s895
          $region115: #{tpu_custom_call.1} parent=110 // pred_fallthru
            _
          %v897 = vld [vmem:[#allocation4] sm:$0xff]
          %v898 = vld [vmem:[#allocation4 + $0x8] sm:$0xff]
          %v899 = vld [vmem:[%s808] sm:$0x1]
          %v900 = vld [vmem:[%s811] sm:$0x1]
          %vm901 = vcmask 261120
          %v902 = vsel %vm901, %v897, 0.0
          %903 = vadd.xlane.f32.xlu0 %v902
          %v904 = vpop.xlane.xlu0 %903
          %v905 = vsel %vm901, %v898, 0.0
          %906 = vadd.xlane.f32.xlu0 %v905
          %v907 = vpop.xlane.xlu0 %906
          %v908 = vrcp.pop 32.0
          %v909 = vmul.f32 %v904, %v908
          %v910 = vmul.f32 %v907, %v908
          %v911 = vsub.f32 %v897, %v909
          %v912 = vsub.f32 %v898, %v910
          %v913 = vmul.f32 %v911, %v911
          %v914 = vmul.f32 %v912, %v912
          %v915 = vsel %vm901, %v913, 0.0
          %916 = vadd.xlane.f32.xlu0 %v915
          %v917 = vpop.xlane.xlu0 %916
          %v918 = vsel %vm901, %v914, 0.0
          %919 = vadd.xlane.f32.xlu0 %v918
          %v920 = vpop.xlane.xlu0 %919
          %v921 = vmul.f32 %v917, %v908
          %v922 = vmul.f32 %v920, %v908
          %v923 = vadd.f32 %v921, 1e-05
          %v924 = vadd.f32 %v922, 1e-05
          %v925 = vrsqrt.pop %v923
          %v926 = vrsqrt.pop %v924
          %v927 = vmul.f32 %v911, %v925
          %v928 = vmul.f32 %v912, %v926
          %v930 = vlaneseq
          %v931 = vshrl.u32 %v930, 7
          %v932 = vsub.s32 0, %v931
          %v933 = vrot.slane %v899, %v932
          %v935 = vmul.f32 %v927, %v933
          %v936 = vmul.f32 %v928, %v933
          %v938 = vlaneseq
          %v939 = vshrl.u32 %v938, 7
          %v940 = vsub.s32 0, %v939
          %v941 = vrot.slane %v900, %v940
          %v943 = vadd.f32 %v935, %v941
          %v944 = vadd.f32 %v936, %v941
          %v945 = vpack.c.bf16 %v944, %v943
          %v946 = vld [vmem:[%s816] sm:$0xf]
          %v947 = vld [vmem:[%s816 + $0x4] sm:$0xf]
          %v948 = vld [vmem:[%s816 + $0x8] sm:$0xf]
          %v949 = vld [vmem:[%s816 + $0xc] sm:$0xf]
          %v950 = vld [vmem:[%s819] sm:$0x1]
          %v952 = vlaneseq
          %v953 = vshrl.u32 %v952, 7
          %v954 = vsub.s32 0, %v953
          %v955 = vrot.slane %v950, %v954
          %v961 = vunpack.c.l.b16 %v946
          %v962 = vunpack.c.l.b16 %v947
          %v963 = vunpack.c.l.b16 %v948
          %v964 = vunpack.c.l.b16 %v949
          %v965 = vpack.c.b16 %v962, %v961
          %v966 = vpack.c.b16 %v964, %v963
          %v970 = vsel %vm901, %v945, 0
          %972 = vmatprep.subr.bf16.mxu0 0
          %973 = vmatpush1.bf16.msra.mxu0 %v965
          %974 = vmatprep.subr.bf16.mxu0 0
          %975 = vmatpush1.bf16.msra.mxu0 %v966
          %976 = vmatprep.subr.bf16.mxu0 0
          %977 = vmatpush1.bf16.msra.mxu0 0
          %978 = vmatprep.subr.bf16.mxu0 0
          %979 = vmatpush1.bf16.msra.mxu0 0
          %980 = vmatprep.subr.bf16.mxu0 0
          %981 = vmatpush1.bf16.msra.mxu0 0
          %982 = vmatprep.subr.bf16.mxu0 0
          %983 = vmatpush1.bf16.msra.mxu0 0
          %984 = vmatprep.subr.bf16.mxu0 0
          %985 = vmatpush1.bf16.msra.mxu0 0
          %986 = vmatprep.subr.bf16.mxu0 0
          %987 = vmatpush1.bf16.msra.mxu0 0
          %988 = vmatprep.subr.bf16.mxu0 0
          %989 = vmatpush1.bf16.msra.mxu0 0
          %990 = vmatprep.subr.bf16.mxu0 0
          %991 = vmatpush1.bf16.msra.mxu0 0
          %992 = vmatprep.subr.bf16.mxu0 0
          %993 = vmatpush1.bf16.msra.mxu0 0
          %994 = vmatprep.subr.bf16.mxu0 0
          %995 = vmatpush1.bf16.msra.mxu0 0
          %996 = vmatprep.subr.bf16.mxu0 0
          %997 = vmatpush1.bf16.msra.mxu0 0
          %998 = vmatprep.subr.bf16.mxu0 0
          %999 = vmatpush1.bf16.msra.mxu0 0
          %1000 = vmatprep.subr.bf16.mxu0 0
          %1001 = vmatpush1.bf16.msra.mxu0 0
          %1002 = vmatprep.subr.bf16.mxu0 0
          %1003 = vmatpush1.bf16.msra.mxu0 0
          %1004 = vmatprep.mubr.bf16.mxu0 0
          %1005 = vmatmul.mubr.bf16.gmra.mrb[0].mxu0 %v970
          %v1006 = vpop.f32.mrb[0].mxu0
          %v1007 = vadd.f32 %v955, %v1006
          %v1008 = vpop.f32.mrb[0].mxu0
          %v1009 = vpop.f32.mrb[0].mxu0
          %v1010 = vadd.f32 %v955, %v1009
          %v1011 = vpop.f32.mrb[0].mxu0
          %1012 = vdwg.mxu0
          %v1013 = vld [vmem:[%s824] sm:$0xf]
          %v1014 = vld [vmem:[%s824 + $0x4] sm:$0xf]
          %v1015 = vld [vmem:[%s824 + $0x8] sm:$0xf]
          %v1016 = vld [vmem:[%s824 + $0xc] sm:$0xf]
          %v1017 = vld [vmem:[%s827] sm:$0x1]
          %v1019 = vlaneseq
          %v1020 = vshrl.u32 %v1019, 7
          %v1021 = vsub.s32 0, %v1020
          %v1022 = vrot.slane %v1017, %v1021
          %v1028 = vunpack.c.l.b16 %v1013
          %v1029 = vunpack.c.l.b16 %v1014
          %v1030 = vunpack.c.l.b16 %v1015
          %v1031 = vunpack.c.l.b16 %v1016
          %v1032 = vpack.c.b16 %v1029, %v1028
          %v1033 = vpack.c.b16 %v1031, %v1030
          %1036 = vmatprep.subr.bf16.mxu0 0
          %1037 = vmatpush1.bf16.msra.mxu0 %v1032
          %1038 = vmatprep.subr.bf16.mxu0 0
          %1039 = vmatpush1.bf16.msra.mxu0 %v1033
          %1040 = vmatprep.subr.bf16.mxu0 0
          %1041 = vmatpush1.bf16.msra.mxu0 0
          %1042 = vmatprep.subr.bf16.mxu0 0
          %1043 = vmatpush1.bf16.msra.mxu0 0
          %1044 = vmatprep.subr.bf16.mxu0 0
          %1045 = vmatpush1.bf16.msra.mxu0 0
          %1046 = vmatprep.subr.bf16.mxu0 0
          %1047 = vmatpush1.bf16.msra.mxu0 0
          %1048 = vmatprep.subr.bf16.mxu0 0
          %1049 = vmatpush1.bf16.msra.mxu0 0
          %1050 = vmatprep.subr.bf16.mxu0 0
          %1051 = vmatpush1.bf16.msra.mxu0 0
          %1052 = vmatprep.subr.bf16.mxu0 0
          %1053 = vmatpush1.bf16.msra.mxu0 0
          %1054 = vmatprep.subr.bf16.mxu0 0
          %1055 = vmatpush1.bf16.msra.mxu0 0
          %1056 = vmatprep.subr.bf16.mxu0 0
          %1057 = vmatpush1.bf16.msra.mxu0 0
          %1058 = vmatprep.subr.bf16.mxu0 0
          %1059 = vmatpush1.bf16.msra.mxu0 0
          %1060 = vmatprep.subr.bf16.mxu0 0
          %1061 = vmatpush1.bf16.msra.mxu0 0
          %1062 = vmatprep.subr.bf16.mxu0 0
          %1063 = vmatpush1.bf16.msra.mxu0 0
          %1064 = vmatprep.subr.bf16.mxu0 0
          %1065 = vmatpush1.bf16.msra.mxu0 0
          %1066 = vmatprep.subr.bf16.mxu0 0
          %1067 = vmatpush1.bf16.msra.mxu0 0
          %1068 = vmatprep.mubr.bf16.mxu0 0
          %1069 = vmatmul.mubr.bf16.gmra.mrb[0].mxu0 %v970
          %v1070 = vpop.f32.mrb[0].mxu0
          %v1071 = vadd.f32 %v1022, %v1070
          %v1072 = vpop.f32.mrb[0].mxu0
          %v1073 = vpop.f32.mrb[0].mxu0
          %v1074 = vadd.f32 %v1022, %v1073
          %v1075 = vpop.f32.mrb[0].mxu0
          %1076 = vdwg.mxu0
          %v1077 = vld [vmem:[%s832] sm:$0xf]
          %v1078 = vld [vmem:[%s832 + $0x4] sm:$0xf]
          %v1079 = vld [vmem:[%s832 + $0x8] sm:$0xf]
          %v1080 = vld [vmem:[%s832 + $0xc] sm:$0xf]
          %v1081 = vld [vmem:[%s835] sm:$0x1]
          %v1083 = vlaneseq
          %v1084 = vshrl.u32 %v1083, 7
          %v1085 = vsub.s32 0, %v1084
          %v1086 = vrot.slane %v1081, %v1085
          %v1092 = vunpack.c.l.b16 %v1077
          %v1093 = vunpack.c.l.b16 %v1078
          %v1094 = vunpack.c.l.b16 %v1079
          %v1095 = vunpack.c.l.b16 %v1080
          %v1096 = vpack.c.b16 %v1093, %v1092
          %v1097 = vpack.c.b16 %v1095, %v1094
          %1100 = vmatprep.subr.bf16.mxu0 0
          %1101 = vmatpush1.bf16.msra.mxu0 %v1096
          %1102 = vmatprep.subr.bf16.mxu0 0
          %1103 = vmatpush1.bf16.msra.mxu0 %v1097
          %1104 = vmatprep.subr.bf16.mxu0 0
          %1105 = vmatpush1.bf16.msra.mxu0 0
          %1106 = vmatprep.subr.bf16.mxu0 0
          %1107 = vmatpush1.bf16.msra.mxu0 0
          %1108 = vmatprep.subr.bf16.mxu0 0
          %1109 = vmatpush1.bf16.msra.mxu0 0
          %1110 = vmatprep.subr.bf16.mxu0 0
          %1111 = vmatpush1.bf16.msra.mxu0 0
          %1112 = vmatprep.subr.bf16.mxu0 0
          %1113 = vmatpush1.bf16.msra.mxu0 0
          %1114 = vmatprep.subr.bf16.mxu0 0
          %1115 = vmatpush1.bf16.msra.mxu0 0
          %1116 = vmatprep.subr.bf16.mxu0 0
          %1117 = vmatpush1.bf16.msra.mxu0 0
          %1118 = vmatprep.subr.bf16.mxu0 0
          %1119 = vmatpush1.bf16.msra.mxu0 0
          %1120 = vmatprep.subr.bf16.mxu0 0
          %1121 = vmatpush1.bf16.msra.mxu0 0
          %1122 = vmatprep.subr.bf16.mxu0 0
          %1123 = vmatpush1.bf16.msra.mxu0 0
          %1124 = vmatprep.subr.bf16.mxu0 0
          %1125 = vmatpush1.bf16.msra.mxu0 0
          %1126 = vmatprep.subr.bf16.mxu0 0
          %1127 = vmatpush1.bf16.msra.mxu0 0
          %1128 = vmatprep.subr.bf16.mxu0 0
          %1129 = vmatpush1.bf16.msra.mxu0 0
          %1130 = vmatprep.subr.bf16.mxu0 0
          %1131 = vmatpush1.bf16.msra.mxu0 0
          %1132 = vmatprep.mubr.bf16.mxu0 0
          %1133 = vmatmul.mubr.bf16.gmra.mrb[0].mxu0 %v970
          %v1134 = vpop.f32.mrb[0].mxu0
          %v1135 = vadd.f32 %v1086, %v1134
          %v1136 = vpop.f32.mrb[0].mxu0
          %v1137 = vpop.f32.mrb[0].mxu0
          %v1138 = vadd.f32 %v1086, %v1137
          %v1139 = vpop.f32.mrb[0].mxu0
          %1140 = vdwg.mxu0
          %1143 = vrot.lane.b32.xlu0 %v1007, 120
          %v1144 = vpop.permute.xlu0 %1143
          %1145 = vrot.lane.b32.xlu0 %v1010, 120
          %v1146 = vpop.permute.xlu0 %1145
          %1149 = vrot.lane.b32.xlu0 %v1007, 112
          %v1150 = vpop.permute.xlu0 %1149
          %1151 = vrot.lane.b32.xlu0 %v1010, 112
          %v1152 = vpop.permute.xlu0 %1151
          %1155 = vrot.lane.b32.xlu0 %v1007, 104
          %v1156 = vpop.permute.xlu0 %1155
          %1157 = vrot.lane.b32.xlu0 %v1010, 104
          %v1158 = vpop.permute.xlu0 %1157
          %v1161 = vcombine.low %v1007, %v1150
          %v1162 = vcombine.high %v1007, %v1150
          %v1164 = vunpack.c.l.s4 1983009808
          %v1165 = vunpack.c.0.s8 %v1164
          %v1166 = vlaneseq
          %v1167 = vshrl.u32 %v1166, 7
          %v1168 = vsub.s32 %v1165, %v1167
          %v1169 = vrot.slane %v1161, %v1168
          %v1171 = vunpack.c.l.s4 1983009808
          %v1172 = vunpack.c.0.s8 %v1171
          %v1173 = vlaneseq
          %v1174 = vshrl.u32 %v1173, 7
          %v1175 = vsub.s32 %v1172, %v1174
          %v1176 = vrot.slane %v1162, %v1175
          %v1177 = vcombine.low %v1144, %v1156
          %v1178 = vcombine.high %v1144, %v1156
          %v1180 = vunpack.c.l.s4 1983009808
          %v1181 = vunpack.c.0.s8 %v1180
          %v1182 = vlaneseq
          %v1183 = vshrl.u32 %v1182, 7
          %v1184 = vsub.s32 %v1181, %v1183
          %v1185 = vrot.slane %v1177, %v1184
          %v1187 = vunpack.c.l.s4 1983009808
          %v1188 = vunpack.c.0.s8 %v1187
          %v1189 = vlaneseq
          %v1190 = vshrl.u32 %v1189, 7
          %v1191 = vsub.s32 %v1188, %v1190
          %v1192 = vrot.slane %v1178, %v1191
          %v1193 = vcombine.low %v1169, %v1185
          %v1194 = vcombine.high %v1169, %v1185
          %v1196 = vunpack.c.l.s4 1934713408
          %v1197 = vunpack.c.0.s8 %v1196
          %v1198 = vlaneseq
          %v1199 = vshrl.u32 %v1198, 7
          %v1200 = vsub.s32 %v1197, %v1199
          %v1201 = vrot.slane %v1193, %v1200
          %v1203 = vunpack.c.l.s4 1934713408
          %v1204 = vunpack.c.0.s8 %v1203
          %v1205 = vlaneseq
          %v1206 = vshrl.u32 %v1205, 7
          %v1207 = vsub.s32 %v1204, %v1206
          %v1208 = vrot.slane %v1194, %v1207
          %v1209 = vcombine.low %v1176, %v1192
          %v1210 = vcombine.high %v1176, %v1192
          %v1212 = vunpack.c.l.s4 1934713408
          %v1213 = vunpack.c.0.s8 %v1212
          %v1214 = vlaneseq
          %v1215 = vshrl.u32 %v1214, 7
          %v1216 = vsub.s32 %v1213, %v1215
          %v1217 = vrot.slane %v1209, %v1216
          %v1219 = vunpack.c.l.s4 1934713408
          %v1220 = vunpack.c.0.s8 %v1219
          %v1221 = vlaneseq
          %v1222 = vshrl.u32 %v1221, 7
          %v1223 = vsub.s32 %v1220, %v1222
          %v1224 = vrot.slane %v1210, %v1223
          %v1225 = vcombine.high %v1201, 0.0
          %v1226 = vcombine.high %v1208, 0.0
          %v1227 = vcombine.high %v1217, 0.0
          %v1228 = vcombine.high %v1224, 0.0
          %v1229 = vcombine.low %v1010, %v1152
          %v1230 = vcombine.high %v1010, %v1152
          %v1232 = vunpack.c.l.s4 1983009808
          %v1233 = vunpack.c.0.s8 %v1232
          %v1234 = vlaneseq
          %v1235 = vshrl.u32 %v1234, 7
          %v1236 = vsub.s32 %v1233, %v1235
          %v1237 = vrot.slane %v1229, %v1236
          %v1239 = vunpack.c.l.s4 1983009808
          %v1240 = vunpack.c.0.s8 %v1239
          %v1241 = vlaneseq
          %v1242 = vshrl.u32 %v1241, 7
          %v1243 = vsub.s32 %v1240, %v1242
          %v1244 = vrot.slane %v1230, %v1243
          %v1245 = vcombine.low %v1146, %v1158
          %v1246 = vcombine.high %v1146, %v1158
          %v1248 = vunpack.c.l.s4 1983009808
          %v1249 = vunpack.c.0.s8 %v1248
          %v1250 = vlaneseq
          %v1251 = vshrl.u32 %v1250, 7
          %v1252 = vsub.s32 %v1249, %v1251
          %v1253 = vrot.slane %v1245, %v1252
          %v1255 = vunpack.c.l.s4 1983009808
          %v1256 = vunpack.c.0.s8 %v1255
          %v1257 = vlaneseq
          %v1258 = vshrl.u32 %v1257, 7
          %v1259 = vsub.s32 %v1256, %v1258
          %v1260 = vrot.slane %v1246, %v1259
          %v1261 = vcombine.low %v1237, %v1253
          %v1262 = vcombine.high %v1237, %v1253
          %v1264 = vunpack.c.l.s4 1934713408
          %v1265 = vunpack.c.0.s8 %v1264
          %v1266 = vlaneseq
          %v1267 = vshrl.u32 %v1266, 7
          %v1268 = vsub.s32 %v1265, %v1267
          %v1269 = vrot.slane %v1261, %v1268
          %v1271 = vunpack.c.l.s4 1934713408
          %v1272 = vunpack.c.0.s8 %v1271
          %v1273 = vlaneseq
          %v1274 = vshrl.u32 %v1273, 7
          %v1275 = vsub.s32 %v1272, %v1274
          %v1276 = vrot.slane %v1262, %v1275
          %v1277 = vcombine.low %v1244, %v1260
          %v1278 = vcombine.high %v1244, %v1260
          %v1280 = vunpack.c.l.s4 1934713408
          %v1281 = vunpack.c.0.s8 %v1280
          %v1282 = vlaneseq
          %v1283 = vshrl.u32 %v1282, 7
          %v1284 = vsub.s32 %v1281, %v1283
          %v1285 = vrot.slane %v1277, %v1284
          %v1287 = vunpack.c.l.s4 1934713408
          %v1288 = vunpack.c.0.s8 %v1287
          %v1289 = vlaneseq
          %v1290 = vshrl.u32 %v1289, 7
          %v1291 = vsub.s32 %v1288, %v1290
          %v1292 = vrot.slane %v1278, %v1291
          %v1293 = vcombine.high %v1269, 0.0
          %v1294 = vcombine.high %v1276, 0.0
          %v1295 = vcombine.high %v1285, 0.0
          %v1296 = vcombine.high %v1292, 0.0
          %v1297 = vcombine.low %v1201, %v1208
          %v1299 = vunpack.c.l.s4 1983009808
          %v1300 = vunpack.c.0.s8 %v1299
          %v1301 = vlaneseq
          %v1302 = vshrl.u32 %v1301, 7
          %v1303 = vsub.s32 %v1300, %v1302
          %v1304 = vrot.slane %v1297, %v1303
          %v1305 = vcombine.low %v1225, %v1226
          %v1307 = vunpack.c.l.s4 1983009808
          %v1308 = vunpack.c.0.s8 %v1307
          %v1309 = vlaneseq
          %v1310 = vshrl.u32 %v1309, 7
          %v1311 = vsub.s32 %v1308, %v1310
          %v1312 = vrot.slane %v1305, %v1311
          %v1313 = vcombine.low %v1217, %v1224
          %v1315 = vunpack.c.l.s4 1983009808
          %v1316 = vunpack.c.0.s8 %v1315
          %v1317 = vlaneseq
          %v1318 = vshrl.u32 %v1317, 7
          %v1319 = vsub.s32 %v1316, %v1318
          %v1320 = vrot.slane %v1313, %v1319
          %v1321 = vcombine.low %v1227, %v1228
          %v1323 = vunpack.c.l.s4 1983009808
          %v1324 = vunpack.c.0.s8 %v1323
          %v1325 = vlaneseq
          %v1326 = vshrl.u32 %v1325, 7
          %v1327 = vsub.s32 %v1324, %v1326
          %v1328 = vrot.slane %v1321, %v1327
          %v1329 = vcombine.low %v1304, %v1312
          %v1330 = vcombine.high %v1304, %v1312
          %v1332 = vunpack.c.l.s4 1934713408
          %v1333 = vunpack.c.0.s8 %v1332
          %v1334 = vlaneseq
          %v1335 = vshrl.u32 %v1334, 7
          %v1336 = vsub.s32 %v1333, %v1335
          %v1337 = vrot.slane %v1329, %v1336
          %v1339 = vunpack.c.l.s4 1934713408
          %v1340 = vunpack.c.0.s8 %v1339
          %v1341 = vlaneseq
          %v1342 = vshrl.u32 %v1341, 7
          %v1343 = vsub.s32 %v1340, %v1342
          %v1344 = vrot.slane %v1330, %v1343
          %v1345 = vcombine.low %v1320, %v1328
          %v1346 = vcombine.high %v1320, %v1328
          %v1348 = vunpack.c.l.s4 1934713408
          %v1349 = vunpack.c.0.s8 %v1348
          %v1350 = vlaneseq
          %v1351 = vshrl.u32 %v1350, 7
          %v1352 = vsub.s32 %v1349, %v1351
          %v1353 = vrot.slane %v1345, %v1352
          %v1355 = vunpack.c.l.s4 1934713408
          %v1356 = vunpack.c.0.s8 %v1355
          %v1357 = vlaneseq
          %v1358 = vshrl.u32 %v1357, 7
          %v1359 = vsub.s32 %v1356, %v1358
          %v1360 = vrot.slane %v1346, %v1359
          %v1361 = vcombine.low %v1337, %v1353
          %v1362 = vcombine.high %v1337, %v1353
          %v1363 = vcombine.low %v1344, %v1360
          %v1364 = vcombine.high %v1344, %v1360
          %v1365 = vcombine.low %v1269, %v1276
          %v1367 = vunpack.c.l.s4 1983009808
          %v1368 = vunpack.c.0.s8 %v1367
          %v1369 = vlaneseq
          %v1370 = vshrl.u32 %v1369, 7
          %v1371 = vsub.s32 %v1368, %v1370
          %v1372 = vrot.slane %v1365, %v1371
          %v1373 = vcombine.low %v1293, %v1294
          %v1375 = vunpack.c.l.s4 1983009808
          %v1376 = vunpack.c.0.s8 %v1375
          %v1377 = vlaneseq
          %v1378 = vshrl.u32 %v1377, 7
          %v1379 = vsub.s32 %v1376, %v1378
          %v1380 = vrot.slane %v1373, %v1379
          %v1381 = vcombine.low %v1285, %v1292
          %v1383 = vunpack.c.l.s4 1983009808
          %v1384 = vunpack.c.0.s8 %v1383
          %v1385 = vlaneseq
          %v1386 = vshrl.u32 %v1385, 7
          %v1387 = vsub.s32 %v1384, %v1386
          %v1388 = vrot.slane %v1381, %v1387
          %v1389 = vcombine.low %v1295, %v1296
          %v1391 = vunpack.c.l.s4 1983009808
          %v1392 = vunpack.c.0.s8 %v1391
          %v1393 = vlaneseq
          %v1394 = vshrl.u32 %v1393, 7
          %v1395 = vsub.s32 %v1392, %v1394
          %v1396 = vrot.slane %v1389, %v1395
          %v1397 = vcombine.low %v1372, %v1380
          %v1398 = vcombine.high %v1372, %v1380
          %v1400 = vunpack.c.l.s4 1934713408
          %v1401 = vunpack.c.0.s8 %v1400
          %v1402 = vlaneseq
          %v1403 = vshrl.u32 %v1402, 7
          %v1404 = vsub.s32 %v1401, %v1403
          %v1405 = vrot.slane %v1397, %v1404
          %v1407 = vunpack.c.l.s4 1934713408
          %v1408 = vunpack.c.0.s8 %v1407
          %v1409 = vlaneseq
          %v1410 = vshrl.u32 %v1409, 7
          %v1411 = vsub.s32 %v1408, %v1410
          %v1412 = vrot.slane %v1398, %v1411
          %v1413 = vcombine.low %v1388, %v1396
          %v1414 = vcombine.high %v1388, %v1396
          %v1416 = vunpack.c.l.s4 1934713408
          %v1417 = vunpack.c.0.s8 %v1416
          %v1418 = vlaneseq
          %v1419 = vshrl.u32 %v1418, 7
          %v1420 = vsub.s32 %v1417, %v1419
          %v1421 = vrot.slane %v1413, %v1420
          %v1423 = vunpack.c.l.s4 1934713408
          %v1424 = vunpack.c.0.s8 %v1423
          %v1425 = vlaneseq
          %v1426 = vshrl.u32 %v1425, 7
          %v1427 = vsub.s32 %v1424, %v1426
          %v1428 = vrot.slane %v1414, %v1427
          %v1429 = vcombine.low %v1405, %v1421
          %v1430 = vcombine.high %v1405, %v1421
          %v1431 = vcombine.low %v1412, %v1428
          %v1432 = vcombine.high %v1412, %v1428
          %1435 = vrot.lane.b32.xlu0 %v1071, 120
          %v1436 = vpop.permute.xlu0 %1435
          %1437 = vrot.lane.b32.xlu0 %v1074, 120
          %v1438 = vpop.permute.xlu0 %1437
          %1441 = vrot.lane.b32.xlu0 %v1071, 112
          %v1442 = vpop.permute.xlu0 %1441
          %1443 = vrot.lane.b32.xlu0 %v1074, 112
          %v1444 = vpop.permute.xlu0 %1443
          %1447 = vrot.lane.b32.xlu0 %v1071, 104
          %v1448 = vpop.permute.xlu0 %1447
          %1449 = vrot.lane.b32.xlu0 %v1074, 104
          %v1450 = vpop.permute.xlu0 %1449
          %v1453 = vcombine.low %v1071, %v1442
          %v1454 = vcombine.high %v1071, %v1442
          %v1456 = vunpack.c.l.s4 1983009808
          %v1457 = vunpack.c.0.s8 %v1456
          %v1458 = vlaneseq
          %v1459 = vshrl.u32 %v1458, 7
          %v1460 = vsub.s32 %v1457, %v1459
          %v1461 = vrot.slane %v1453, %v1460
          %v1463 = vunpack.c.l.s4 1983009808
          %v1464 = vunpack.c.0.s8 %v1463
          %v1465 = vlaneseq
          %v1466 = vshrl.u32 %v1465, 7
          %v1467 = vsub.s32 %v1464, %v1466
          %v1468 = vrot.slane %v1454, %v1467
          %v1469 = vcombine.low %v1436, %v1448
          %v1470 = vcombine.high %v1436, %v1448
          %v1472 = vunpack.c.l.s4 1983009808
          %v1473 = vunpack.c.0.s8 %v1472
          %v1474 = vlaneseq
          %v1475 = vshrl.u32 %v1474, 7
          %v1476 = vsub.s32 %v1473, %v1475
          %v1477 = vrot.slane %v1469, %v1476
          %v1479 = vunpack.c.l.s4 1983009808
          %v1480 = vunpack.c.0.s8 %v1479
          %v1481 = vlaneseq
          %v1482 = vshrl.u32 %v1481, 7
          %v1483 = vsub.s32 %v1480, %v1482
          %v1484 = vrot.slane %v1470, %v1483
          %v1485 = vcombine.low %v1461, %v1477
          %v1486 = vcombine.high %v1461, %v1477
          %v1488 = vunpack.c.l.s4 1934713408
          %v1489 = vunpack.c.0.s8 %v1488
          %v1490 = vlaneseq
          %v1491 = vshrl.u32 %v1490, 7
          %v1492 = vsub.s32 %v1489, %v1491
          %v1493 = vrot.slane %v1485, %v1492
          %v1495 = vunpack.c.l.s4 1934713408
          %v1496 = vunpack.c.0.s8 %v1495
          %v1497 = vlaneseq
          %v1498 = vshrl.u32 %v1497, 7
          %v1499 = vsub.s32 %v1496, %v1498
          %v1500 = vrot.slane %v1486, %v1499
          %v1501 = vcombine.low %v1468, %v1484
          %v1502 = vcombine.high %v1468, %v1484
          %v1504 = vunpack.c.l.s4 1934713408
          %v1505 = vunpack.c.0.s8 %v1504
          %v1506 = vlaneseq
          %v1507 = vshrl.u32 %v1506, 7
          %v1508 = vsub.s32 %v1505, %v1507
          %v1509 = vrot.slane %v1501, %v1508
          %v1511 = vunpack.c.l.s4 1934713408
          %v1512 = vunpack.c.0.s8 %v1511
          %v1513 = vlaneseq
          %v1514 = vshrl.u32 %v1513, 7
          %v1515 = vsub.s32 %v1512, %v1514
          %v1516 = vrot.slane %v1502, %v1515
          %v1517 = vcombine.high %v1493, 0.0
          %v1518 = vcombine.high %v1500, 0.0
          %v1519 = vcombine.high %v1509, 0.0
          %v1520 = vcombine.high %v1516, 0.0
          %v1521 = vcombine.low %v1074, %v1444
          %v1522 = vcombine.high %v1074, %v1444
          %v1524 = vunpack.c.l.s4 1983009808
          %v1525 = vunpack.c.0.s8 %v1524
          %v1526 = vlaneseq
          %v1527 = vshrl.u32 %v1526, 7
          %v1528 = vsub.s32 %v1525, %v1527
          %v1529 = vrot.slane %v1521, %v1528
          %v1531 = vunpack.c.l.s4 1983009808
          %v1532 = vunpack.c.0.s8 %v1531
          %v1533 = vlaneseq
          %v1534 = vshrl.u32 %v1533, 7
          %v1535 = vsub.s32 %v1532, %v1534
          %v1536 = vrot.slane %v1522, %v1535
          %v1537 = vcombine.low %v1438, %v1450
          %v1538 = vcombine.high %v1438, %v1450
          %v1540 = vunpack.c.l.s4 1983009808
          %v1541 = vunpack.c.0.s8 %v1540
          %v1542 = vlaneseq
          %v1543 = vshrl.u32 %v1542, 7
          %v1544 = vsub.s32 %v1541, %v1543
          %v1545 = vrot.slane %v1537, %v1544
          %v1547 = vunpack.c.l.s4 1983009808
          %v1548 = vunpack.c.0.s8 %v1547
          %v1549 = vlaneseq
          %v1550 = vshrl.u32 %v1549, 7
          %v1551 = vsub.s32 %v1548, %v1550
          %v1552 = vrot.slane %v1538, %v1551
          %v1553 = vcombine.low %v1529, %v1545
          %v1554 = vcombine.high %v1529, %v1545
          %v1556 = vunpack.c.l.s4 1934713408
          %v1557 = vunpack.c.0.s8 %v1556
          %v1558 = vlaneseq
          %v1559 = vshrl.u32 %v1558, 7
          %v1560 = vsub.s32 %v1557, %v1559
          %v1561 = vrot.slane %v1553, %v1560
          %v1563 = vunpack.c.l.s4 1934713408
          %v1564 = vunpack.c.0.s8 %v1563
          %v1565 = vlaneseq
          %v1566 = vshrl.u32 %v1565, 7
          %v1567 = vsub.s32 %v1564, %v1566
          %v1568 = vrot.slane %v1554, %v1567
          %v1569 = vcombine.low %v1536, %v1552
          %v1570 = vcombine.high %v1536, %v1552
          %v1572 = vunpack.c.l.s4 1934713408
          %v1573 = vunpack.c.0.s8 %v1572
          %v1574 = vlaneseq
          %v1575 = vshrl.u32 %v1574, 7
          %v1576 = vsub.s32 %v1573, %v1575
          %v1577 = vrot.slane %v1569, %v1576
          %v1579 = vunpack.c.l.s4 1934713408
          %v1580 = vunpack.c.0.s8 %v1579
          %v1581 = vlaneseq
          %v1582 = vshrl.u32 %v1581, 7
          %v1583 = vsub.s32 %v1580, %v1582
          %v1584 = vrot.slane %v1570, %v1583
          %v1585 = vcombine.high %v1561, 0.0
          %v1586 = vcombine.high %v1568, 0.0
          %v1587 = vcombine.high %v1577, 0.0
          %v1588 = vcombine.high %v1584, 0.0
          %v1589 = vcombine.low %v1493, %v1500
          %v1591 = vunpack.c.l.s4 1983009808
          %v1592 = vunpack.c.0.s8 %v1591
          %v1593 = vlaneseq
          %v1594 = vshrl.u32 %v1593, 7
          %v1595 = vsub.s32 %v1592, %v1594
          %v1596 = vrot.slane %v1589, %v1595
          %v1597 = vcombine.low %v1517, %v1518
          %v1599 = vunpack.c.l.s4 1983009808
          %v1600 = vunpack.c.0.s8 %v1599
          %v1601 = vlaneseq
          %v1602 = vshrl.u32 %v1601, 7
          %v1603 = vsub.s32 %v1600, %v1602
          %v1604 = vrot.slane %v1597, %v1603
          %v1605 = vcombine.low %v1509, %v1516
          %v1607 = vunpack.c.l.s4 1983009808
          %v1608 = vunpack.c.0.s8 %v1607
          %v1609 = vlaneseq
          %v1610 = vshrl.u32 %v1609, 7
          %v1611 = vsub.s32 %v1608, %v1610
          %v1612 = vrot.slane %v1605, %v1611
          %v1613 = vcombine.low %v1519, %v1520
          %v1615 = vunpack.c.l.s4 1983009808
          %v1616 = vunpack.c.0.s8 %v1615
          %v1617 = vlaneseq
          %v1618 = vshrl.u32 %v1617, 7
          %v1619 = vsub.s32 %v1616, %v1618
          %v1620 = vrot.slane %v1613, %v1619
          %v1621 = vcombine.low %v1596, %v1604
          %v1622 = vcombine.high %v1596, %v1604
          %v1624 = vunpack.c.l.s4 1934713408
          %v1625 = vunpack.c.0.s8 %v1624
          %v1626 = vlaneseq
          %v1627 = vshrl.u32 %v1626, 7
          %v1628 = vsub.s32 %v1625, %v1627
          %v1629 = vrot.slane %v1621, %v1628
          %v1631 = vunpack.c.l.s4 1934713408
          %v1632 = vunpack.c.0.s8 %v1631
          %v1633 = vlaneseq
          %v1634 = vshrl.u32 %v1633, 7
          %v1635 = vsub.s32 %v1632, %v1634
          %v1636 = vrot.slane %v1622, %v1635
          %v1637 = vcombine.low %v1612, %v1620
          %v1638 = vcombine.high %v1612, %v1620
          %v1640 = vunpack.c.l.s4 1934713408
          %v1641 = vunpack.c.0.s8 %v1640
          %v1642 = vlaneseq
          %v1643 = vshrl.u32 %v1642, 7
          %v1644 = vsub.s32 %v1641, %v1643
          %v1645 = vrot.slane %v1637, %v1644
          %v1647 = vunpack.c.l.s4 1934713408
          %v1648 = vunpack.c.0.s8 %v1647
          %v1649 = vlaneseq
          %v1650 = vshrl.u32 %v1649, 7
          %v1651 = vsub.s32 %v1648, %v1650
          %v1652 = vrot.slane %v1638, %v1651
          %v1653 = vcombine.low %v1629, %v1645
          %v1654 = vcombine.high %v1629, %v1645
          %v1655 = vcombine.low %v1636, %v1652
          %v1656 = vcombine.high %v1636, %v1652
          %v1657 = vcombine.low %v1561, %v1568
          %v1659 = vunpack.c.l.s4 1983009808
          %v1660 = vunpack.c.0.s8 %v1659
          %v1661 = vlaneseq
          %v1662 = vshrl.u32 %v1661, 7
          %v1663 = vsub.s32 %v1660, %v1662
          %v1664 = vrot.slane %v1657, %v1663
          %v1665 = vcombine.low %v1585, %v1586
          %v1667 = vunpack.c.l.s4 1983009808
          %v1668 = vunpack.c.0.s8 %v1667
          %v1669 = vlaneseq
          %v1670 = vshrl.u32 %v1669, 7
          %v1671 = vsub.s32 %v1668, %v1670
          %v1672 = vrot.slane %v1665, %v1671
          %v1673 = vcombine.low %v1577, %v1584
          %v1675 = vunpack.c.l.s4 1983009808
          %v1676 = vunpack.c.0.s8 %v1675
          %v1677 = vlaneseq
          %v1678 = vshrl.u32 %v1677, 7
          %v1679 = vsub.s32 %v1676, %v1678
          %v1680 = vrot.slane %v1673, %v1679
          %v1681 = vcombine.low %v1587, %v1588
          %v1683 = vunpack.c.l.s4 1983009808
          %v1684 = vunpack.c.0.s8 %v1683
          %v1685 = vlaneseq
          %v1686 = vshrl.u32 %v1685, 7
          %v1687 = vsub.s32 %v1684, %v1686
          %v1688 = vrot.slane %v1681, %v1687
          %v1689 = vcombine.low %v1664, %v1672
          %v1690 = vcombine.high %v1664, %v1672
          %v1692 = vunpack.c.l.s4 1934713408
          %v1693 = vunpack.c.0.s8 %v1692
          %v1694 = vlaneseq
          %v1695 = vshrl.u32 %v1694, 7
          %v1696 = vsub.s32 %v1693, %v1695
          %v1697 = vrot.slane %v1689, %v1696
          %v1699 = vunpack.c.l.s4 1934713408
          %v1700 = vunpack.c.0.s8 %v1699
          %v1701 = vlaneseq
          %v1702 = vshrl.u32 %v1701, 7
          %v1703 = vsub.s32 %v1700, %v1702
          %v1704 = vrot.slane %v1690, %v1703
          %v1705 = vcombine.low %v1680, %v1688
          %v1706 = vcombine.high %v1680, %v1688
          %v1708 = vunpack.c.l.s4 1934713408
          %v1709 = vunpack.c.0.s8 %v1708
          %v1710 = vlaneseq
          %v1711 = vshrl.u32 %v1710, 7
          %v1712 = vsub.s32 %v1709, %v1711
          %v1713 = vrot.slane %v1705, %v1712
          %v1715 = vunpack.c.l.s4 1934713408
          %v1716 = vunpack.c.0.s8 %v1715
          %v1717 = vlaneseq
          %v1718 = vshrl.u32 %v1717, 7
          %v1719 = vsub.s32 %v1716, %v1718
          %v1720 = vrot.slane %v1706, %v1719
          %v1721 = vcombine.low %v1697, %v1713
          %v1722 = vcombine.high %v1697, %v1713
          %v1723 = vcombine.low %v1704, %v1720
          %v1724 = vcombine.high %v1704, %v1720
          %1727 = vrot.lane.b32.xlu0 %v1135, 120
          %v1728 = vpop.permute.xlu0 %1727
          %1729 = vrot.lane.b32.xlu0 %v1138, 120
          %v1730 = vpop.permute.xlu0 %1729
          %1733 = vrot.lane.b32.xlu0 %v1135, 112
          %v1734 = vpop.permute.xlu0 %1733
          %1735 = vrot.lane.b32.xlu0 %v1138, 112
          %v1736 = vpop.permute.xlu0 %1735
          %1739 = vrot.lane.b32.xlu0 %v1135, 104
          %v1740 = vpop.permute.xlu0 %1739
          %1741 = vrot.lane.b32.xlu0 %v1138, 104
          %v1742 = vpop.permute.xlu0 %1741
          %v1745 = vcombine.low %v1135, %v1734
          %v1746 = vcombine.high %v1135, %v1734
          %v1748 = vunpack.c.l.s4 1983009808
          %v1749 = vunpack.c.0.s8 %v1748
          %v1750 = vlaneseq
          %v1751 = vshrl.u32 %v1750, 7
          %v1752 = vsub.s32 %v1749, %v1751
          %v1753 = vrot.slane %v1745, %v1752
          %v1755 = vunpack.c.l.s4 1983009808
          %v1756 = vunpack.c.0.s8 %v1755
          %v1757 = vlaneseq
          %v1758 = vshrl.u32 %v1757, 7
          %v1759 = vsub.s32 %v1756, %v1758
          %v1760 = vrot.slane %v1746, %v1759
          %v1761 = vcombine.low %v1728, %v1740
          %v1762 = vcombine.high %v1728, %v1740
          %v1764 = vunpack.c.l.s4 1983009808
          %v1765 = vunpack.c.0.s8 %v1764
          %v1766 = vlaneseq
          %v1767 = vshrl.u32 %v1766, 7
          %v1768 = vsub.s32 %v1765, %v1767
          %v1769 = vrot.slane %v1761, %v1768
          %v1771 = vunpack.c.l.s4 1983009808
          %v1772 = vunpack.c.0.s8 %v1771
          %v1773 = vlaneseq
          %v1774 = vshrl.u32 %v1773, 7
          %v1775 = vsub.s32 %v1772, %v1774
          %v1776 = vrot.slane %v1762, %v1775
          %v1777 = vcombine.low %v1753, %v1769
          %v1778 = vcombine.high %v1753, %v1769
          %v1780 = vunpack.c.l.s4 1934713408
          %v1781 = vunpack.c.0.s8 %v1780
          %v1782 = vlaneseq
          %v1783 = vshrl.u32 %v1782, 7
          %v1784 = vsub.s32 %v1781, %v1783
          %v1785 = vrot.slane %v1777, %v1784
          %v1787 = vunpack.c.l.s4 1934713408
          %v1788 = vunpack.c.0.s8 %v1787
          %v1789 = vlaneseq
          %v1790 = vshrl.u32 %v1789, 7
          %v1791 = vsub.s32 %v1788, %v1790
          %v1792 = vrot.slane %v1778, %v1791
          %v1793 = vcombine.low %v1760, %v1776
          %v1794 = vcombine.high %v1760, %v1776
          %v1796 = vunpack.c.l.s4 1934713408
          %v1797 = vunpack.c.0.s8 %v1796
          %v1798 = vlaneseq
          %v1799 = vshrl.u32 %v1798, 7
          %v1800 = vsub.s32 %v1797, %v1799
          %v1801 = vrot.slane %v1793, %v1800
          %v1803 = vunpack.c.l.s4 1934713408
          %v1804 = vunpack.c.0.s8 %v1803
          %v1805 = vlaneseq
          %v1806 = vshrl.u32 %v1805, 7
          %v1807 = vsub.s32 %v1804, %v1806
          %v1808 = vrot.slane %v1794, %v1807
          %v1809 = vcombine.high %v1785, 0.0
          %v1810 = vcombine.high %v1792, 0.0
          %v1811 = vcombine.high %v1801, 0.0
          %v1812 = vcombine.high %v1808, 0.0
          %v1813 = vcombine.low %v1138, %v1736
          %v1814 = vcombine.high %v1138, %v1736
          %v1816 = vunpack.c.l.s4 1983009808
          %v1817 = vunpack.c.0.s8 %v1816
          %v1818 = vlaneseq
          %v1819 = vshrl.u32 %v1818, 7
          %v1820 = vsub.s32 %v1817, %v1819
          %v1821 = vrot.slane %v1813, %v1820
          %v1823 = vunpack.c.l.s4 1983009808
          %v1824 = vunpack.c.0.s8 %v1823
          %v1825 = vlaneseq
          %v1826 = vshrl.u32 %v1825, 7
          %v1827 = vsub.s32 %v1824, %v1826
          %v1828 = vrot.slane %v1814, %v1827
          %v1829 = vcombine.low %v1730, %v1742
          %v1830 = vcombine.high %v1730, %v1742
          %v1832 = vunpack.c.l.s4 1983009808
          %v1833 = vunpack.c.0.s8 %v1832
          %v1834 = vlaneseq
          %v1835 = vshrl.u32 %v1834, 7
          %v1836 = vsub.s32 %v1833, %v1835
          %v1837 = vrot.slane %v1829, %v1836
          %v1839 = vunpack.c.l.s4 1983009808
          %v1840 = vunpack.c.0.s8 %v1839
          %v1841 = vlaneseq
          %v1842 = vshrl.u32 %v1841, 7
          %v1843 = vsub.s32 %v1840, %v1842
          %v1844 = vrot.slane %v1830, %v1843
          %v1845 = vcombine.low %v1821, %v1837
          %v1846 = vcombine.high %v1821, %v1837
          %v1848 = vunpack.c.l.s4 1934713408
          %v1849 = vunpack.c.0.s8 %v1848
          %v1850 = vlaneseq
          %v1851 = vshrl.u32 %v1850, 7
          %v1852 = vsub.s32 %v1849, %v1851
          %v1853 = vrot.slane %v1845, %v1852
          %v1855 = vunpack.c.l.s4 1934713408
          %v1856 = vunpack.c.0.s8 %v1855
          %v1857 = vlaneseq
          %v1858 = vshrl.u32 %v1857, 7
          %v1859 = vsub.s32 %v1856, %v1858
          %v1860 = vrot.slane %v1846, %v1859
          %v1861 = vcombine.low %v1828, %v1844
          %v1862 = vcombine.high %v1828, %v1844
          %v1864 = vunpack.c.l.s4 1934713408
          %v1865 = vunpack.c.0.s8 %v1864
          %v1866 = vlaneseq
          %v1867 = vshrl.u32 %v1866, 7
          %v1868 = vsub.s32 %v1865, %v1867
          %v1869 = vrot.slane %v1861, %v1868
          %v1871 = vunpack.c.l.s4 1934713408
          %v1872 = vunpack.c.0.s8 %v1871
          %v1873 = vlaneseq
          %v1874 = vshrl.u32 %v1873, 7
          %v1875 = vsub.s32 %v1872, %v1874
          %v1876 = vrot.slane %v1862, %v1875
          %v1877 = vcombine.high %v1853, 0.0
          %v1878 = vcombine.high %v1860, 0.0
          %v1879 = vcombine.high %v1869, 0.0
          %v1880 = vcombine.high %v1876, 0.0
          %v1881 = vcombine.low %v1785, %v1792
          %v1883 = vunpack.c.l.s4 1983009808
          %v1884 = vunpack.c.0.s8 %v1883
          %v1885 = vlaneseq
          %v1886 = vshrl.u32 %v1885, 7
          %v1887 = vsub.s32 %v1884, %v1886
          %v1888 = vrot.slane %v1881, %v1887
          %v1889 = vcombine.low %v1809, %v1810
          %v1891 = vunpack.c.l.s4 1983009808
          %v1892 = vunpack.c.0.s8 %v1891
          %v1893 = vlaneseq
          %v1894 = vshrl.u32 %v1893, 7
          %v1895 = vsub.s32 %v1892, %v1894
          %v1896 = vrot.slane %v1889, %v1895
          %v1897 = vcombine.low %v1801, %v1808
          %v1899 = vunpack.c.l.s4 1983009808
          %v1900 = vunpack.c.0.s8 %v1899
          %v1901 = vlaneseq
          %v1902 = vshrl.u32 %v1901, 7
          %v1903 = vsub.s32 %v1900, %v1902
          %v1904 = vrot.slane %v1897, %v1903
          %v1905 = vcombine.low %v1811, %v1812
          %v1907 = vunpack.c.l.s4 1983009808
          %v1908 = vunpack.c.0.s8 %v1907
          %v1909 = vlaneseq
          %v1910 = vshrl.u32 %v1909, 7
          %v1911 = vsub.s32 %v1908, %v1910
          %v1912 = vrot.slane %v1905, %v1911
          %v1913 = vcombine.low %v1888, %v1896
          %v1914 = vcombine.high %v1888, %v1896
          %v1916 = vunpack.c.l.s4 1934713408
          %v1917 = vunpack.c.0.s8 %v1916
          %v1918 = vlaneseq
          %v1919 = vshrl.u32 %v1918, 7
          %v1920 = vsub.s32 %v1917, %v1919
          %v1921 = vrot.slane %v1913, %v1920
          %v1923 = vunpack.c.l.s4 1934713408
          %v1924 = vunpack.c.0.s8 %v1923
          %v1925 = vlaneseq
          %v1926 = vshrl.u32 %v1925, 7
          %v1927 = vsub.s32 %v1924, %v1926
          %v1928 = vrot.slane %v1914, %v1927
          %v1929 = vcombine.low %v1904, %v1912
          %v1930 = vcombine.high %v1904, %v1912
          %v1932 = vunpack.c.l.s4 1934713408
          %v1933 = vunpack.c.0.s8 %v1932
          %v1934 = vlaneseq
          %v1935 = vshrl.u32 %v1934, 7
          %v1936 = vsub.s32 %v1933, %v1935
          %v1937 = vrot.slane %v1929, %v1936
          %v1939 = vunpack.c.l.s4 1934713408
          %v1940 = vunpack.c.0.s8 %v1939
          %v1941 = vlaneseq
          %v1942 = vshrl.u32 %v1941, 7
          %v1943 = vsub.s32 %v1940, %v1942
          %v1944 = vrot.slane %v1930, %v1943
          %v1945 = vcombine.low %v1921, %v1937
          %v1946 = vcombine.high %v1921, %v1937
          %v1947 = vcombine.low %v1928, %v1944
          %v1948 = vcombine.high %v1928, %v1944
          %v1949 = vcombine.low %v1853, %v1860
          %v1951 = vunpack.c.l.s4 1983009808
          %v1952 = vunpack.c.0.s8 %v1951
          %v1953 = vlaneseq
          %v1954 = vshrl.u32 %v1953, 7
          %v1955 = vsub.s32 %v1952, %v1954
          %v1956 = vrot.slane %v1949, %v1955
          %v1957 = vcombine.low %v1877, %v1878
          %v1959 = vunpack.c.l.s4 1983009808
          %v1960 = vunpack.c.0.s8 %v1959
          %v1961 = vlaneseq
          %v1962 = vshrl.u32 %v1961, 7
          %v1963 = vsub.s32 %v1960, %v1962
          %v1964 = vrot.slane %v1957, %v1963
          %v1965 = vcombine.low %v1869, %v1876
          %v1967 = vunpack.c.l.s4 1983009808
          %v1968 = vunpack.c.0.s8 %v1967
          %v1969 = vlaneseq
          %v1970 = vshrl.u32 %v1969, 7
          %v1971 = vsub.s32 %v1968, %v1970
          %v1972 = vrot.slane %v1965, %v1971
          %v1973 = vcombine.low %v1879, %v1880
          %v1975 = vunpack.c.l.s4 1983009808
          %v1976 = vunpack.c.0.s8 %v1975
          %v1977 = vlaneseq
          %v1978 = vshrl.u32 %v1977, 7
          %v1979 = vsub.s32 %v1976, %v1978
          %v1980 = vrot.slane %v1973, %v1979
          %v1981 = vcombine.low %v1956, %v1964
          %v1982 = vcombine.high %v1956, %v1964
          %v1984 = vunpack.c.l.s4 1934713408
          %v1985 = vunpack.c.0.s8 %v1984
          %v1986 = vlaneseq
          %v1987 = vshrl.u32 %v1986, 7
          %v1988 = vsub.s32 %v1985, %v1987
          %v1989 = vrot.slane %v1981, %v1988
          %v1991 = vunpack.c.l.s4 1934713408
          %v1992 = vunpack.c.0.s8 %v1991
          %v1993 = vlaneseq
          %v1994 = vshrl.u32 %v1993, 7
          %v1995 = vsub.s32 %v1992, %v1994
          %v1996 = vrot.slane %v1982, %v1995
          %v1997 = vcombine.low %v1972, %v1980
          %v1998 = vcombine.high %v1972, %v1980
          %v2000 = vunpack.c.l.s4 1934713408
          %v2001 = vunpack.c.0.s8 %v2000
          %v2002 = vlaneseq
          %v2003 = vshrl.u32 %v2002, 7
          %v2004 = vsub.s32 %v2001, %v2003
          %v2005 = vrot.slane %v1997, %v2004
          %v2007 = vunpack.c.l.s4 1934713408
          %v2008 = vunpack.c.0.s8 %v2007
          %v2009 = vlaneseq
          %v2010 = vshrl.u32 %v2009, 7
          %v2011 = vsub.s32 %v2008, %v2010
          %v2012 = vrot.slane %v1998, %v2011
          %v2013 = vcombine.low %v1989, %v2005
          %v2014 = vcombine.high %v1989, %v2005
          %v2015 = vcombine.low %v1996, %v2012
          %v2016 = vcombine.high %v1996, %v2012
          %vm2017 = vcmask 64512
          %v2019 = vsel %vm2017, %v1361, 0
          %v2022 = vsel %vm2017, %v1653, 0
          %2024 = vmatprep.subr.mxu0 0.0
          %2025 = vmatpush1.xpose.msra.mxu0 %v2022
          %2026 = vmatprep.subr.mxu0 0.0
          %2027 = vmatpush1.xpose.msra.mxu0 0.0
          %2028 = vmatprep.subr.mxu0 0.0
          %2029 = vmatpush1.xpose.msra.mxu0 0.0
          %2030 = vmatprep.subr.mxu0 0.0
          %2031 = vmatpush1.xpose.msra.mxu0 0.0
          %2032 = vmatprep.subr.mxu0 0.0
          %2033 = vmatpush1.xpose.msra.mxu0 0.0
          %2034 = vmatprep.subr.mxu0 0.0
          %2035 = vmatpush1.xpose.msra.mxu0 0.0
          %2036 = vmatprep.subr.mxu0 0.0
          %2037 = vmatpush1.xpose.msra.mxu0 0.0
          %2038 = vmatprep.subr.mxu0 0.0
          %2039 = vmatpush1.xpose.msra.mxu0 0.0
          %2040 = vmatprep.subr.mxu0 0.0
          %2041 = vmatpush1.xpose.msra.mxu0 0.0
          %2042 = vmatprep.subr.mxu0 0.0
          %2043 = vmatpush1.xpose.msra.mxu0 0.0
          %2044 = vmatprep.subr.mxu0 0.0
          %2045 = vmatpush1.xpose.msra.mxu0 0.0
          %2046 = vmatprep.subr.mxu0 0.0
          %2047 = vmatpush1.xpose.msra.mxu0 0.0
          %2048 = vmatprep.subr.mxu0 0.0
          %2049 = vmatpush1.xpose.msra.mxu0 0.0
          %2050 = vmatprep.subr.mxu0 0.0
          %2051 = vmatpush1.xpose.msra.mxu0 0.0
          %2052 = vmatprep.subr.mxu0 0.0
          %2053 = vmatpush1.xpose.msra.mxu0 0.0
          %2054 = vmatprep.subr.mxu0 0.0
          %2055 = vmatpush1.xpose.msra.mxu0 0.0
          %2056 = vmatprep.subr.mxu0 0.0
          %2057 = vmatpush1.xpose.msra.mxu0 0.0
          %2058 = vmatprep.subr.mxu0 0.0
          %2059 = vmatpush1.xpose.msra.mxu0 0.0
          %2060 = vmatprep.subr.mxu0 0.0
          %2061 = vmatpush1.xpose.msra.mxu0 0.0
          %2062 = vmatprep.subr.mxu0 0.0
          %2063 = vmatpush1.xpose.msra.mxu0 0.0
          %2064 = vmatprep.subr.mxu0 0.0
          %2065 = vmatpush1.xpose.msra.mxu0 0.0
          %2066 = vmatprep.subr.mxu0 0.0
          %2067 = vmatpush1.xpose.msra.mxu0 0.0
          %2068 = vmatprep.subr.mxu0 0.0
          %2069 = vmatpush1.xpose.msra.mxu0 0.0
          %2070 = vmatprep.subr.mxu0 0.0
          %2071 = vmatpush1.xpose.msra.mxu0 0.0
          %2072 = vmatprep.subr.mxu0 0.0
          %2073 = vmatpush1.xpose.msra.mxu0 0.0
          %2074 = vmatprep.subr.mxu0 0.0
          %2075 = vmatpush1.xpose.msra.mxu0 0.0
          %2076 = vmatprep.subr.mxu0 0.0
          %2077 = vmatpush1.xpose.msra.mxu0 0.0
          %2078 = vmatprep.subr.mxu0 0.0
          %2079 = vmatpush1.xpose.msra.mxu0 0.0
          %2080 = vmatprep.subr.mxu0 0.0
          %2081 = vmatpush1.xpose.msra.mxu0 0.0
          %2082 = vmatprep.subr.mxu0 0.0
          %2083 = vmatpush1.xpose.msra.mxu0 0.0
          %2084 = vmatprep.subr.mxu0 0.0
          %2085 = vmatpush1.xpose.msra.mxu0 0.0
          %2086 = vmatprep.subr.mxu0 0.0
          %2087 = vmatpush1.xpose.msra.mxu0 0.0
          %2088 = vmatprep.mubr.f32.mxu0 0.0
          %2089 = vmatmul.mubr.f32.gmra.mrb[0].mxu0 %v2019
          %v2090 = vpop.f32.mrb[0].mxu0
          %v2091 = vadd.f32 0.0, %v2090
          %v2092 = vpop.f32.mrb[0].mxu0
          %2093 = vdwg.mxu0
          %v2095 = vsel %vm2017, %v1429, 0
          %v2098 = vsel %vm2017, %v1721, 0
          %2100 = vmatprep.subr.mxu0 0.0
          %2101 = vmatpush1.xpose.msra.mxu0 %v2098
          %2102 = vmatprep.subr.mxu0 0.0
          %2103 = vmatpush1.xpose.msra.mxu0 0.0
          %2104 = vmatprep.subr.mxu0 0.0
          %2105 = vmatpush1.xpose.msra.mxu0 0.0
          %2106 = vmatprep.subr.mxu0 0.0
          %2107 = vmatpush1.xpose.msra.mxu0 0.0
          %2108 = vmatprep.subr.mxu0 0.0
          %2109 = vmatpush1.xpose.msra.mxu0 0.0
          %2110 = vmatprep.subr.mxu0 0.0
          %2111 = vmatpush1.xpose.msra.mxu0 0.0
          %2112 = vmatprep.subr.mxu0 0.0
          %2113 = vmatpush1.xpose.msra.mxu0 0.0
          %2114 = vmatprep.subr.mxu0 0.0
          %2115 = vmatpush1.xpose.msra.mxu0 0.0
          %2116 = vmatprep.subr.mxu0 0.0
          %2117 = vmatpush1.xpose.msra.mxu0 0.0
          %2118 = vmatprep.subr.mxu0 0.0
          %2119 = vmatpush1.xpose.msra.mxu0 0.0
          %2120 = vmatprep.subr.mxu0 0.0
          %2121 = vmatpush1.xpose.msra.mxu0 0.0
          %2122 = vmatprep.subr.mxu0 0.0
          %2123 = vmatpush1.xpose.msra.mxu0 0.0
          %2124 = vmatprep.subr.mxu0 0.0
          %2125 = vmatpush1.xpose.msra.mxu0 0.0
          %2126 = vmatprep.subr.mxu0 0.0
          %2127 = vmatpush1.xpose.msra.mxu0 0.0
          %2128 = vmatprep.subr.mxu0 0.0
          %2129 = vmatpush1.xpose.msra.mxu0 0.0
          %2130 = vmatprep.subr.mxu0 0.0
          %2131 = vmatpush1.xpose.msra.mxu0 0.0
          %2132 = vmatprep.subr.mxu0 0.0
          %2133 = vmatpush1.xpose.msra.mxu0 0.0
          %2134 = vmatprep.subr.mxu0 0.0
          %2135 = vmatpush1.xpose.msra.mxu0 0.0
          %2136 = vmatprep.subr.mxu0 0.0
          %2137 = vmatpush1.xpose.msra.mxu0 0.0
          %2138 = vmatprep.subr.mxu0 0.0
          %2139 = vmatpush1.xpose.msra.mxu0 0.0
          %2140 = vmatprep.subr.mxu0 0.0
          %2141 = vmatpush1.xpose.msra.mxu0 0.0
          %2142 = vmatprep.subr.mxu0 0.0
          %2143 = vmatpush1.xpose.msra.mxu0 0.0
          %2144 = vmatprep.subr.mxu0 0.0
          %2145 = vmatpush1.xpose.msra.mxu0 0.0
          %2146 = vmatprep.subr.mxu0 0.0
          %2147 = vmatpush1.xpose.msra.mxu0 0.0
          %2148 = vmatprep.subr.mxu0 0.0
          %2149 = vmatpush1.xpose.msra.mxu0 0.0
          %2150 = vmatprep.subr.mxu0 0.0
          %2151 = vmatpush1.xpose.msra.mxu0 0.0
          %2152 = vmatprep.subr.mxu0 0.0
          %2153 = vmatpush1.xpose.msra.mxu0 0.0
          %2154 = vmatprep.subr.mxu0 0.0
          %2155 = vmatpush1.xpose.msra.mxu0 0.0
          %2156 = vmatprep.subr.mxu0 0.0
          %2157 = vmatpush1.xpose.msra.mxu0 0.0
          %2158 = vmatprep.subr.mxu0 0.0
          %2159 = vmatpush1.xpose.msra.mxu0 0.0
          %2160 = vmatprep.subr.mxu0 0.0
          %2161 = vmatpush1.xpose.msra.mxu0 0.0
          %2162 = vmatprep.subr.mxu0 0.0
          %2163 = vmatpush1.xpose.msra.mxu0 0.0
          %2164 = vmatprep.mubr.f32.mxu0 0.0
          %2165 = vmatmul.mubr.f32.gmra.mrb[0].mxu0 %v2095
          %v2166 = vpop.f32.mrb[0].mxu0
          %v2167 = vadd.f32 0.0, %v2166
          %v2168 = vpop.f32.mrb[0].mxu0
          %2169 = vdwg.mxu0
          %v2171 = vsel %vm2017, %v1362, 0
          %v2174 = vsel %vm2017, %v1654, 0
          %2176 = vmatprep.subr.mxu0 0.0
          %2177 = vmatpush1.xpose.msra.mxu0 %v2174
          %2178 = vmatprep.subr.mxu0 0.0
          %2179 = vmatpush1.xpose.msra.mxu0 0.0
          %2180 = vmatprep.subr.mxu0 0.0
          %2181 = vmatpush1.xpose.msra.mxu0 0.0
          %2182 = vmatprep.subr.mxu0 0.0
          %2183 = vmatpush1.xpose.msra.mxu0 0.0
          %2184 = vmatprep.subr.mxu0 0.0
          %2185 = vmatpush1.xpose.msra.mxu0 0.0
          %2186 = vmatprep.subr.mxu0 0.0
          %2187 = vmatpush1.xpose.msra.mxu0 0.0
          %2188 = vmatprep.subr.mxu0 0.0
          %2189 = vmatpush1.xpose.msra.mxu0 0.0
          %2190 = vmatprep.subr.mxu0 0.0
          %2191 = vmatpush1.xpose.msra.mxu0 0.0
          %2192 = vmatprep.subr.mxu0 0.0
          %2193 = vmatpush1.xpose.msra.mxu0 0.0
          %2194 = vmatprep.subr.mxu0 0.0
          %2195 = vmatpush1.xpose.msra.mxu0 0.0
          %2196 = vmatprep.subr.mxu0 0.0
          %2197 = vmatpush1.xpose.msra.mxu0 0.0
          %2198 = vmatprep.subr.mxu0 0.0
          %2199 = vmatpush1.xpose.msra.mxu0 0.0
          %2200 = vmatprep.subr.mxu0 0.0
          %2201 = vmatpush1.xpose.msra.mxu0 0.0
          %2202 = vmatprep.subr.mxu0 0.0
          %2203 = vmatpush1.xpose.msra.mxu0 0.0
          %2204 = vmatprep.subr.mxu0 0.0
          %2205 = vmatpush1.xpose.msra.mxu0 0.0
          %2206 = vmatprep.subr.mxu0 0.0
          %2207 = vmatpush1.xpose.msra.mxu0 0.0
          %2208 = vmatprep.subr.mxu0 0.0
          %2209 = vmatpush1.xpose.msra.mxu0 0.0
          %2210 = vmatprep.subr.mxu0 0.0
          %2211 = vmatpush1.xpose.msra.mxu0 0.0
          %2212 = vmatprep.subr.mxu0 0.0
          %2213 = vmatpush1.xpose.msra.mxu0 0.0
          %2214 = vmatprep.subr.mxu0 0.0
          %2215 = vmatpush1.xpose.msra.mxu0 0.0
          %2216 = vmatprep.subr.mxu0 0.0
          %2217 = vmatpush1.xpose.msra.mxu0 0.0
          %2218 = vmatprep.subr.mxu0 0.0
          %2219 = vmatpush1.xpose.msra.mxu0 0.0
          %2220 = vmatprep.subr.mxu0 0.0
          %2221 = vmatpush1.xpose.msra.mxu0 0.0
          %2222 = vmatprep.subr.mxu0 0.0
          %2223 = vmatpush1.xpose.msra.mxu0 0.0
          %2224 = vmatprep.subr.mxu0 0.0
          %2225 = vmatpush1.xpose.msra.mxu0 0.0
          %2226 = vmatprep.subr.mxu0 0.0
          %2227 = vmatpush1.xpose.msra.mxu0 0.0
          %2228 = vmatprep.subr.mxu0 0.0
          %2229 = vmatpush1.xpose.msra.mxu0 0.0
          %2230 = vmatprep.subr.mxu0 0.0
          %2231 = vmatpush1.xpose.msra.mxu0 0.0
          %2232 = vmatprep.subr.mxu0 0.0
          %2233 = vmatpush1.xpose.msra.mxu0 0.0
          %2234 = vmatprep.subr.mxu0 0.0
          %2235 = vmatpush1.xpose.msra.mxu0 0.0
          %2236 = vmatprep.subr.mxu0 0.0
          %2237 = vmatpush1.xpose.msra.mxu0 0.0
          %2238 = vmatprep.subr.mxu0 0.0
          %2239 = vmatpush1.xpose.msra.mxu0 0.0
          %2240 = vmatprep.mubr.f32.mxu0 0.0
          %2241 = vmatmul.mubr.f32.gmra.mrb[0].mxu0 %v2171
          %v2242 = vpop.f32.mrb[0].mxu0
          %v2243 = vadd.f32 0.0, %v2242
          %v2244 = vpop.f32.mrb[0].mxu0
          %2245 = vdwg.mxu0
          %v2247 = vsel %vm2017, %v1430, 0
          %v2250 = vsel %vm2017, %v1722, 0
          %2252 = vmatprep.subr.mxu0 0.0
          %2253 = vmatpush1.xpose.msra.mxu0 %v2250
          %2254 = vmatprep.subr.mxu0 0.0
          %2255 = vmatpush1.xpose.msra.mxu0 0.0
          %2256 = vmatprep.subr.mxu0 0.0
          %2257 = vmatpush1.xpose.msra.mxu0 0.0
          %2258 = vmatprep.subr.mxu0 0.0
          %2259 = vmatpush1.xpose.msra.mxu0 0.0
          %2260 = vmatprep.subr.mxu0 0.0
          %2261 = vmatpush1.xpose.msra.mxu0 0.0
          %2262 = vmatprep.subr.mxu0 0.0
          %2263 = vmatpush1.xpose.msra.mxu0 0.0
          %2264 = vmatprep.subr.mxu0 0.0
          %2265 = vmatpush1.xpose.msra.mxu0 0.0
          %2266 = vmatprep.subr.mxu0 0.0
          %2267 = vmatpush1.xpose.msra.mxu0 0.0
          %2268 = vmatprep.subr.mxu0 0.0
          %2269 = vmatpush1.xpose.msra.mxu0 0.0
          %2270 = vmatprep.subr.mxu0 0.0
          %2271 = vmatpush1.xpose.msra.mxu0 0.0
          %2272 = vmatprep.subr.mxu0 0.0
          %2273 = vmatpush1.xpose.msra.mxu0 0.0
          %2274 = vmatprep.subr.mxu0 0.0
          %2275 = vmatpush1.xpose.msra.mxu0 0.0
          %2276 = vmatprep.subr.mxu0 0.0
          %2277 = vmatpush1.xpose.msra.mxu0 0.0
          %2278 = vmatprep.subr.mxu0 0.0
          %2279 = vmatpush1.xpose.msra.mxu0 0.0
          %2280 = vmatprep.subr.mxu0 0.0
          %2281 = vmatpush1.xpose.msra.mxu0 0.0
          %2282 = vmatprep.subr.mxu0 0.0
          %2283 = vmatpush1.xpose.msra.mxu0 0.0
          %2284 = vmatprep.subr.mxu0 0.0
          %2285 = vmatpush1.xpose.msra.mxu0 0.0
          %2286 = vmatprep.subr.mxu0 0.0
          %2287 = vmatpush1.xpose.msra.mxu0 0.0
          %2288 = vmatprep.subr.mxu0 0.0
          %2289 = vmatpush1.xpose.msra.mxu0 0.0
          %2290 = vmatprep.subr.mxu0 0.0
          %2291 = vmatpush1.xpose.msra.mxu0 0.0
          %2292 = vmatprep.subr.mxu0 0.0
          %2293 = vmatpush1.xpose.msra.mxu0 0.0
          %2294 = vmatprep.subr.mxu0 0.0
          %2295 = vmatpush1.xpose.msra.mxu0 0.0
          %2296 = vmatprep.subr.mxu0 0.0
          %2297 = vmatpush1.xpose.msra.mxu0 0.0
          %2298 = vmatprep.subr.mxu0 0.0
          %2299 = vmatpush1.xpose.msra.mxu0 0.0
          %2300 = vmatprep.subr.mxu0 0.0
          %2301 = vmatpush1.xpose.msra.mxu0 0.0
          %2302 = vmatprep.subr.mxu0 0.0
          %2303 = vmatpush1.xpose.msra.mxu0 0.0
          %2304 = vmatprep.subr.mxu0 0.0
          %2305 = vmatpush1.xpose.msra.mxu0 0.0
          %2306 = vmatprep.subr.mxu0 0.0
          %2307 = vmatpush1.xpose.msra.mxu0 0.0
          %2308 = vmatprep.subr.mxu0 0.0
          %2309 = vmatpush1.xpose.msra.mxu0 0.0
          %2310 = vmatprep.subr.mxu0 0.0
          %2311 = vmatpush1.xpose.msra.mxu0 0.0
          %2312 = vmatprep.subr.mxu0 0.0
          %2313 = vmatpush1.xpose.msra.mxu0 0.0
          %2314 = vmatprep.subr.mxu0 0.0
          %2315 = vmatpush1.xpose.msra.mxu0 0.0
          %2316 = vmatprep.mubr.f32.mxu0 0.0
          %2317 = vmatmul.mubr.f32.gmra.mrb[0].mxu0 %v2247
          %v2318 = vpop.f32.mrb[0].mxu0
          %v2319 = vadd.f32 0.0, %v2318
          %v2320 = vpop.f32.mrb[0].mxu0
          %2321 = vdwg.mxu0
          %v2323 = vsel %vm2017, %v1363, 0
          %v2326 = vsel %vm2017, %v1655, 0
          %2328 = vmatprep.subr.mxu0 0.0
          %2329 = vmatpush1.xpose.msra.mxu0 %v2326
          %2330 = vmatprep.subr.mxu0 0.0
          %2331 = vmatpush1.xpose.msra.mxu0 0.0
          %2332 = vmatprep.subr.mxu0 0.0
          %2333 = vmatpush1.xpose.msra.mxu0 0.0
          %2334 = vmatprep.subr.mxu0 0.0
          %2335 = vmatpush1.xpose.msra.mxu0 0.0
          %2336 = vmatprep.subr.mxu0 0.0
          %2337 = vmatpush1.xpose.msra.mxu0 0.0
          %2338 = vmatprep.subr.mxu0 0.0
          %2339 = vmatpush1.xpose.msra.mxu0 0.0
          %2340 = vmatprep.subr.mxu0 0.0
          %2341 = vmatpush1.xpose.msra.mxu0 0.0
          %2342 = vmatprep.subr.mxu0 0.0
          %2343 = vmatpush1.xpose.msra.mxu0 0.0
          %2344 = vmatprep.subr.mxu0 0.0
          %2345 = vmatpush1.xpose.msra.mxu0 0.0
          %2346 = vmatprep.subr.mxu0 0.0
          %2347 = vmatpush1.xpose.msra.mxu0 0.0
          %2348 = vmatprep.subr.mxu0 0.0
          %2349 = vmatpush1.xpose.msra.mxu0 0.0
          %2350 = vmatprep.subr.mxu0 0.0
          %2351 = vmatpush1.xpose.msra.mxu0 0.0
          %2352 = vmatprep.subr.mxu0 0.0
          %2353 = vmatpush1.xpose.msra.mxu0 0.0
          %2354 = vmatprep.subr.mxu0 0.0
          %2355 = vmatpush1.xpose.msra.mxu0 0.0
          %2356 = vmatprep.subr.mxu0 0.0
          %2357 = vmatpush1.xpose.msra.mxu0 0.0
          %2358 = vmatprep.subr.mxu0 0.0
          %2359 = vmatpush1.xpose.msra.mxu0 0.0
          %2360 = vmatprep.subr.mxu0 0.0
          %2361 = vmatpush1.xpose.msra.mxu0 0.0
          %2362 = vmatprep.subr.mxu0 0.0
          %2363 = vmatpush1.xpose.msra.mxu0 0.0
          %2364 = vmatprep.subr.mxu0 0.0
          %2365 = vmatpush1.xpose.msra.mxu0 0.0
          %2366 = vmatprep.subr.mxu0 0.0
          %2367 = vmatpush1.xpose.msra.mxu0 0.0
          %2368 = vmatprep.subr.mxu0 0.0
          %2369 = vmatpush1.xpose.msra.mxu0 0.0
          %2370 = vmatprep.subr.mxu0 0.0
          %2371 = vmatpush1.xpose.msra.mxu0 0.0
          %2372 = vmatprep.subr.mxu0 0.0
          %2373 = vmatpush1.xpose.msra.mxu0 0.0
          %2374 = vmatprep.subr.mxu0 0.0
          %2375 = vmatpush1.xpose.msra.mxu0 0.0
          %2376 = vmatprep.subr.mxu0 0.0
          %2377 = vmatpush1.xpose.msra.mxu0 0.0
          %2378 = vmatprep.subr.mxu0 0.0
          %2379 = vmatpush1.xpose.msra.mxu0 0.0
          %2380 = vmatprep.subr.mxu0 0.0
          %2381 = vmatpush1.xpose.msra.mxu0 0.0
          %2382 = vmatprep.subr.mxu0 0.0
          %2383 = vmatpush1.xpose.msra.mxu0 0.0
          %2384 = vmatprep.subr.mxu0 0.0
          %2385 = vmatpush1.xpose.msra.mxu0 0.0
          %2386 = vmatprep.subr.mxu0 0.0
          %2387 = vmatpush1.xpose.msra.mxu0 0.0
          %2388 = vmatprep.subr.mxu0 0.0
          %2389 = vmatpush1.xpose.msra.mxu0 0.0
          %2390 = vmatprep.subr.mxu0 0.0
          %2391 = vmatpush1.xpose.msra.mxu0 0.0
          %2392 = vmatprep.mubr.f32.mxu0 0.0
          %2393 = vmatmul.mubr.f32.gmra.mrb[0].mxu0 %v2323
          %v2394 = vpop.f32.mrb[0].mxu0
          %v2395 = vadd.f32 0.0, %v2394
          %v2396 = vpop.f32.mrb[0].mxu0
          %2397 = vdwg.mxu0
          %v2399 = vsel %vm2017, %v1431, 0
          %v2402 = vsel %vm2017, %v1723, 0
          %2404 = vmatprep.subr.mxu0 0.0
          %2405 = vmatpush1.xpose.msra.mxu0 %v2402
          %2406 = vmatprep.subr.mxu0 0.0
          %2407 = vmatpush1.xpose.msra.mxu0 0.0
          %2408 = vmatprep.subr.mxu0 0.0
          %2409 = vmatpush1.xpose.msra.mxu0 0.0
          %2410 = vmatprep.subr.mxu0 0.0
          %2411 = vmatpush1.xpose.msra.mxu0 0.0
          %2412 = vmatprep.subr.mxu0 0.0
          %2413 = vmatpush1.xpose.msra.mxu0 0.0
          %2414 = vmatprep.subr.mxu0 0.0
          %2415 = vmatpush1.xpose.msra.mxu0 0.0
          %2416 = vmatprep.subr.mxu0 0.0
          %2417 = vmatpush1.xpose.msra.mxu0 0.0
          %2418 = vmatprep.subr.mxu0 0.0
          %2419 = vmatpush1.xpose.msra.mxu0 0.0
          %2420 = vmatprep.subr.mxu0 0.0
          %2421 = vmatpush1.xpose.msra.mxu0 0.0
          %2422 = vmatprep.subr.mxu0 0.0
          %2423 = vmatpush1.xpose.msra.mxu0 0.0
          %2424 = vmatprep.subr.mxu0 0.0
          %2425 = vmatpush1.xpose.msra.mxu0 0.0
          %2426 = vmatprep.subr.mxu0 0.0
          %2427 = vmatpush1.xpose.msra.mxu0 0.0
          %2428 = vmatprep.subr.mxu0 0.0
          %2429 = vmatpush1.xpose.msra.mxu0 0.0
          %2430 = vmatprep.subr.mxu0 0.0
          %2431 = vmatpush1.xpose.msra.mxu0 0.0
          %2432 = vmatprep.subr.mxu0 0.0
          %2433 = vmatpush1.xpose.msra.mxu0 0.0
          %2434 = vmatprep.subr.mxu0 0.0
          %2435 = vmatpush1.xpose.msra.mxu0 0.0
          %2436 = vmatprep.subr.mxu0 0.0
          %2437 = vmatpush1.xpose.msra.mxu0 0.0
          %2438 = vmatprep.subr.mxu0 0.0
          %2439 = vmatpush1.xpose.msra.mxu0 0.0
          %2440 = vmatprep.subr.mxu0 0.0
          %2441 = vmatpush1.xpose.msra.mxu0 0.0
          %2442 = vmatprep.subr.mxu0 0.0
          %2443 = vmatpush1.xpose.msra.mxu0 0.0
          %2444 = vmatprep.subr.mxu0 0.0
          %2445 = vmatpush1.xpose.msra.mxu0 0.0
          %2446 = vmatprep.subr.mxu0 0.0
          %2447 = vmatpush1.xpose.msra.mxu0 0.0
          %2448 = vmatprep.subr.mxu0 0.0
          %2449 = vmatpush1.xpose.msra.mxu0 0.0
          %2450 = vmatprep.subr.mxu0 0.0
          %2451 = vmatpush1.xpose.msra.mxu0 0.0
          %2452 = vmatprep.subr.mxu0 0.0
          %2453 = vmatpush1.xpose.msra.mxu0 0.0
          %2454 = vmatprep.subr.mxu0 0.0
          %2455 = vmatpush1.xpose.msra.mxu0 0.0
          %2456 = vmatprep.subr.mxu0 0.0
          %2457 = vmatpush1.xpose.msra.mxu0 0.0
          %2458 = vmatprep.subr.mxu0 0.0
          %2459 = vmatpush1.xpose.msra.mxu0 0.0
          %2460 = vmatprep.subr.mxu0 0.0
          %2461 = vmatpush1.xpose.msra.mxu0 0.0
          %2462 = vmatprep.subr.mxu0 0.0
          %2463 = vmatpush1.xpose.msra.mxu0 0.0
          %2464 = vmatprep.subr.mxu0 0.0
          %2465 = vmatpush1.xpose.msra.mxu0 0.0
          %2466 = vmatprep.subr.mxu0 0.0
          %2467 = vmatpush1.xpose.msra.mxu0 0.0
          %2468 = vmatprep.mubr.f32.mxu0 0.0
          %2469 = vmatmul.mubr.f32.gmra.mrb[0].mxu0 %v2399
          %v2470 = vpop.f32.mrb[0].mxu0
          %v2471 = vadd.f32 0.0, %v2470
          %v2472 = vpop.f32.mrb[0].mxu0
          %2473 = vdwg.mxu0
          %v2475 = vsel %vm2017, %v1364, 0
          %v2478 = vsel %vm2017, %v1656, 0
          %2480 = vmatprep.subr.mxu0 0.0
          %2481 = vmatpush1.xpose.msra.mxu0 %v2478
          %2482 = vmatprep.subr.mxu0 0.0
          %2483 = vmatpush1.xpose.msra.mxu0 0.0
          %2484 = vmatprep.subr.mxu0 0.0
          %2485 = vmatpush1.xpose.msra.mxu0 0.0
          %2486 = vmatprep.subr.mxu0 0.0
          %2487 = vmatpush1.xpose.msra.mxu0 0.0
          %2488 = vmatprep.subr.mxu0 0.0
          %2489 = vmatpush1.xpose.msra.mxu0 0.0
          %2490 = vmatprep.subr.mxu0 0.0
          %2491 = vmatpush1.xpose.msra.mxu0 0.0
          %2492 = vmatprep.subr.mxu0 0.0
          %2493 = vmatpush1.xpose.msra.mxu0 0.0
          %2494 = vmatprep.subr.mxu0 0.0
          %2495 = vmatpush1.xpose.msra.mxu0 0.0
          %2496 = vmatprep.subr.mxu0 0.0
          %2497 = vmatpush1.xpose.msra.mxu0 0.0
          %2498 = vmatprep.subr.mxu0 0.0
          %2499 = vmatpush1.xpose.msra.mxu0 0.0
          %2500 = vmatprep.subr.mxu0 0.0
          %2501 = vmatpush1.xpose.msra.mxu0 0.0
          %2502 = vmatprep.subr.mxu0 0.0
          %2503 = vmatpush1.xpose.msra.mxu0 0.0
          %2504 = vmatprep.subr.mxu0 0.0
          %2505 = vmatpush1.xpose.msra.mxu0 0.0
          %2506 = vmatprep.subr.mxu0 0.0
          %2507 = vmatpush1.xpose.msra.mxu0 0.0
          %2508 = vmatprep.subr.mxu0 0.0
          %2509 = vmatpush1.xpose.msra.mxu0 0.0
          %2510 = vmatprep.subr.mxu0 0.0
          %2511 = vmatpush1.xpose.msra.mxu0 0.0
          %2512 = vmatprep.subr.mxu0 0.0
          %2513 = vmatpush1.xpose.msra.mxu0 0.0
          %2514 = vmatprep.subr.mxu0 0.0
          %2515 = vmatpush1.xpose.msra.mxu0 0.0
          %2516 = vmatprep.subr.mxu0 0.0
          %2517 = vmatpush1.xpose.msra.mxu0 0.0
          %2518 = vmatprep.subr.mxu0 0.0
          %2519 = vmatpush1.xpose.msra.mxu0 0.0
          %2520 = vmatprep.subr.mxu0 0.0
          %2521 = vmatpush1.xpose.msra.mxu0 0.0
          %2522 = vmatprep.subr.mxu0 0.0
          %2523 = vmatpush1.xpose.msra.mxu0 0.0
          %2524 = vmatprep.subr.mxu0 0.0
          %2525 = vmatpush1.xpose.msra.mxu0 0.0
          %2526 = vmatprep.subr.mxu0 0.0
          %2527 = vmatpush1.xpose.msra.mxu0 0.0
          %2528 = vmatprep.subr.mxu0 0.0
          %2529 = vmatpush1.xpose.msra.mxu0 0.0
          %2530 = vmatprep.subr.mxu0 0.0
          %2531 = vmatpush1.xpose.msra.mxu0 0.0
          %2532 = vmatprep.subr.mxu0 0.0
          %2533 = vmatpush1.xpose.msra.mxu0 0.0
          %2534 = vmatprep.subr.mxu0 0.0
          %2535 = vmatpush1.xpose.msra.mxu0 0.0
          %2536 = vmatprep.subr.mxu0 0.0
          %2537 = vmatpush1.xpose.msra.mxu0 0.0
          %2538 = vmatprep.subr.mxu0 0.0
          %2539 = vmatpush1.xpose.msra.mxu0 0.0
          %2540 = vmatprep.subr.mxu0 0.0
          %2541 = vmatpush1.xpose.msra.mxu0 0.0
          %2542 = vmatprep.subr.mxu0 0.0
          %2543 = vmatpush1.xpose.msra.mxu0 0.0
          %2544 = vmatprep.mubr.f32.mxu0 0.0
          %2545 = vmatmul.mubr.f32.gmra.mrb[0].mxu0 %v2475
          %v2546 = vpop.f32.mrb[0].mxu0
          %v2547 = vadd.f32 0.0, %v2546
          %v2548 = vpop.f32.mrb[0].mxu0
          %2549 = vdwg.mxu0
          %v2551 = vsel %vm2017, %v1432, 0
          %v2554 = vsel %vm2017, %v1724, 0
          %2556 = vmatprep.subr.mxu0 0.0
          %2557 = vmatpush1.xpose.msra.mxu0 %v2554
          %2558 = vmatprep.subr.mxu0 0.0
          %2559 = vmatpush1.xpose.msra.mxu0 0.0
          %2560 = vmatprep.subr.mxu0 0.0
          %2561 = vmatpush1.xpose.msra.mxu0 0.0
          %2562 = vmatprep.subr.mxu0 0.0
          %2563 = vmatpush1.xpose.msra.mxu0 0.0
          %2564 = vmatprep.subr.mxu0 0.0
          %2565 = vmatpush1.xpose.msra.mxu0 0.0
          %2566 = vmatprep.subr.mxu0 0.0
          %2567 = vmatpush1.xpose.msra.mxu0 0.0
          %2568 = vmatprep.subr.mxu0 0.0
          %2569 = vmatpush1.xpose.msra.mxu0 0.0
          %2570 = vmatprep.subr.mxu0 0.0
          %2571 = vmatpush1.xpose.msra.mxu0 0.0
          %2572 = vmatprep.subr.mxu0 0.0
          %2573 = vmatpush1.xpose.msra.mxu0 0.0
          %2574 = vmatprep.subr.mxu0 0.0
          %2575 = vmatpush1.xpose.msra.mxu0 0.0
          %2576 = vmatprep.subr.mxu0 0.0
          %2577 = vmatpush1.xpose.msra.mxu0 0.0
          %2578 = vmatprep.subr.mxu0 0.0
          %2579 = vmatpush1.xpose.msra.mxu0 0.0
          %2580 = vmatprep.subr.mxu0 0.0
          %2581 = vmatpush1.xpose.msra.mxu0 0.0
          %2582 = vmatprep.subr.mxu0 0.0
          %2583 = vmatpush1.xpose.msra.mxu0 0.0
          %2584 = vmatprep.subr.mxu0 0.0
          %2585 = vmatpush1.xpose.msra.mxu0 0.0
          %2586 = vmatprep.subr.mxu0 0.0
          %2587 = vmatpush1.xpose.msra.mxu0 0.0
          %2588 = vmatprep.subr.mxu0 0.0
          %2589 = vmatpush1.xpose.msra.mxu0 0.0
          %2590 = vmatprep.subr.mxu0 0.0
          %2591 = vmatpush1.xpose.msra.mxu0 0.0
          %2592 = vmatprep.subr.mxu0 0.0
          %2593 = vmatpush1.xpose.msra.mxu0 0.0
          %2594 = vmatprep.subr.mxu0 0.0
          %2595 = vmatpush1.xpose.msra.mxu0 0.0
          %2596 = vmatprep.subr.mxu0 0.0
          %2597 = vmatpush1.xpose.msra.mxu0 0.0
          %2598 = vmatprep.subr.mxu0 0.0
          %2599 = vmatpush1.xpose.msra.mxu0 0.0
          %2600 = vmatprep.subr.mxu0 0.0
          %2601 = vmatpush1.xpose.msra.mxu0 0.0
          %2602 = vmatprep.subr.mxu0 0.0
          %2603 = vmatpush1.xpose.msra.mxu0 0.0
          %2604 = vmatprep.subr.mxu0 0.0
          %2605 = vmatpush1.xpose.msra.mxu0 0.0
          %2606 = vmatprep.subr.mxu0 0.0
          %2607 = vmatpush1.xpose.msra.mxu0 0.0
          %2608 = vmatprep.subr.mxu0 0.0
          %2609 = vmatpush1.xpose.msra.mxu0 0.0
          %2610 = vmatprep.subr.mxu0 0.0
          %2611 = vmatpush1.xpose.msra.mxu0 0.0
          %2612 = vmatprep.subr.mxu0 0.0
          %2613 = vmatpush1.xpose.msra.mxu0 0.0
          %2614 = vmatprep.subr.mxu0 0.0
          %2615 = vmatpush1.xpose.msra.mxu0 0.0
          %2616 = vmatprep.subr.mxu0 0.0
          %2617 = vmatpush1.xpose.msra.mxu0 0.0
          %2618 = vmatprep.subr.mxu0 0.0
          %2619 = vmatpush1.xpose.msra.mxu0 0.0
          %2620 = vmatprep.mubr.f32.mxu0 0.0
          %2621 = vmatmul.mubr.f32.gmra.mrb[0].mxu0 %v2551
          %v2622 = vpop.f32.mrb[0].mxu0
          %v2623 = vadd.f32 0.0, %v2622
          %v2624 = vpop.f32.mrb[0].mxu0
          %2625 = vdwg.mxu0
          %v2626 = vmul.f32 %v2091, 0.35355338
          %v2627 = vmul.f32 %v2167, 0.35355338
          %v2628 = vmul.f32 %v2243, 0.35355338
          %v2629 = vmul.f32 %v2319, 0.35355338
          %v2630 = vmul.f32 %v2395, 0.35355338
          %v2631 = vmul.f32 %v2471, 0.35355338
          %v2632 = vmul.f32 %v2547, 0.35355338
          %v2633 = vmul.f32 %v2623, 0.35355338
          %v2634 = vsel %vm2017, %v2626, -inf
          %2635 = vmax.xlane.f32.xlu0 %v2634
          %v2636 = vpop.xlane.xlu0 %2635
          %v2637 = vsel %vm2017, %v2627, -inf
          %2638 = vmax.xlane.f32.xlu0 %v2637
          %v2639 = vpop.xlane.xlu0 %2638
          %v2640 = vsel %vm2017, %v2628, -inf
          %2641 = vmax.xlane.f32.xlu0 %v2640
          %v2642 = vpop.xlane.xlu0 %2641
          %v2643 = vsel %vm2017, %v2629, -inf
          %2644 = vmax.xlane.f32.xlu0 %v2643
          %v2645 = vpop.xlane.xlu0 %2644
          %v2646 = vsel %vm2017, %v2630, -inf
          %2647 = vmax.xlane.f32.xlu0 %v2646
          %v2648 = vpop.xlane.xlu0 %2647
          %v2649 = vsel %vm2017, %v2631, -inf
          %2650 = vmax.xlane.f32.xlu0 %v2649
          %v2651 = vpop.xlane.xlu0 %2650
          %v2652 = vsel %vm2017, %v2632, -inf
          %2653 = vmax.xlane.f32.xlu0 %v2652
          %v2654 = vpop.xlane.xlu0 %2653
          %v2655 = vsel %vm2017, %v2633, -inf
          %2656 = vmax.xlane.f32.xlu0 %v2655
          %v2657 = vpop.xlane.xlu0 %2656
          %v2658 = vsub.f32 %v2626, %v2636
          %v2659 = vsub.f32 %v2627, %v2639
          %v2660 = vsub.f32 %v2628, %v2642
          %v2661 = vsub.f32 %v2629, %v2645
          %v2662 = vsub.f32 %v2630, %v2648
          %v2663 = vsub.f32 %v2631, %v2651
          %v2664 = vsub.f32 %v2632, %v2654
          %v2665 = vsub.f32 %v2633, %v2657
          %v2666 = vmul.f32 %v2658, 1.442695
          %v2667 = vpow.pop %v2666
          %v2668 = vmul.f32 %v2659, 1.442695
          %v2669 = vpow.pop %v2668
          %v2670 = vmul.f32 %v2660, 1.442695
          %v2671 = vpow.pop %v2670
          %v2672 = vmul.f32 %v2661, 1.442695
          %v2673 = vpow.pop %v2672
          %v2674 = vmul.f32 %v2662, 1.442695
          %v2675 = vpow.pop %v2674
          %v2676 = vmul.f32 %v2663, 1.442695
          %v2677 = vpow.pop %v2676
          %v2678 = vmul.f32 %v2664, 1.442695
          %v2679 = vpow.pop %v2678
          %v2680 = vmul.f32 %v2665, 1.442695
          %v2681 = vpow.pop %v2680
          %v2682 = vsel %vm2017, %v2667, 0.0
          %2683 = vadd.xlane.f32.xlu0 %v2682
          %v2684 = vpop.xlane.xlu0 %2683
          %v2685 = vsel %vm2017, %v2669, 0.0
          %2686 = vadd.xlane.f32.xlu0 %v2685
          %v2687 = vpop.xlane.xlu0 %2686
          %v2688 = vsel %vm2017, %v2671, 0.0
          %2689 = vadd.xlane.f32.xlu0 %v2688
          %v2690 = vpop.xlane.xlu0 %2689
          %v2691 = vsel %vm2017, %v2673, 0.0
          %2692 = vadd.xlane.f32.xlu0 %v2691
          %v2693 = vpop.xlane.xlu0 %2692
          %v2694 = vsel %vm2017, %v2675, 0.0
          %2695 = vadd.xlane.f32.xlu0 %v2694
          %v2696 = vpop.xlane.xlu0 %2695
          %v2697 = vsel %vm2017, %v2677, 0.0
          %2698 = vadd.xlane.f32.xlu0 %v2697
          %v2699 = vpop.xlane.xlu0 %2698
          %v2700 = vsel %vm2017, %v2679, 0.0
          %2701 = vadd.xlane.f32.xlu0 %v2700
          %v2702 = vpop.xlane.xlu0 %2701
          %v2703 = vsel %vm2017, %v2681, 0.0
          %2704 = vadd.xlane.f32.xlu0 %v2703
          %v2705 = vpop.xlane.xlu0 %2704
          %v2706 = vrcp.pop %v2684
          %v2707 = vrcp.pop %v2687
          %v2708 = vrcp.pop %v2690
          %v2709 = vrcp.pop %v2693
          %v2710 = vrcp.pop %v2696
          %v2711 = vrcp.pop %v2699
          %v2712 = vrcp.pop %v2702
          %v2713 = vrcp.pop %v2705
          %v2714 = vmul.f32 %v2667, %v2706
          %v2715 = vmul.f32 %v2669, %v2707
          %v2716 = vmul.f32 %v2671, %v2708
          %v2717 = vmul.f32 %v2673, %v2709
          %v2718 = vmul.f32 %v2675, %v2710
          %v2719 = vmul.f32 %v2677, %v2711
          %v2720 = vmul.f32 %v2679, %v2712
          %v2721 = vmul.f32 %v2681, %v2713
          %2722 = vst.msk [vmem:[%s805] sm:$0xff] %vm2017, %v2714
          %2723 = vst.msk [vmem:[%s805 + $0x8] sm:$0xff] %vm2017, %v2715
          %2724 = vst.msk [vmem:[%s805 + $0x10] sm:$0xff] %vm2017, %v2716
          %2725 = vst.msk [vmem:[%s805 + $0x18] sm:$0xff] %vm2017, %v2717
          %2726 = vst.msk [vmem:[%s805 + $0x20] sm:$0xff] %vm2017, %v2718
          %2727 = vst.msk [vmem:[%s805 + $0x28] sm:$0xff] %vm2017, %v2719
          %2728 = vst.msk [vmem:[%s805 + $0x30] sm:$0xff] %vm2017, %v2720
          %2729 = vst.msk [vmem:[%s805 + $0x38] sm:$0xff] %vm2017, %v2721
          %v2731 = vsel %vm2017, %v2714, 0
          %2733 = vmatprep.subr.mxu0 0.0
          %2734 = vmatpush1.msra.mxu0 %v1945
          %2735 = vmatprep.subr.mxu0 0.0
          %2736 = vmatpush1.msra.mxu0 0.0
          %2737 = vmatprep.subr.mxu0 0.0
          %2738 = vmatpush1.msra.mxu0 0.0
          %2739 = vmatprep.subr.mxu0 0.0
          %2740 = vmatpush1.msra.mxu0 0.0
          %2741 = vmatprep.subr.mxu0 0.0
          %2742 = vmatpush1.msra.mxu0 0.0
          %2743 = vmatprep.subr.mxu0 0.0
          %2744 = vmatpush1.msra.mxu0 0.0
          %2745 = vmatprep.subr.mxu0 0.0
          %2746 = vmatpush1.msra.mxu0 0.0
          %2747 = vmatprep.subr.mxu0 0.0
          %2748 = vmatpush1.msra.mxu0 0.0
          %2749 = vmatprep.subr.mxu0 0.0
          %2750 = vmatpush1.msra.mxu0 0.0
          %2751 = vmatprep.subr.mxu0 0.0
          %2752 = vmatpush1.msra.mxu0 0.0
          %2753 = vmatprep.subr.mxu0 0.0
          %2754 = vmatpush1.msra.mxu0 0.0
          %2755 = vmatprep.subr.mxu0 0.0
          %2756 = vmatpush1.msra.mxu0 0.0
          %2757 = vmatprep.subr.mxu0 0.0
          %2758 = vmatpush1.msra.mxu0 0.0
          %2759 = vmatprep.subr.mxu0 0.0
          %2760 = vmatpush1.msra.mxu0 0.0
          %2761 = vmatprep.subr.mxu0 0.0
          %2762 = vmatpush1.msra.mxu0 0.0
          %2763 = vmatprep.subr.mxu0 0.0
          %2764 = vmatpush1.msra.mxu0 0.0
          %2765 = vmatprep.subr.mxu0 0.0
          %2766 = vmatpush1.msra.mxu0 0.0
          %2767 = vmatprep.subr.mxu0 0.0
          %2768 = vmatpush1.msra.mxu0 0.0
          %2769 = vmatprep.subr.mxu0 0.0
          %2770 = vmatpush1.msra.mxu0 0.0
          %2771 = vmatprep.subr.mxu0 0.0
          %2772 = vmatpush1.msra.mxu0 0.0
          %2773 = vmatprep.subr.mxu0 0.0
          %2774 = vmatpush1.msra.mxu0 0.0
          %2775 = vmatprep.subr.mxu0 0.0
          %2776 = vmatpush1.msra.mxu0 0.0
          %2777 = vmatprep.subr.mxu0 0.0
          %2778 = vmatpush1.msra.mxu0 0.0
          %2779 = vmatprep.subr.mxu0 0.0
          %2780 = vmatpush1.msra.mxu0 0.0
          %2781 = vmatprep.subr.mxu0 0.0
          %2782 = vmatpush1.msra.mxu0 0.0
          %2783 = vmatprep.subr.mxu0 0.0
          %2784 = vmatpush1.msra.mxu0 0.0
          %2785 = vmatprep.subr.mxu0 0.0
          %2786 = vmatpush1.msra.mxu0 0.0
          %2787 = vmatprep.subr.mxu0 0.0
          %2788 = vmatpush1.msra.mxu0 0.0
          %2789 = vmatprep.subr.mxu0 0.0
          %2790 = vmatpush1.msra.mxu0 0.0
          %2791 = vmatprep.subr.mxu0 0.0
          %2792 = vmatpush1.msra.mxu0 0.0
          %2793 = vmatprep.subr.mxu0 0.0
          %2794 = vmatpush1.msra.mxu0 0.0
          %2795 = vmatprep.subr.mxu0 0.0
          %2796 = vmatpush1.msra.mxu0 0.0
          %2797 = vmatprep.mubr.f32.mxu0 0.0
          %2798 = vmatmul.mubr.f32.gmra.mrb[0].mxu0 %v2731
          %v2799 = vpop.f32.mrb[0].mxu0
          %v2800 = vadd.f32 0.0, %v2799
          %v2801 = vpop.f32.mrb[0].mxu0
          %2802 = vdwg.mxu0
          %v2804 = vsel %vm2017, %v2715, 0
          %2806 = vmatprep.subr.mxu0 0.0
          %2807 = vmatpush1.msra.mxu0 %v2013
          %2808 = vmatprep.subr.mxu0 0.0
          %2809 = vmatpush1.msra.mxu0 0.0
          %2810 = vmatprep.subr.mxu0 0.0
          %2811 = vmatpush1.msra.mxu0 0.0
          %2812 = vmatprep.subr.mxu0 0.0
          %2813 = vmatpush1.msra.mxu0 0.0
          %2814 = vmatprep.subr.mxu0 0.0
          %2815 = vmatpush1.msra.mxu0 0.0
          %2816 = vmatprep.subr.mxu0 0.0
          %2817 = vmatpush1.msra.mxu0 0.0
          %2818 = vmatprep.subr.mxu0 0.0
          %2819 = vmatpush1.msra.mxu0 0.0
          %2820 = vmatprep.subr.mxu0 0.0
          %2821 = vmatpush1.msra.mxu0 0.0
          %2822 = vmatprep.subr.mxu0 0.0
          %2823 = vmatpush1.msra.mxu0 0.0
          %2824 = vmatprep.subr.mxu0 0.0
          %2825 = vmatpush1.msra.mxu0 0.0
          %2826 = vmatprep.subr.mxu0 0.0
          %2827 = vmatpush1.msra.mxu0 0.0
          %2828 = vmatprep.subr.mxu0 0.0
          %2829 = vmatpush1.msra.mxu0 0.0
          %2830 = vmatprep.subr.mxu0 0.0
          %2831 = vmatpush1.msra.mxu0 0.0
          %2832 = vmatprep.subr.mxu0 0.0
          %2833 = vmatpush1.msra.mxu0 0.0
          %2834 = vmatprep.subr.mxu0 0.0
          %2835 = vmatpush1.msra.mxu0 0.0
          %2836 = vmatprep.subr.mxu0 0.0
          %2837 = vmatpush1.msra.mxu0 0.0
          %2838 = vmatprep.subr.mxu0 0.0
          %2839 = vmatpush1.msra.mxu0 0.0
          %2840 = vmatprep.subr.mxu0 0.0
          %2841 = vmatpush1.msra.mxu0 0.0
          %2842 = vmatprep.subr.mxu0 0.0
          %2843 = vmatpush1.msra.mxu0 0.0
          %2844 = vmatprep.subr.mxu0 0.0
          %2845 = vmatpush1.msra.mxu0 0.0
          %2846 = vmatprep.subr.mxu0 0.0
          %2847 = vmatpush1.msra.mxu0 0.0
          %2848 = vmatprep.subr.mxu0 0.0
          %2849 = vmatpush1.msra.mxu0 0.0
          %2850 = vmatprep.subr.mxu0 0.0
          %2851 = vmatpush1.msra.mxu0 0.0
          %2852 = vmatprep.subr.mxu0 0.0
          %2853 = vmatpush1.msra.mxu0 0.0
          %2854 = vmatprep.subr.mxu0 0.0
          %2855 = vmatpush1.msra.mxu0 0.0
          %2856 = vmatprep.subr.mxu0 0.0
          %2857 = vmatpush1.msra.mxu0 0.0
          %2858 = vmatprep.subr.mxu0 0.0
          %2859 = vmatpush1.msra.mxu0 0.0
          %2860 = vmatprep.subr.mxu0 0.0
          %2861 = vmatpush1.msra.mxu0 0.0
          %2862 = vmatprep.subr.mxu0 0.0
          %2863 = vmatpush1.msra.mxu0 0.0
          %2864 = vmatprep.subr.mxu0 0.0
          %2865 = vmatpush1.msra.mxu0 0.0
          %2866 = vmatprep.subr.mxu0 0.0
          %2867 = vmatpush1.msra.mxu0 0.0
          %2868 = vmatprep.subr.mxu0 0.0
          %2869 = vmatpush1.msra.mxu0 0.0
          %2870 = vmatprep.mubr.f32.mxu0 0.0
          %2871 = vmatmul.mubr.f32.gmra.mrb[0].mxu0 %v2804
          %v2872 = vpop.f32.mrb[0].mxu0
          %v2873 = vadd.f32 0.0, %v2872
          %v2874 = vpop.f32.mrb[0].mxu0
          %2875 = vdwg.mxu0
          %v2877 = vsel %vm2017, %v2716, 0
          %2879 = vmatprep.subr.mxu0 0.0
          %2880 = vmatpush1.msra.mxu0 %v1946
          %2881 = vmatprep.subr.mxu0 0.0
          %2882 = vmatpush1.msra.mxu0 0.0
          %2883 = vmatprep.subr.mxu0 0.0
          %2884 = vmatpush1.msra.mxu0 0.0
          %2885 = vmatprep.subr.mxu0 0.0
          %2886 = vmatpush1.msra.mxu0 0.0
          %2887 = vmatprep.subr.mxu0 0.0
          %2888 = vmatpush1.msra.mxu0 0.0
          %2889 = vmatprep.subr.mxu0 0.0
          %2890 = vmatpush1.msra.mxu0 0.0
          %2891 = vmatprep.subr.mxu0 0.0
          %2892 = vmatpush1.msra.mxu0 0.0
          %2893 = vmatprep.subr.mxu0 0.0
          %2894 = vmatpush1.msra.mxu0 0.0
          %2895 = vmatprep.subr.mxu0 0.0
          %2896 = vmatpush1.msra.mxu0 0.0
          %2897 = vmatprep.subr.mxu0 0.0
          %2898 = vmatpush1.msra.mxu0 0.0
          %2899 = vmatprep.subr.mxu0 0.0
          %2900 = vmatpush1.msra.mxu0 0.0
          %2901 = vmatprep.subr.mxu0 0.0
          %2902 = vmatpush1.msra.mxu0 0.0
          %2903 = vmatprep.subr.mxu0 0.0
          %2904 = vmatpush1.msra.mxu0 0.0
          %2905 = vmatprep.subr.mxu0 0.0
          %2906 = vmatpush1.msra.mxu0 0.0
          %2907 = vmatprep.subr.mxu0 0.0
          %2908 = vmatpush1.msra.mxu0 0.0
          %2909 = vmatprep.subr.mxu0 0.0
          %2910 = vmatpush1.msra.mxu0 0.0
          %2911 = vmatprep.subr.mxu0 0.0
          %2912 = vmatpush1.msra.mxu0 0.0
          %2913 = vmatprep.subr.mxu0 0.0
          %2914 = vmatpush1.msra.mxu0 0.0
          %2915 = vmatprep.subr.mxu0 0.0
          %2916 = vmatpush1.msra.mxu0 0.0
          %2917 = vmatprep.subr.mxu0 0.0
          %2918 = vmatpush1.msra.mxu0 0.0
          %2919 = vmatprep.subr.mxu0 0.0
          %2920 = vmatpush1.msra.mxu0 0.0
          %2921 = vmatprep.subr.mxu0 0.0
          %2922 = vmatpush1.msra.mxu0 0.0
          %2923 = vmatprep.subr.mxu0 0.0
          %2924 = vmatpush1.msra.mxu0 0.0
          %2925 = vmatprep.subr.mxu0 0.0
          %2926 = vmatpush1.msra.mxu0 0.0
          %2927 = vmatprep.subr.mxu0 0.0
          %2928 = vmatpush1.msra.mxu0 0.0
          %2929 = vmatprep.subr.mxu0 0.0
          %2930 = vmatpush1.msra.mxu0 0.0
          %2931 = vmatprep.subr.mxu0 0.0
          %2932 = vmatpush1.msra.mxu0 0.0
          %2933 = vmatprep.subr.mxu0 0.0
          %2934 = vmatpush1.msra.mxu0 0.0
          %2935 = vmatprep.subr.mxu0 0.0
          %2936 = vmatpush1.msra.mxu0 0.0
          %2937 = vmatprep.subr.mxu0 0.0
          %2938 = vmatpush1.msra.mxu0 0.0
          %2939 = vmatprep.subr.mxu0 0.0
          %2940 = vmatpush1.msra.mxu0 0.0
          %2941 = vmatprep.subr.mxu0 0.0
          %2942 = vmatpush1.msra.mxu0 0.0
          %2943 = vmatprep.mubr.f32.mxu0 0.0
          %2944 = vmatmul.mubr.f32.gmra.mrb[0].mxu0 %v2877
          %v2945 = vpop.f32.mrb[0].mxu0
          %v2946 = vadd.f32 0.0, %v2945
          %v2947 = vpop.f32.mrb[0].mxu0
          %2948 = vdwg.mxu0
          %v2950 = vsel %vm2017, %v2717, 0
          %2952 = vmatprep.subr.mxu0 0.0
          %2953 = vmatpush1.msra.mxu0 %v2014
          %2954 = vmatprep.subr.mxu0 0.0
          %2955 = vmatpush1.msra.mxu0 0.0
          %2956 = vmatprep.subr.mxu0 0.0
          %2957 = vmatpush1.msra.mxu0 0.0
          %2958 = vmatprep.subr.mxu0 0.0
          %2959 = vmatpush1.msra.mxu0 0.0
          %2960 = vmatprep.subr.mxu0 0.0
          %2961 = vmatpush1.msra.mxu0 0.0
          %2962 = vmatprep.subr.mxu0 0.0
          %2963 = vmatpush1.msra.mxu0 0.0
          %2964 = vmatprep.subr.mxu0 0.0
          %2965 = vmatpush1.msra.mxu0 0.0
          %2966 = vmatprep.subr.mxu0 0.0
          %2967 = vmatpush1.msra.mxu0 0.0
          %2968 = vmatprep.subr.mxu0 0.0
          %2969 = vmatpush1.msra.mxu0 0.0
          %2970 = vmatprep.subr.mxu0 0.0
          %2971 = vmatpush1.msra.mxu0 0.0
          %2972 = vmatprep.subr.mxu0 0.0
          %2973 = vmatpush1.msra.mxu0 0.0
          %2974 = vmatprep.subr.mxu0 0.0
          %2975 = vmatpush1.msra.mxu0 0.0
          %2976 = vmatprep.subr.mxu0 0.0
          %2977 = vmatpush1.msra.mxu0 0.0
          %2978 = vmatprep.subr.mxu0 0.0
          %2979 = vmatpush1.msra.mxu0 0.0
          %2980 = vmatprep.subr.mxu0 0.0
          %2981 = vmatpush1.msra.mxu0 0.0
          %2982 = vmatprep.subr.mxu0 0.0
          %2983 = vmatpush1.msra.mxu0 0.0
          %2984 = vmatprep.subr.mxu0 0.0
          %2985 = vmatpush1.msra.mxu0 0.0
          %2986 = vmatprep.subr.mxu0 0.0
          %2987 = vmatpush1.msra.mxu0 0.0
          %2988 = vmatprep.subr.mxu0 0.0
          %2989 = vmatpush1.msra.mxu0 0.0
          %2990 = vmatprep.subr.mxu0 0.0
          %2991 = vmatpush1.msra.mxu0 0.0
          %2992 = vmatprep.subr.mxu0 0.0
          %2993 = vmatpush1.msra.mxu0 0.0
          %2994 = vmatprep.subr.mxu0 0.0
          %2995 = vmatpush1.msra.mxu0 0.0
          %2996 = vmatprep.subr.mxu0 0.0
          %2997 = vmatpush1.msra.mxu0 0.0
          %2998 = vmatprep.subr.mxu0 0.0
          %2999 = vmatpush1.msra.mxu0 0.0
          %3000 = vmatprep.subr.mxu0 0.0
          %3001 = vmatpush1.msra.mxu0 0.0
          %3002 = vmatprep.subr.mxu0 0.0
          %3003 = vmatpush1.msra.mxu0 0.0
          %3004 = vmatprep.subr.mxu0 0.0
          %3005 = vmatpush1.msra.mxu0 0.0
          %3006 = vmatprep.subr.mxu0 0.0
          %3007 = vmatpush1.msra.mxu0 0.0
          %3008 = vmatprep.subr.mxu0 0.0
          %3009 = vmatpush1.msra.mxu0 0.0
          %3010 = vmatprep.subr.mxu0 0.0
          %3011 = vmatpush1.msra.mxu0 0.0
          %3012 = vmatprep.subr.mxu0 0.0
          %3013 = vmatpush1.msra.mxu0 0.0
          %3014 = vmatprep.subr.mxu0 0.0
          %3015 = vmatpush1.msra.mxu0 0.0
          %3016 = vmatprep.mubr.f32.mxu0 0.0
          %3017 = vmatmul.mubr.f32.gmra.mrb[0].mxu0 %v2950
          %v3018 = vpop.f32.mrb[0].mxu0
          %v3019 = vadd.f32 0.0, %v3018
          %v3020 = vpop.f32.mrb[0].mxu0
          %3021 = vdwg.mxu0
          %v3023 = vsel %vm2017, %v2718, 0
          %3025 = vmatprep.subr.mxu0 0.0
          %3026 = vmatpush1.msra.mxu0 %v1947
          %3027 = vmatprep.subr.mxu0 0.0
          %3028 = vmatpush1.msra.mxu0 0.0
          %3029 = vmatprep.subr.mxu0 0.0
          %3030 = vmatpush1.msra.mxu0 0.0
          %3031 = vmatprep.subr.mxu0 0.0
          %3032 = vmatpush1.msra.mxu0 0.0
          %3033 = vmatprep.subr.mxu0 0.0
          %3034 = vmatpush1.msra.mxu0 0.0
          %3035 = vmatprep.subr.mxu0 0.0
          %3036 = vmatpush1.msra.mxu0 0.0
          %3037 = vmatprep.subr.mxu0 0.0
          %3038 = vmatpush1.msra.mxu0 0.0
          %3039 = vmatprep.subr.mxu0 0.0
          %3040 = vmatpush1.msra.mxu0 0.0
          %3041 = vmatprep.subr.mxu0 0.0
          %3042 = vmatpush1.msra.mxu0 0.0
          %3043 = vmatprep.subr.mxu0 0.0
          %3044 = vmatpush1.msra.mxu0 0.0
          %3045 = vmatprep.subr.mxu0 0.0
          %3046 = vmatpush1.msra.mxu0 0.0
          %3047 = vmatprep.subr.mxu0 0.0
          %3048 = vmatpush1.msra.mxu0 0.0
          %3049 = vmatprep.subr.mxu0 0.0
          %3050 = vmatpush1.msra.mxu0 0.0
          %3051 = vmatprep.subr.mxu0 0.0
          %3052 = vmatpush1.msra.mxu0 0.0
          %3053 = vmatprep.subr.mxu0 0.0
          %3054 = vmatpush1.msra.mxu0 0.0
          %3055 = vmatprep.subr.mxu0 0.0
          %3056 = vmatpush1.msra.mxu0 0.0
          %3057 = vmatprep.subr.mxu0 0.0
          %3058 = vmatpush1.msra.mxu0 0.0
          %3059 = vmatprep.subr.mxu0 0.0
          %3060 = vmatpush1.msra.mxu0 0.0
          %3061 = vmatprep.subr.mxu0 0.0
          %3062 = vmatpush1.msra.mxu0 0.0
          %3063 = vmatprep.subr.mxu0 0.0
          %3064 = vmatpush1.msra.mxu0 0.0
          %3065 = vmatprep.subr.mxu0 0.0
          %3066 = vmatpush1.msra.mxu0 0.0
          %3067 = vmatprep.subr.mxu0 0.0
          %3068 = vmatpush1.msra.mxu0 0.0
          %3069 = vmatprep.subr.mxu0 0.0
          %3070 = vmatpush1.msra.mxu0 0.0
          %3071 = vmatprep.subr.mxu0 0.0
          %3072 = vmatpush1.msra.mxu0 0.0
          %3073 = vmatprep.subr.mxu0 0.0
          %3074 = vmatpush1.msra.mxu0 0.0
          %3075 = vmatprep.subr.mxu0 0.0
          %3076 = vmatpush1.msra.mxu0 0.0
          %3077 = vmatprep.subr.mxu0 0.0
          %3078 = vmatpush1.msra.mxu0 0.0
          %3079 = vmatprep.subr.mxu0 0.0
          %3080 = vmatpush1.msra.mxu0 0.0
          %3081 = vmatprep.subr.mxu0 0.0
          %3082 = vmatpush1.msra.mxu0 0.0
          %3083 = vmatprep.subr.mxu0 0.0
          %3084 = vmatpush1.msra.mxu0 0.0
          %3085 = vmatprep.subr.mxu0 0.0
          %3086 = vmatpush1.msra.mxu0 0.0
          %3087 = vmatprep.subr.mxu0 0.0
          %3088 = vmatpush1.msra.mxu0 0.0
          %3089 = vmatprep.mubr.f32.mxu0 0.0
          %3090 = vmatmul.mubr.f32.gmra.mrb[0].mxu0 %v3023
          %v3091 = vpop.f32.mrb[0].mxu0
          %v3092 = vadd.f32 0.0, %v3091
          %v3093 = vpop.f32.mrb[0].mxu0
          %3094 = vdwg.mxu0
          %v3096 = vsel %vm2017, %v2719, 0
          %3098 = vmatprep.subr.mxu0 0.0
          %3099 = vmatpush1.msra.mxu0 %v2015
          %3100 = vmatprep.subr.mxu0 0.0
          %3101 = vmatpush1.msra.mxu0 0.0
          %3102 = vmatprep.subr.mxu0 0.0
          %3103 = vmatpush1.msra.mxu0 0.0
          %3104 = vmatprep.subr.mxu0 0.0
          %3105 = vmatpush1.msra.mxu0 0.0
          %3106 = vmatprep.subr.mxu0 0.0
          %3107 = vmatpush1.msra.mxu0 0.0
          %3108 = vmatprep.subr.mxu0 0.0
          %3109 = vmatpush1.msra.mxu0 0.0
          %3110 = vmatprep.subr.mxu0 0.0
          %3111 = vmatpush1.msra.mxu0 0.0
          %3112 = vmatprep.subr.mxu0 0.0
          %3113 = vmatpush1.msra.mxu0 0.0
          %3114 = vmatprep.subr.mxu0 0.0
          %3115 = vmatpush1.msra.mxu0 0.0
          %3116 = vmatprep.subr.mxu0 0.0
          %3117 = vmatpush1.msra.mxu0 0.0
          %3118 = vmatprep.subr.mxu0 0.0
          %3119 = vmatpush1.msra.mxu0 0.0
          %3120 = vmatprep.subr.mxu0 0.0
          %3121 = vmatpush1.msra.mxu0 0.0
          %3122 = vmatprep.subr.mxu0 0.0
          %3123 = vmatpush1.msra.mxu0 0.0
          %3124 = vmatprep.subr.mxu0 0.0
          %3125 = vmatpush1.msra.mxu0 0.0
          %3126 = vmatprep.subr.mxu0 0.0
          %3127 = vmatpush1.msra.mxu0 0.0
          %3128 = vmatprep.subr.mxu0 0.0
          %3129 = vmatpush1.msra.mxu0 0.0
          %3130 = vmatprep.subr.mxu0 0.0
          %3131 = vmatpush1.msra.mxu0 0.0
          %3132 = vmatprep.subr.mxu0 0.0
          %3133 = vmatpush1.msra.mxu0 0.0
          %3134 = vmatprep.subr.mxu0 0.0
          %3135 = vmatpush1.msra.mxu0 0.0
          %3136 = vmatprep.subr.mxu0 0.0
          %3137 = vmatpush1.msra.mxu0 0.0
          %3138 = vmatprep.subr.mxu0 0.0
          %3139 = vmatpush1.msra.mxu0 0.0
          %3140 = vmatprep.subr.mxu0 0.0
          %3141 = vmatpush1.msra.mxu0 0.0
          %3142 = vmatprep.subr.mxu0 0.0
          %3143 = vmatpush1.msra.mxu0 0.0
          %3144 = vmatprep.subr.mxu0 0.0
          %3145 = vmatpush1.msra.mxu0 0.0
          %3146 = vmatprep.subr.mxu0 0.0
          %3147 = vmatpush1.msra.mxu0 0.0
          %3148 = vmatprep.subr.mxu0 0.0
          %3149 = vmatpush1.msra.mxu0 0.0
          %3150 = vmatprep.subr.mxu0 0.0
          %3151 = vmatpush1.msra.mxu0 0.0
          %3152 = vmatprep.subr.mxu0 0.0
          %3153 = vmatpush1.msra.mxu0 0.0
          %3154 = vmatprep.subr.mxu0 0.0
          %3155 = vmatpush1.msra.mxu0 0.0
          %3156 = vmatprep.subr.mxu0 0.0
          %3157 = vmatpush1.msra.mxu0 0.0
          %3158 = vmatprep.subr.mxu0 0.0
          %3159 = vmatpush1.msra.mxu0 0.0
          %3160 = vmatprep.subr.mxu0 0.0
          %3161 = vmatpush1.msra.mxu0 0.0
          %3162 = vmatprep.mubr.f32.mxu0 0.0
          %3163 = vmatmul.mubr.f32.gmra.mrb[0].mxu0 %v3096
          %v3164 = vpop.f32.mrb[0].mxu0
          %v3165 = vadd.f32 0.0, %v3164
          %v3166 = vpop.f32.mrb[0].mxu0
          %3167 = vdwg.mxu0
          %v3169 = vsel %vm2017, %v2720, 0
          %3171 = vmatprep.subr.mxu0 0.0
          %3172 = vmatpush1.msra.mxu0 %v1948
          %3173 = vmatprep.subr.mxu0 0.0
          %3174 = vmatpush1.msra.mxu0 0.0
          %3175 = vmatprep.subr.mxu0 0.0
          %3176 = vmatpush1.msra.mxu0 0.0
          %3177 = vmatprep.subr.mxu0 0.0
          %3178 = vmatpush1.msra.mxu0 0.0
          %3179 = vmatprep.subr.mxu0 0.0
          %3180 = vmatpush1.msra.mxu0 0.0
          %3181 = vmatprep.subr.mxu0 0.0
          %3182 = vmatpush1.msra.mxu0 0.0
          %3183 = vmatprep.subr.mxu0 0.0
          %3184 = vmatpush1.msra.mxu0 0.0
          %3185 = vmatprep.subr.mxu0 0.0
          %3186 = vmatpush1.msra.mxu0 0.0
          %3187 = vmatprep.subr.mxu0 0.0
          %3188 = vmatpush1.msra.mxu0 0.0
          %3189 = vmatprep.subr.mxu0 0.0
          %3190 = vmatpush1.msra.mxu0 0.0
          %3191 = vmatprep.subr.mxu0 0.0
          %3192 = vmatpush1.msra.mxu0 0.0
          %3193 = vmatprep.subr.mxu0 0.0
          %3194 = vmatpush1.msra.mxu0 0.0
          %3195 = vmatprep.subr.mxu0 0.0
          %3196 = vmatpush1.msra.mxu0 0.0
          %3197 = vmatprep.subr.mxu0 0.0
          %3198 = vmatpush1.msra.mxu0 0.0
          %3199 = vmatprep.subr.mxu0 0.0
          %3200 = vmatpush1.msra.mxu0 0.0
          %3201 = vmatprep.subr.mxu0 0.0
          %3202 = vmatpush1.msra.mxu0 0.0
          %3203 = vmatprep.subr.mxu0 0.0
          %3204 = vmatpush1.msra.mxu0 0.0
          %3205 = vmatprep.subr.mxu0 0.0
          %3206 = vmatpush1.msra.mxu0 0.0
          %3207 = vmatprep.subr.mxu0 0.0
          %3208 = vmatpush1.msra.mxu0 0.0
          %3209 = vmatprep.subr.mxu0 0.0
          %3210 = vmatpush1.msra.mxu0 0.0
          %3211 = vmatprep.subr.mxu0 0.0
          %3212 = vmatpush1.msra.mxu0 0.0
          %3213 = vmatprep.subr.mxu0 0.0
          %3214 = vmatpush1.msra.mxu0 0.0
          %3215 = vmatprep.subr.mxu0 0.0
          %3216 = vmatpush1.msra.mxu0 0.0
          %3217 = vmatprep.subr.mxu0 0.0
          %3218 = vmatpush1.msra.mxu0 0.0
          %3219 = vmatprep.subr.mxu0 0.0
          %3220 = vmatpush1.msra.mxu0 0.0
          %3221 = vmatprep.subr.mxu0 0.0
          %3222 = vmatpush1.msra.mxu0 0.0
          %3223 = vmatprep.subr.mxu0 0.0
          %3224 = vmatpush1.msra.mxu0 0.0
          %3225 = vmatprep.subr.mxu0 0.0
          %3226 = vmatpush1.msra.mxu0 0.0
          %3227 = vmatprep.subr.mxu0 0.0
          %3228 = vmatpush1.msra.mxu0 0.0
          %3229 = vmatprep.subr.mxu0 0.0
          %3230 = vmatpush1.msra.mxu0 0.0
          %3231 = vmatprep.subr.mxu0 0.0
          %3232 = vmatpush1.msra.mxu0 0.0
          %3233 = vmatprep.subr.mxu0 0.0
          %3234 = vmatpush1.msra.mxu0 0.0
          %3235 = vmatprep.mubr.f32.mxu0 0.0
          %3236 = vmatmul.mubr.f32.gmra.mrb[0].mxu0 %v3169
          %v3237 = vpop.f32.mrb[0].mxu0
          %v3238 = vadd.f32 0.0, %v3237
          %v3239 = vpop.f32.mrb[0].mxu0
          %3240 = vdwg.mxu0
          %v3242 = vsel %vm2017, %v2721, 0
          %3244 = vmatprep.subr.mxu0 0.0
          %3245 = vmatpush1.msra.mxu0 %v2016
          %3246 = vmatprep.subr.mxu0 0.0
          %3247 = vmatpush1.msra.mxu0 0.0
          %3248 = vmatprep.subr.mxu0 0.0
          %3249 = vmatpush1.msra.mxu0 0.0
          %3250 = vmatprep.subr.mxu0 0.0
          %3251 = vmatpush1.msra.mxu0 0.0
          %3252 = vmatprep.subr.mxu0 0.0
          %3253 = vmatpush1.msra.mxu0 0.0
          %3254 = vmatprep.subr.mxu0 0.0
          %3255 = vmatpush1.msra.mxu0 0.0
          %3256 = vmatprep.subr.mxu0 0.0
          %3257 = vmatpush1.msra.mxu0 0.0
          %3258 = vmatprep.subr.mxu0 0.0
          %3259 = vmatpush1.msra.mxu0 0.0
          %3260 = vmatprep.subr.mxu0 0.0
          %3261 = vmatpush1.msra.mxu0 0.0
          %3262 = vmatprep.subr.mxu0 0.0
          %3263 = vmatpush1.msra.mxu0 0.0
          %3264 = vmatprep.subr.mxu0 0.0
          %3265 = vmatpush1.msra.mxu0 0.0
          %3266 = vmatprep.subr.mxu0 0.0
          %3267 = vmatpush1.msra.mxu0 0.0
          %3268 = vmatprep.subr.mxu0 0.0
          %3269 = vmatpush1.msra.mxu0 0.0
          %3270 = vmatprep.subr.mxu0 0.0
          %3271 = vmatpush1.msra.mxu0 0.0
          %3272 = vmatprep.subr.mxu0 0.0
          %3273 = vmatpush1.msra.mxu0 0.0
          %3274 = vmatprep.subr.mxu0 0.0
          %3275 = vmatpush1.msra.mxu0 0.0
          %3276 = vmatprep.subr.mxu0 0.0
          %3277 = vmatpush1.msra.mxu0 0.0
          %3278 = vmatprep.subr.mxu0 0.0
          %3279 = vmatpush1.msra.mxu0 0.0
          %3280 = vmatprep.subr.mxu0 0.0
          %3281 = vmatpush1.msra.mxu0 0.0
          %3282 = vmatprep.subr.mxu0 0.0
          %3283 = vmatpush1.msra.mxu0 0.0
          %3284 = vmatprep.subr.mxu0 0.0
          %3285 = vmatpush1.msra.mxu0 0.0
          %3286 = vmatprep.subr.mxu0 0.0
          %3287 = vmatpush1.msra.mxu0 0.0
          %3288 = vmatprep.subr.mxu0 0.0
          %3289 = vmatpush1.msra.mxu0 0.0
          %3290 = vmatprep.subr.mxu0 0.0
          %3291 = vmatpush1.msra.mxu0 0.0
          %3292 = vmatprep.subr.mxu0 0.0
          %3293 = vmatpush1.msra.mxu0 0.0
          %3294 = vmatprep.subr.mxu0 0.0
          %3295 = vmatpush1.msra.mxu0 0.0
          %3296 = vmatprep.subr.mxu0 0.0
          %3297 = vmatpush1.msra.mxu0 0.0
          %3298 = vmatprep.subr.mxu0 0.0
          %3299 = vmatpush1.msra.mxu0 0.0
          %3300 = vmatprep.subr.mxu0 0.0
          %3301 = vmatpush1.msra.mxu0 0.0
          %3302 = vmatprep.subr.mxu0 0.0
          %3303 = vmatpush1.msra.mxu0 0.0
          %3304 = vmatprep.subr.mxu0 0.0
          %3305 = vmatpush1.msra.mxu0 0.0
          %3306 = vmatprep.subr.mxu0 0.0
          %3307 = vmatpush1.msra.mxu0 0.0
          %3308 = vmatprep.mubr.f32.mxu0 0.0
          %3309 = vmatmul.mubr.f32.gmra.mrb[0].mxu0 %v3242
          %v3310 = vpop.f32.mrb[0].mxu0
          %v3311 = vadd.f32 0.0, %v3310
          %v3312 = vpop.f32.mrb[0].mxu0
          %3313 = vdwg.mxu0
          %v3314 = vcombine.low %v2800, %v3092
          %v3315 = vcombine.high %v2800, %v3092
          %v3317 = vunpack.c.l.s4 1983009808
          %v3318 = vunpack.c.0.s8 %v3317
          %v3319 = vlaneseq
          %v3320 = vshrl.u32 %v3319, 7
          %v3321 = vsub.s32 %v3318, %v3320
          %v3322 = vrot.slane %v3314, %v3321
          %v3324 = vunpack.c.l.s4 1983009808
          %v3325 = vunpack.c.0.s8 %v3324
          %v3326 = vlaneseq
          %v3327 = vshrl.u32 %v3326, 7
          %v3328 = vsub.s32 %v3325, %v3327
          %v3329 = vrot.slane %v3315, %v3328
          %v3330 = vcombine.low %v2946, %v3238
          %v3331 = vcombine.high %v2946, %v3238
          %v3333 = vunpack.c.l.s4 1983009808
          %v3334 = vunpack.c.0.s8 %v3333
          %v3335 = vlaneseq
          %v3336 = vshrl.u32 %v3335, 7
          %v3337 = vsub.s32 %v3334, %v3336
          %v3338 = vrot.slane %v3330, %v3337
          %v3340 = vunpack.c.l.s4 1983009808
          %v3341 = vunpack.c.0.s8 %v3340
          %v3342 = vlaneseq
          %v3343 = vshrl.u32 %v3342, 7
          %v3344 = vsub.s32 %v3341, %v3343
          %v3345 = vrot.slane %v3331, %v3344
          %v3346 = vcombine.low %v3322, %v3338
          %v3347 = vcombine.high %v3322, %v3338
          %v3349 = vunpack.c.l.s4 1934713408
          %v3350 = vunpack.c.0.s8 %v3349
          %v3351 = vlaneseq
          %v3352 = vshrl.u32 %v3351, 7
          %v3353 = vsub.s32 %v3350, %v3352
          %v3354 = vrot.slane %v3346, %v3353
          %v3356 = vunpack.c.l.s4 1934713408
          %v3357 = vunpack.c.0.s8 %v3356
          %v3358 = vlaneseq
          %v3359 = vshrl.u32 %v3358, 7
          %v3360 = vsub.s32 %v3357, %v3359
          %v3361 = vrot.slane %v3347, %v3360
          %v3362 = vcombine.low %v3329, %v3345
          %v3363 = vcombine.high %v3329, %v3345
          %v3365 = vunpack.c.l.s4 1934713408
          %v3366 = vunpack.c.0.s8 %v3365
          %v3367 = vlaneseq
          %v3368 = vshrl.u32 %v3367, 7
          %v3369 = vsub.s32 %v3366, %v3368
          %v3370 = vrot.slane %v3362, %v3369
          %v3372 = vunpack.c.l.s4 1934713408
          %v3373 = vunpack.c.0.s8 %v3372
          %v3374 = vlaneseq
          %v3375 = vshrl.u32 %v3374, 7
          %v3376 = vsub.s32 %v3373, %v3375
          %v3377 = vrot.slane %v3363, %v3376
          %v3378 = vcombine.high %v3354, 0.0
          %v3379 = vcombine.high %v3361, 0.0
          %v3380 = vcombine.high %v3370, 0.0
          %v3381 = vcombine.high %v3377, 0.0
          %v3382 = vcombine.low %v2873, %v3165
          %v3383 = vcombine.high %v2873, %v3165
          %v3385 = vunpack.c.l.s4 1983009808
          %v3386 = vunpack.c.0.s8 %v3385
          %v3387 = vlaneseq
          %v3388 = vshrl.u32 %v3387, 7
          %v3389 = vsub.s32 %v3386, %v3388
          %v3390 = vrot.slane %v3382, %v3389
          %v3392 = vunpack.c.l.s4 1983009808
          %v3393 = vunpack.c.0.s8 %v3392
          %v3394 = vlaneseq
          %v3395 = vshrl.u32 %v3394, 7
          %v3396 = vsub.s32 %v3393, %v3395
          %v3397 = vrot.slane %v3383, %v3396
          %v3398 = vcombine.low %v3019, %v3311
          %v3399 = vcombine.high %v3019, %v3311
          %v3401 = vunpack.c.l.s4 1983009808
          %v3402 = vunpack.c.0.s8 %v3401
          %v3403 = vlaneseq
          %v3404 = vshrl.u32 %v3403, 7
          %v3405 = vsub.s32 %v3402, %v3404
          %v3406 = vrot.slane %v3398, %v3405
          %v3408 = vunpack.c.l.s4 1983009808
          %v3409 = vunpack.c.0.s8 %v3408
          %v3410 = vlaneseq
          %v3411 = vshrl.u32 %v3410, 7
          %v3412 = vsub.s32 %v3409, %v3411
          %v3413 = vrot.slane %v3399, %v3412
          %v3414 = vcombine.low %v3390, %v3406
          %v3415 = vcombine.high %v3390, %v3406
          %v3417 = vunpack.c.l.s4 1934713408
          %v3418 = vunpack.c.0.s8 %v3417
          %v3419 = vlaneseq
          %v3420 = vshrl.u32 %v3419, 7
          %v3421 = vsub.s32 %v3418, %v3420
          %v3422 = vrot.slane %v3414, %v3421
          %v3424 = vunpack.c.l.s4 1934713408
          %v3425 = vunpack.c.0.s8 %v3424
          %v3426 = vlaneseq
          %v3427 = vshrl.u32 %v3426, 7
          %v3428 = vsub.s32 %v3425, %v3427
          %v3429 = vrot.slane %v3415, %v3428
          %v3430 = vcombine.low %v3397, %v3413
          %v3431 = vcombine.high %v3397, %v3413
          %v3433 = vunpack.c.l.s4 1934713408
          %v3434 = vunpack.c.0.s8 %v3433
          %v3435 = vlaneseq
          %v3436 = vshrl.u32 %v3435, 7
          %v3437 = vsub.s32 %v3434, %v3436
          %v3438 = vrot.slane %v3430, %v3437
          %v3440 = vunpack.c.l.s4 1934713408
          %v3441 = vunpack.c.0.s8 %v3440
          %v3442 = vlaneseq
          %v3443 = vshrl.u32 %v3442, 7
          %v3444 = vsub.s32 %v3441, %v3443
          %v3445 = vrot.slane %v3431, %v3444
          %v3446 = vcombine.high %v3422, 0.0
          %v3447 = vcombine.high %v3429, 0.0
          %v3448 = vcombine.high %v3438, 0.0
          %v3449 = vcombine.high %v3445, 0.0
          %v3450 = vcombine.low %v3354, %v3361
          %v3452 = vunpack.c.l.s4 1983009808
          %v3453 = vunpack.c.0.s8 %v3452
          %v3454 = vlaneseq
          %v3455 = vshrl.u32 %v3454, 7
          %v3456 = vsub.s32 %v3453, %v3455
          %v3457 = vrot.slane %v3450, %v3456
          %v3458 = vcombine.low %v3378, %v3379
          %v3460 = vunpack.c.l.s4 1983009808
          %v3461 = vunpack.c.0.s8 %v3460
          %v3462 = vlaneseq
          %v3463 = vshrl.u32 %v3462, 7
          %v3464 = vsub.s32 %v3461, %v3463
          %v3465 = vrot.slane %v3458, %v3464
          %v3466 = vcombine.low %v3370, %v3377
          %v3468 = vunpack.c.l.s4 1983009808
          %v3469 = vunpack.c.0.s8 %v3468
          %v3470 = vlaneseq
          %v3471 = vshrl.u32 %v3470, 7
          %v3472 = vsub.s32 %v3469, %v3471
          %v3473 = vrot.slane %v3466, %v3472
          %v3474 = vcombine.low %v3380, %v3381
          %v3476 = vunpack.c.l.s4 1983009808
          %v3477 = vunpack.c.0.s8 %v3476
          %v3478 = vlaneseq
          %v3479 = vshrl.u32 %v3478, 7
          %v3480 = vsub.s32 %v3477, %v3479
          %v3481 = vrot.slane %v3474, %v3480
          %v3482 = vcombine.low %v3457, %v3465
          %v3483 = vcombine.high %v3457, %v3465
          %v3485 = vunpack.c.l.s4 1934713408
          %v3486 = vunpack.c.0.s8 %v3485
          %v3487 = vlaneseq
          %v3488 = vshrl.u32 %v3487, 7
          %v3489 = vsub.s32 %v3486, %v3488
          %v3490 = vrot.slane %v3482, %v3489
          %v3492 = vunpack.c.l.s4 1934713408
          %v3493 = vunpack.c.0.s8 %v3492
          %v3494 = vlaneseq
          %v3495 = vshrl.u32 %v3494, 7
          %v3496 = vsub.s32 %v3493, %v3495
          %v3497 = vrot.slane %v3483, %v3496
          %v3498 = vcombine.low %v3473, %v3481
          %v3499 = vcombine.high %v3473, %v3481
          %v3501 = vunpack.c.l.s4 1934713408
          %v3502 = vunpack.c.0.s8 %v3501
          %v3503 = vlaneseq
          %v3504 = vshrl.u32 %v3503, 7
          %v3505 = vsub.s32 %v3502, %v3504
          %v3506 = vrot.slane %v3498, %v3505
          %v3508 = vunpack.c.l.s4 1934713408
          %v3509 = vunpack.c.0.s8 %v3508
          %v3510 = vlaneseq
          %v3511 = vshrl.u32 %v3510, 7
          %v3512 = vsub.s32 %v3509, %v3511
          %v3513 = vrot.slane %v3499, %v3512
          %v3514 = vcombine.low %v3490, %v3506
          %v3515 = vcombine.high %v3490, %v3506
          %v3516 = vcombine.low %v3497, %v3513
          %v3517 = vcombine.high %v3497, %v3513
          %v3518 = vcombine.low %v3422, %v3429
          %v3520 = vunpack.c.l.s4 1983009808
          %v3521 = vunpack.c.0.s8 %v3520
          %v3522 = vlaneseq
          %v3523 = vshrl.u32 %v3522, 7
          %v3524 = vsub.s32 %v3521, %v3523
          %v3525 = vrot.slane %v3518, %v3524
          %v3526 = vcombine.low %v3446, %v3447
          %v3528 = vunpack.c.l.s4 1983009808
          %v3529 = vunpack.c.0.s8 %v3528
          %v3530 = vlaneseq
          %v3531 = vshrl.u32 %v3530, 7
          %v3532 = vsub.s32 %v3529, %v3531
          %v3533 = vrot.slane %v3526, %v3532
          %v3534 = vcombine.low %v3438, %v3445
          %v3536 = vunpack.c.l.s4 1983009808
          %v3537 = vunpack.c.0.s8 %v3536
          %v3538 = vlaneseq
          %v3539 = vshrl.u32 %v3538, 7
          %v3540 = vsub.s32 %v3537, %v3539
          %v3541 = vrot.slane %v3534, %v3540
          %v3542 = vcombine.low %v3448, %v3449
          %v3544 = vunpack.c.l.s4 1983009808
          %v3545 = vunpack.c.0.s8 %v3544
          %v3546 = vlaneseq
          %v3547 = vshrl.u32 %v3546, 7
          %v3548 = vsub.s32 %v3545, %v3547
          %v3549 = vrot.slane %v3542, %v3548
          %v3550 = vcombine.low %v3525, %v3533
          %v3551 = vcombine.high %v3525, %v3533
          %v3553 = vunpack.c.l.s4 1934713408
          %v3554 = vunpack.c.0.s8 %v3553
          %v3555 = vlaneseq
          %v3556 = vshrl.u32 %v3555, 7
          %v3557 = vsub.s32 %v3554, %v3556
          %v3558 = vrot.slane %v3550, %v3557
          %v3560 = vunpack.c.l.s4 1934713408
          %v3561 = vunpack.c.0.s8 %v3560
          %v3562 = vlaneseq
          %v3563 = vshrl.u32 %v3562, 7
          %v3564 = vsub.s32 %v3561, %v3563
          %v3565 = vrot.slane %v3551, %v3564
          %v3566 = vcombine.low %v3541, %v3549
          %v3567 = vcombine.high %v3541, %v3549
          %v3569 = vunpack.c.l.s4 1934713408
          %v3570 = vunpack.c.0.s8 %v3569
          %v3571 = vlaneseq
          %v3572 = vshrl.u32 %v3571, 7
          %v3573 = vsub.s32 %v3570, %v3572
          %v3574 = vrot.slane %v3566, %v3573
          %v3576 = vunpack.c.l.s4 1934713408
          %v3577 = vunpack.c.0.s8 %v3576
          %v3578 = vlaneseq
          %v3579 = vshrl.u32 %v3578, 7
          %v3580 = vsub.s32 %v3577, %v3579
          %v3581 = vrot.slane %v3567, %v3580
          %v3582 = vcombine.low %v3558, %v3574
          %v3583 = vcombine.high %v3558, %v3574
          %v3584 = vcombine.low %v3565, %v3581
          %v3585 = vcombine.high %v3565, %v3581
          %3588 = vrot.lane.b32.xlu0 %v3515, 8
          %v3589 = vpop.permute.xlu0 %3588
          %3590 = vrot.lane.b32.xlu0 %v3583, 8
          %v3591 = vpop.permute.xlu0 %3590
          %3596 = vrot.lane.b32.xlu0 %v3516, 16
          %v3597 = vpop.permute.xlu0 %3596
          %3598 = vrot.lane.b32.xlu0 %v3584, 16
          %v3599 = vpop.permute.xlu0 %3598
          %3604 = vrot.lane.b32.xlu0 %v3517, 24
          %v3605 = vpop.permute.xlu0 %3604
          %3606 = vrot.lane.b32.xlu0 %v3585, 24
          %v3607 = vpop.permute.xlu0 %3606
          %v3610 = vsel %vm2017, %v3514, %v3589
          %v3611 = vsel %vm2017, %v3582, %v3591
          %vm3612 = vcmask 130048
          %v3613 = vsel %vm3612, %v3610, %v3597
          %v3614 = vsel %vm3612, %v3611, %v3599
          %vm3615 = vcmask 195584
          %v3616 = vsel %vm3615, %v3613, %v3605
          %v3617 = vsel %vm3615, %v3614, %v3607
          %v3618 = vpack.c.bf16 %v3617, %v3616
          %v3619 = vld [vmem:[%s840] sm:$0xf]
          %v3620 = vld [vmem:[%s840 + $0x4] sm:$0xf]
          %v3621 = vld [vmem:[%s840 + $0x8] sm:$0xf]
          %v3622 = vld [vmem:[%s840 + $0xc] sm:$0xf]
          %v3623 = vld [vmem:[%s843] sm:$0x1]
          %v3625 = vlaneseq
          %v3626 = vshrl.u32 %v3625, 7
          %v3627 = vsub.s32 0, %v3626
          %v3628 = vrot.slane %v3623, %v3627
          %v3634 = vunpack.c.l.b16 %v3619
          %v3635 = vunpack.c.l.b16 %v3620
          %v3636 = vunpack.c.l.b16 %v3621
          %v3637 = vunpack.c.l.b16 %v3622
          %v3638 = vpack.c.b16 %v3635, %v3634
          %v3639 = vpack.c.b16 %v3637, %v3636
          %v3643 = vsel %vm901, %v3618, 0
          %3645 = vmatprep.subr.bf16.mxu0 0
          %3646 = vmatpush1.bf16.msra.mxu0 %v3638
          %3647 = vmatprep.subr.bf16.mxu0 0
          %3648 = vmatpush1.bf16.msra.mxu0 %v3639
          %3649 = vmatprep.subr.bf16.mxu0 0
          %3650 = vmatpush1.bf16.msra.mxu0 0
          %3651 = vmatprep.subr.bf16.mxu0 0
          %3652 = vmatpush1.bf16.msra.mxu0 0
          %3653 = vmatprep.subr.bf16.mxu0 0
          %3654 = vmatpush1.bf16.msra.mxu0 0
          %3655 = vmatprep.subr.bf16.mxu0 0
          %3656 = vmatpush1.bf16.msra.mxu0 0
          %3657 = vmatprep.subr.bf16.mxu0 0
          %3658 = vmatpush1.bf16.msra.mxu0 0
          %3659 = vmatprep.subr.bf16.mxu0 0
          %3660 = vmatpush1.bf16.msra.mxu0 0
          %3661 = vmatprep.subr.bf16.mxu0 0
          %3662 = vmatpush1.bf16.msra.mxu0 0
          %3663 = vmatprep.subr.bf16.mxu0 0
          %3664 = vmatpush1.bf16.msra.mxu0 0
          %3665 = vmatprep.subr.bf16.mxu0 0
          %3666 = vmatpush1.bf16.msra.mxu0 0
          %3667 = vmatprep.subr.bf16.mxu0 0
          %3668 = vmatpush1.bf16.msra.mxu0 0
          %3669 = vmatprep.subr.bf16.mxu0 0
          %3670 = vmatpush1.bf16.msra.mxu0 0
          %3671 = vmatprep.subr.bf16.mxu0 0
          %3672 = vmatpush1.bf16.msra.mxu0 0
          %3673 = vmatprep.subr.bf16.mxu0 0
          %3674 = vmatpush1.bf16.msra.mxu0 0
          %3675 = vmatprep.subr.bf16.mxu0 0
          %3676 = vmatpush1.bf16.msra.mxu0 0
          %3677 = vmatprep.mubr.bf16.mxu0 0
          %3678 = vmatmul.mubr.bf16.gmra.mrb[0].mxu0 %v3643
          %v3679 = vpop.f32.mrb[0].mxu0
          %v3680 = vadd.f32 %v3628, %v3679
          %v3681 = vpop.f32.mrb[0].mxu0
          %v3682 = vpop.f32.mrb[0].mxu0
          %v3683 = vadd.f32 %v3628, %v3682
          %v3684 = vpop.f32.mrb[0].mxu0
          %3685 = vdwg.mxu0
          %v3686 = vadd.f32 %v897, %v3680
          %v3687 = vadd.f32 %v898, %v3683
          %v3688 = vld [vmem:[%s846] sm:$0x1]
          %v3689 = vld [vmem:[%s849] sm:$0x1]
          %v3690 = vsel %vm901, %v3686, 0.0
          %3691 = vadd.xlane.f32.xlu0 %v3690
          %v3692 = vpop.xlane.xlu0 %3691
          %v3693 = vsel %vm901, %v3687, 0.0
          %3694 = vadd.xlane.f32.xlu0 %v3693
          %v3695 = vpop.xlane.xlu0 %3694
          %v3696 = vmul.f32 %v3692, %v908
          %v3697 = vmul.f32 %v3695, %v908
          %v3698 = vsub.f32 %v3686, %v3696
          %v3699 = vsub.f32 %v3687, %v3697
          %v3700 = vmul.f32 %v3698, %v3698
          %v3701 = vmul.f32 %v3699, %v3699
          %v3702 = vsel %vm901, %v3700, 0.0
          %3703 = vadd.xlane.f32.xlu0 %v3702
          %v3704 = vpop.xlane.xlu0 %3703
          %v3705 = vsel %vm901, %v3701, 0.0
          %3706 = vadd.xlane.f32.xlu0 %v3705
          %v3707 = vpop.xlane.xlu0 %3706
          %v3708 = vmul.f32 %v3704, %v908
          %v3709 = vmul.f32 %v3707, %v908
          %v3710 = vadd.f32 %v3708, 1e-05
          %v3711 = vadd.f32 %v3709, 1e-05
          %v3712 = vrsqrt.pop %v3710
          %v3713 = vrsqrt.pop %v3711
          %v3714 = vmul.f32 %v3698, %v3712
          %v3715 = vmul.f32 %v3699, %v3713
          %v3717 = vlaneseq
          %v3718 = vshrl.u32 %v3717, 7
          %v3719 = vsub.s32 0, %v3718
          %v3720 = vrot.slane %v3688, %v3719
          %v3722 = vmul.f32 %v3714, %v3720
          %v3723 = vmul.f32 %v3715, %v3720
          %v3725 = vlaneseq
          %v3726 = vshrl.u32 %v3725, 7
          %v3727 = vsub.s32 0, %v3726
          %v3728 = vrot.slane %v3689, %v3727
          %v3730 = vadd.f32 %v3722, %v3728
          %v3731 = vadd.f32 %v3723, %v3728
          %v3732 = vpack.c.bf16 %v3731, %v3730
          %3733 = vst.msk [vmem:[#allocation2] sm:$0xff] %vm901, %v3732
          %v3734 = vld [vmem:[%s872] sm:$0x1]
          %v3736 = vlaneseq
          %v3737 = vshrl.u32 %v3736, 7
          %v3738 = vsub.s32 0, %v3737
          %v3739 = vrot.slane %v3734, %v3738
          %v3741 = vadd.f32 %v3686, %v3739
          %v3742 = vadd.f32 %v3687, %v3739
          %3743 = vst.msk [vmem:[#allocation4] sm:$0xff] %vm901, %v3741
          %3744 = vst.msk [vmem:[#allocation4 + $0x8] sm:$0xff] %vm901, %v3742
        $region111: #{tpu_custom_call.1} parent=102 // pred_fallthru
          _
        %v3745 = vld [vmem:[#allocation2] sm:$0xff]
        %v3746 = vld [vmem:[%s693] sm:$0xff]
        %v3747 = vld [vmem:[%s693 + $0x8] sm:$0xff]
        %v3748 = vld [vmem:[%s693 + $0x10] sm:$0xff]
        %v3749 = vld [vmem:[%s693 + $0x18] sm:$0xff]
        %v3750 = vld [vmem:[%s693 + $0x20] sm:$0xff]
        %v3751 = vld [vmem:[%s693 + $0x28] sm:$0xff]
        %v3752 = vld [vmem:[%s693 + $0x30] sm:$0xff]
        %v3753 = vld [vmem:[%s693 + $0x38] sm:$0xff]
        %v3754 = vld [vmem:[%s858] sm:$0xf]
        %v3756 = vlaneseq
        %v3757 = vshrl.u32 %v3756, 7
        %v3758 = vsub.s32 0, %v3757
        %v3759 = vrot.slane %v3754, %v3758
        %v3760 = vlaneseq
        %v3761 = vshrl.u32 %v3760, 7
        %v3762 = vsub.s32 1, %v3761
        %v3763 = vrot.slane %v3754, %v3762
        %v3764 = vlaneseq
        %v3765 = vshrl.u32 %v3764, 7
        %v3766 = vsub.s32 2, %v3765
        %v3767 = vrot.slane %v3754, %v3766
        %v3768 = vlaneseq
        %v3769 = vshrl.u32 %v3768, 7
        %v3770 = vsub.s32 3, %v3769
        %v3771 = vrot.slane %v3754, %v3770
        %v3784 = vunpack.c.l.b16 %v3746
        %v3785 = vunpack.c.h.b16 %v3746
        %v3786 = vunpack.c.l.b16 %v3747
        %v3787 = vunpack.c.h.b16 %v3747
        %v3788 = vunpack.c.l.b16 %v3748
        %v3789 = vunpack.c.h.b16 %v3748
        %v3790 = vunpack.c.l.b16 %v3749
        %v3791 = vunpack.c.h.b16 %v3749
        %v3792 = vunpack.c.l.b16 %v3750
        %v3793 = vunpack.c.h.b16 %v3750
        %v3794 = vunpack.c.l.b16 %v3751
        %v3795 = vunpack.c.h.b16 %v3751
        %v3796 = vunpack.c.l.b16 %v3752
        %v3797 = vunpack.c.h.b16 %v3752
        %v3798 = vunpack.c.l.b16 %v3753
        %v3799 = vunpack.c.h.b16 %v3753
        %v3800 = vpack.c.b16 %v3788, %v3784
        %v3801 = vpack.c.b16 %v3789, %v3785
        %v3802 = vpack.c.b16 %v3790, %v3786
        %v3803 = vpack.c.b16 %v3791, %v3787
        %v3804 = vpack.c.b16 %v3796, %v3792
        %v3805 = vpack.c.b16 %v3797, %v3793
        %v3806 = vpack.c.b16 %v3798, %v3794
        %v3807 = vpack.c.b16 %v3799, %v3795
        %vm3816 = vcmask 261120
        %v3818 = vsel %vm3816, %v3745, 0
        %3820 = vmatprep.subr.bf16.mxu0 %v3801
        %3821 = vmatpush1.bf16.msra.mxu0 %v3800
        %3822 = vmatprep.subr.bf16.mxu0 %v3805
        %3823 = vmatpush1.bf16.msra.mxu0 %v3804
        %3824 = vmatprep.subr.bf16.mxu0 0
        %3825 = vmatpush1.bf16.msra.mxu0 0
        %3826 = vmatprep.subr.bf16.mxu0 0
        %3827 = vmatpush1.bf16.msra.mxu0 0
        %3828 = vmatprep.subr.bf16.mxu0 0
        %3829 = vmatpush1.bf16.msra.mxu0 0
        %3830 = vmatprep.subr.bf16.mxu0 0
        %3831 = vmatpush1.bf16.msra.mxu0 0
        %3832 = vmatprep.subr.bf16.mxu0 0
        %3833 = vmatpush1.bf16.msra.mxu0 0
        %3834 = vmatprep.subr.bf16.mxu0 0
        %3835 = vmatpush1.bf16.msra.mxu0 0
        %3836 = vmatprep.subr.bf16.mxu0 0
        %3837 = vmatpush1.bf16.msra.mxu0 0
        %3838 = vmatprep.subr.bf16.mxu0 0
        %3839 = vmatpush1.bf16.msra.mxu0 0
        %3840 = vmatprep.subr.bf16.mxu0 0
        %3841 = vmatpush1.bf16.msra.mxu0 0
        %3842 = vmatprep.subr.bf16.mxu0 0
        %3843 = vmatpush1.bf16.msra.mxu0 0
        %3844 = vmatprep.subr.bf16.mxu0 0
        %3845 = vmatpush1.bf16.msra.mxu0 0
        %3846 = vmatprep.subr.bf16.mxu0 0
        %3847 = vmatpush1.bf16.msra.mxu0 0
        %3848 = vmatprep.subr.bf16.mxu0 0
        %3849 = vmatpush1.bf16.msra.mxu0 0
        %3850 = vmatprep.subr.bf16.mxu0 0
        %3851 = vmatpush1.bf16.msra.mxu0 0
        %3852 = vmatprep.mubr.bf16.mxu0 0
        %3853 = vmatmul.mubr.bf16.gmra.mrb[0].mxu0 %v3818
        %v3854 = vpop.f32.mrb[0].mxu0
        %v3855 = vadd.f32 %v3759, %v3854
        %v3856 = vpop.f32.mrb[0].mxu0
        %v3857 = vadd.f32 %v3763, %v3856
        %v3858 = vpop.f32.mrb[0].mxu0
        %v3859 = vadd.f32 %v3759, %v3858
        %v3860 = vpop.f32.mrb[0].mxu0
        %v3861 = vadd.f32 %v3763, %v3860
        %3862 = vdwg.mxu0
        %3863 = vmatprep.subr.bf16.mxu0 %v3803
        %3864 = vmatpush1.bf16.msra.mxu0 %v3802
        %3865 = vmatprep.subr.bf16.mxu0 %v3807
        %3866 = vmatpush1.bf16.msra.mxu0 %v3806
        %3867 = vmatprep.subr.bf16.mxu0 0
        %3868 = vmatpush1.bf16.msra.mxu0 0
        %3869 = vmatprep.subr.bf16.mxu0 0
        %3870 = vmatpush1.bf16.msra.mxu0 0
        %3871 = vmatprep.subr.bf16.mxu0 0
        %3872 = vmatpush1.bf16.msra.mxu0 0
        %3873 = vmatprep.subr.bf16.mxu0 0
        %3874 = vmatpush1.bf16.msra.mxu0 0
        %3875 = vmatprep.subr.bf16.mxu0 0
        %3876 = vmatpush1.bf16.msra.mxu0 0
        %3877 = vmatprep.subr.bf16.mxu0 0
        %3878 = vmatpush1.bf16.msra.mxu0 0
        %3879 = vmatprep.subr.bf16.mxu0 0
        %3880 = vmatpush1.bf16.msra.mxu0 0
        %3881 = vmatprep.subr.bf16.mxu0 0
        %3882 = vmatpush1.bf16.msra.mxu0 0
        %3883 = vmatprep.subr.bf16.mxu0 0
        %3884 = vmatpush1.bf16.msra.mxu0 0
        %3885 = vmatprep.subr.bf16.mxu0 0
        %3886 = vmatpush1.bf16.msra.mxu0 0
        %3887 = vmatprep.subr.bf16.mxu0 0
        %3888 = vmatpush1.bf16.msra.mxu0 0
        %3889 = vmatprep.subr.bf16.mxu0 0
        %3890 = vmatpush1.bf16.msra.mxu0 0
        %3891 = vmatprep.subr.bf16.mxu0 0
        %3892 = vmatpush1.bf16.msra.mxu0 0
        %3893 = vmatprep.subr.bf16.mxu0 0
        %3894 = vmatpush1.bf16.msra.mxu0 0
        %3895 = vmatprep.mubr.bf16.mxu0 0
        %3896 = vmatmul.mubr.bf16.gmra.mrb[0].mxu0 %v3818
        %v3897 = vpop.f32.mrb[0].mxu0
        %v3898 = vadd.f32 %v3767, %v3897
        %v3899 = vpop.f32.mrb[0].mxu0
        %v3900 = vadd.f32 %v3771, %v3899
        %v3901 = vpop.f32.mrb[0].mxu0
        %v3902 = vadd.f32 %v3767, %v3901
        %v3903 = vpop.f32.mrb[0].mxu0
        %v3904 = vadd.f32 %v3771, %v3903
        %3905 = vdwg.mxu0
        %v3906 = vmul.f32 %v3855, 0.5
        %v3907 = vmul.f32 %v3857, 0.5
        %v3908 = vmul.f32 %v3898, 0.5
        %v3909 = vmul.f32 %v3900, 0.5
        %v3910 = vmul.f32 %v3859, 0.5
        %v3911 = vmul.f32 %v3861, 0.5
        %v3912 = vmul.f32 %v3902, 0.5
        %v3913 = vmul.f32 %v3904, 0.5
        %v3914 = vmul.f32 %v3855, 0.70710677
        %v3915 = vmul.f32 %v3857, 0.70710677
        %v3916 = vmul.f32 %v3898, 0.70710677
        %v3917 = vmul.f32 %v3900, 0.70710677
        %v3918 = vmul.f32 %v3859, 0.70710677
        %v3919 = vmul.f32 %v3861, 0.70710677
        %v3920 = vmul.f32 %v3902, 0.70710677
        %v3921 = vmul.f32 %v3904, 0.70710677
        %v3922 = verf.f32.pop %v3914
        %v3923 = verf.f32.pop %v3915
        %v3924 = verf.f32.pop %v3916
        %v3925 = verf.f32.pop %v3917
        %v3926 = verf.f32.pop %v3918
        %v3927 = verf.f32.pop %v3919
        %v3928 = verf.f32.pop %v3920
        %v3929 = verf.f32.pop %v3921
        %v3930 = vadd.f32 %v3922, 1.0
        %v3931 = vadd.f32 %v3923, 1.0
        %v3932 = vadd.f32 %v3924, 1.0
        %v3933 = vadd.f32 %v3925, 1.0
        %v3934 = vadd.f32 %v3926, 1.0
        %v3935 = vadd.f32 %v3927, 1.0
        %v3936 = vadd.f32 %v3928, 1.0
        %v3937 = vadd.f32 %v3929, 1.0
        %v3938 = vmul.f32 %v3906, %v3930
        %v3939 = vmul.f32 %v3907, %v3931
        %v3940 = vmul.f32 %v3908, %v3932
        %v3941 = vmul.f32 %v3909, %v3933
        %v3942 = vmul.f32 %v3910, %v3934
        %v3943 = vmul.f32 %v3911, %v3935
        %v3944 = vmul.f32 %v3912, %v3936
        %v3945 = vmul.f32 %v3913, %v3937
        %v3946 = vpack.c.bf16 %v3942, %v3938
        %v3947 = vpack.c.bf16 %v3943, %v3939
        %v3948 = vpack.c.bf16 %v3944, %v3940
        %v3949 = vpack.c.bf16 %v3945, %v3941
        %v3950 = vld [vmem:[#allocation4] sm:$0xff]
        %v3951 = vld [vmem:[#allocation4 + $0x8] sm:$0xff]
        %v3952 = vld [vmem:[%s868] sm:$0xf]
        %v3953 = vld [vmem:[%s868 + $0x4] sm:$0xf]
        %v3954 = vld [vmem:[%s868 + $0x8] sm:$0xf]
        %v3955 = vld [vmem:[%s868 + $0xc] sm:$0xf]
        %v3956 = vld [vmem:[%s868 + $0x10] sm:$0xf]
        %v3957 = vld [vmem:[%s868 + $0x14] sm:$0xf]
        %v3958 = vld [vmem:[%s868 + $0x18] sm:$0xf]
        %v3959 = vld [vmem:[%s868 + $0x1c] sm:$0xf]
        %v3960 = vld [vmem:[%s868 + $0x20] sm:$0xf]
        %v3961 = vld [vmem:[%s868 + $0x24] sm:$0xf]
        %v3962 = vld [vmem:[%s868 + $0x28] sm:$0xf]
        %v3963 = vld [vmem:[%s868 + $0x2c] sm:$0xf]
        %v3964 = vld [vmem:[%s868 + $0x30] sm:$0xf]
        %v3965 = vld [vmem:[%s868 + $0x34] sm:$0xf]
        %v3966 = vld [vmem:[%s868 + $0x38] sm:$0xf]
        %v3967 = vld [vmem:[%s868 + $0x3c] sm:$0xf]
        %v3968 = vld [vmem:[%s868 + $0x40] sm:$0xf]
        %v3969 = vld [vmem:[%s868 + $0x44] sm:$0xf]
        %v3970 = vld [vmem:[%s868 + $0x48] sm:$0xf]
        %v3971 = vld [vmem:[%s868 + $0x4c] sm:$0xf]
        %v3972 = vld [vmem:[%s868 + $0x50] sm:$0xf]
        %v3973 = vld [vmem:[%s868 + $0x54] sm:$0xf]
        %v3974 = vld [vmem:[%s868 + $0x58] sm:$0xf]
        %v3975 = vld [vmem:[%s868 + $0x5c] sm:$0xf]
        %v3976 = vld [vmem:[%s868 + $0x60] sm:$0xf]
        %v3977 = vld [vmem:[%s868 + $0x64] sm:$0xf]
        %v3978 = vld [vmem:[%s868 + $0x68] sm:$0xf]
        %v3979 = vld [vmem:[%s868 + $0x6c] sm:$0xf]
        %v3980 = vld [vmem:[%s868 + $0x70] sm:$0xf]
        %v3981 = vld [vmem:[%s868 + $0x74] sm:$0xf]
        %v3982 = vld [vmem:[%s868 + $0x78] sm:$0xf]
        %v3983 = vld [vmem:[%s868 + $0x7c] sm:$0xf]
        %v3984 = vld [vmem:[%s868 + $0x80] sm:$0xf]
        %v3985 = vld [vmem:[%s868 + $0x84] sm:$0xf]
        %v3986 = vld [vmem:[%s868 + $0x88] sm:$0xf]
        %v3987 = vld [vmem:[%s868 + $0x8c] sm:$0xf]
        %v3988 = vld [vmem:[%s868 + $0x90] sm:$0xf]
        %v3989 = vld [vmem:[%s868 + $0x94] sm:$0xf]
        %v3990 = vld [vmem:[%s868 + $0x98] sm:$0xf]
        %v3991 = vld [vmem:[%s868 + $0x9c] sm:$0xf]
        %v3992 = vld [vmem:[%s868 + $0xa0] sm:$0xf]
        %v3993 = vld [vmem:[%s868 + $0xa4] sm:$0xf]
        %v3994 = vld [vmem:[%s868 + $0xa8] sm:$0xf]
        %v3995 = vld [vmem:[%s868 + $0xac] sm:$0xf]
        %v3996 = vld [vmem:[%s868 + $0xb0] sm:$0xf]
        %v3997 = vld [vmem:[%s868 + $0xb4] sm:$0xf]
        %v3998 = vld [vmem:[%s868 + $0xb8] sm:$0xf]
        %v3999 = vld [vmem:[%s868 + $0xbc] sm:$0xf]
        %v4000 = vld [vmem:[%s868 + $0xc0] sm:$0xf]
        %v4001 = vld [vmem:[%s868 + $0xc4] sm:$0xf]
        %v4002 = vld [vmem:[%s868 + $0xc8] sm:$0xf]
        %v4003 = vld [vmem:[%s868 + $0xcc] sm:$0xf]
        %v4004 = vld [vmem:[%s868 + $0xd0] sm:$0xf]
        %v4005 = vld [vmem:[%s868 + $0xd4] sm:$0xf]
        %v4006 = vld [vmem:[%s868 + $0xd8] sm:$0xf]
        %v4007 = vld [vmem:[%s868 + $0xdc] sm:$0xf]
        %v4008 = vld [vmem:[%s868 + $0xe0] sm:$0xf]
        %v4009 = vld [vmem:[%s868 + $0xe4] sm:$0xf]
        %v4010 = vld [vmem:[%s868 + $0xe8] sm:$0xf]
        %v4011 = vld [vmem:[%s868 + $0xec] sm:$0xf]
        %v4012 = vld [vmem:[%s868 + $0xf0] sm:$0xf]
        %v4013 = vld [vmem:[%s868 + $0xf4] sm:$0xf]
        %v4014 = vld [vmem:[%s868 + $0xf8] sm:$0xf]
        %v4015 = vld [vmem:[%s868 + $0xfc] sm:$0xf]
        %v4080 = vunpack.c.l.b16 %v3952
        %v4081 = vunpack.c.l.b16 %v3953
        %v4082 = vunpack.c.l.b16 %v3954
        %v4083 = vunpack.c.l.b16 %v3955
        %v4084 = vunpack.c.l.b16 %v3956
        %v4085 = vunpack.c.l.b16 %v3957
        %v4086 = vunpack.c.l.b16 %v3958
        %v4087 = vunpack.c.l.b16 %v3959
        %v4088 = vunpack.c.l.b16 %v3960
        %v4089 = vunpack.c.l.b16 %v3961
        %v4090 = vunpack.c.l.b16 %v3962
        %v4091 = vunpack.c.l.b16 %v3963
        %v4092 = vunpack.c.l.b16 %v3964
        %v4093 = vunpack.c.l.b16 %v3965
        %v4094 = vunpack.c.l.b16 %v3966
        %v4095 = vunpack.c.l.b16 %v3967
        %v4096 = vunpack.c.l.b16 %v3968
        %v4097 = vunpack.c.l.b16 %v3969
        %v4098 = vunpack.c.l.b16 %v3970
        %v4099 = vunpack.c.l.b16 %v3971
        %v4100 = vunpack.c.l.b16 %v3972
        %v4101 = vunpack.c.l.b16 %v3973
        %v4102 = vunpack.c.l.b16 %v3974
        %v4103 = vunpack.c.l.b16 %v3975
        %v4104 = vunpack.c.l.b16 %v3976
        %v4105 = vunpack.c.l.b16 %v3977
        %v4106 = vunpack.c.l.b16 %v3978
        %v4107 = vunpack.c.l.b16 %v3979
        %v4108 = vunpack.c.l.b16 %v3980
        %v4109 = vunpack.c.l.b16 %v3981
        %v4110 = vunpack.c.l.b16 %v3982
        %v4111 = vunpack.c.l.b16 %v3983
        %v4112 = vunpack.c.l.b16 %v3984
        %v4113 = vunpack.c.l.b16 %v3985
        %v4114 = vunpack.c.l.b16 %v3986
        %v4115 = vunpack.c.l.b16 %v3987
        %v4116 = vunpack.c.l.b16 %v3988
        %v4117 = vunpack.c.l.b16 %v3989
        %v4118 = vunpack.c.l.b16 %v3990
        %v4119 = vunpack.c.l.b16 %v3991
        %v4120 = vunpack.c.l.b16 %v3992
        %v4121 = vunpack.c.l.b16 %v3993
        %v4122 = vunpack.c.l.b16 %v3994
        %v4123 = vunpack.c.l.b16 %v3995
        %v4124 = vunpack.c.l.b16 %v3996
        %v4125 = vunpack.c.l.b16 %v3997
        %v4126 = vunpack.c.l.b16 %v3998
        %v4127 = vunpack.c.l.b16 %v3999
        %v4128 = vunpack.c.l.b16 %v4000
        %v4129 = vunpack.c.l.b16 %v4001
        %v4130 = vunpack.c.l.b16 %v4002
        %v4131 = vunpack.c.l.b16 %v4003
        %v4132 = vunpack.c.l.b16 %v4004
        %v4133 = vunpack.c.l.b16 %v4005
        %v4134 = vunpack.c.l.b16 %v4006
        %v4135 = vunpack.c.l.b16 %v4007
        %v4136 = vunpack.c.l.b16 %v4008
        %v4137 = vunpack.c.l.b16 %v4009
        %v4138 = vunpack.c.l.b16 %v4010
        %v4139 = vunpack.c.l.b16 %v4011
        %v4140 = vunpack.c.l.b16 %v4012
        %v4141 = vunpack.c.l.b16 %v4013
        %v4142 = vunpack.c.l.b16 %v4014
        %v4143 = vunpack.c.l.b16 %v4015
        %v4144 = vpack.c.b16 %v4081, %v4080
        %v4145 = vpack.c.b16 %v4083, %v4082
        %v4146 = vpack.c.b16 %v4085, %v4084
        %v4147 = vpack.c.b16 %v4087, %v4086
        %v4148 = vpack.c.b16 %v4089, %v4088
        %v4149 = vpack.c.b16 %v4091, %v4090
        %v4150 = vpack.c.b16 %v4093, %v4092
        %v4151 = vpack.c.b16 %v4095, %v4094
        %v4152 = vpack.c.b16 %v4097, %v4096
        %v4153 = vpack.c.b16 %v4099, %v4098
        %v4154 = vpack.c.b16 %v4101, %v4100
        %v4155 = vpack.c.b16 %v4103, %v4102
        %v4156 = vpack.c.b16 %v4105, %v4104
        %v4157 = vpack.c.b16 %v4107, %v4106
        %v4158 = vpack.c.b16 %v4109, %v4108
        %v4159 = vpack.c.b16 %v4111, %v4110
        %v4160 = vpack.c.b16 %v4113, %v4112
        %v4161 = vpack.c.b16 %v4115, %v4114
        %v4162 = vpack.c.b16 %v4117, %v4116
        %v4163 = vpack.c.b16 %v4119, %v4118
        %v4164 = vpack.c.b16 %v4121, %v4120
        %v4165 = vpack.c.b16 %v4123, %v4122
        %v4166 = vpack.c.b16 %v4125, %v4124
        %v4167 = vpack.c.b16 %v4127, %v4126
        %v4168 = vpack.c.b16 %v4129, %v4128
        %v4169 = vpack.c.b16 %v4131, %v4130
        %v4170 = vpack.c.b16 %v4133, %v4132
        %v4171 = vpack.c.b16 %v4135, %v4134
        %v4172 = vpack.c.b16 %v4137, %v4136
        %v4173 = vpack.c.b16 %v4139, %v4138
        %v4174 = vpack.c.b16 %v4141, %v4140
        %v4175 = vpack.c.b16 %v4143, %v4142
        %4208 = vmatprep.subr.bf16.mxu0 0
        %4209 = vmatpush1.bf16.msra.mxu0 %v4144
        %4210 = vmatprep.subr.bf16.mxu0 0
        %4211 = vmatpush1.bf16.msra.mxu0 %v4145
        %4212 = vmatprep.subr.bf16.mxu0 0
        %4213 = vmatpush1.bf16.msra.mxu0 %v4146
        %4214 = vmatprep.subr.bf16.mxu0 0
        %4215 = vmatpush1.bf16.msra.mxu0 %v4147
        %4216 = vmatprep.subr.bf16.mxu0 0
        %4217 = vmatpush1.bf16.msra.mxu0 %v4148
        %4218 = vmatprep.subr.bf16.mxu0 0
        %4219 = vmatpush1.bf16.msra.mxu0 %v4149
        %4220 = vmatprep.subr.bf16.mxu0 0
        %4221 = vmatpush1.bf16.msra.mxu0 %v4150
        %4222 = vmatprep.subr.bf16.mxu0 0
        %4223 = vmatpush1.bf16.msra.mxu0 %v4151
        %4224 = vmatprep.subr.bf16.mxu0 0
        %4225 = vmatpush1.bf16.msra.mxu0 %v4152
        %4226 = vmatprep.subr.bf16.mxu0 0
        %4227 = vmatpush1.bf16.msra.mxu0 %v4153
        %4228 = vmatprep.subr.bf16.mxu0 0
        %4229 = vmatpush1.bf16.msra.mxu0 %v4154
        %4230 = vmatprep.subr.bf16.mxu0 0
        %4231 = vmatpush1.bf16.msra.mxu0 %v4155
        %4232 = vmatprep.subr.bf16.mxu0 0
        %4233 = vmatpush1.bf16.msra.mxu0 %v4156
        %4234 = vmatprep.subr.bf16.mxu0 0
        %4235 = vmatpush1.bf16.msra.mxu0 %v4157
        %4236 = vmatprep.subr.bf16.mxu0 0
        %4237 = vmatpush1.bf16.msra.mxu0 %v4158
        %4238 = vmatprep.subr.bf16.mxu0 0
        %4239 = vmatpush1.bf16.msra.mxu0 %v4159
        %4240 = vmatprep.mubr.bf16.mxu0 %v3947
        %4241 = vmatmul.mubr.bf16.gmra.mrb[0].mxu0 %v3946
        %v4242 = vpop.f32.mrb[0].mxu0
        %v4243 = vadd.f32 0.0, %v4242
        %v4244 = vpop.f32.mrb[0].mxu0
        %v4245 = vpop.f32.mrb[0].mxu0
        %v4246 = vadd.f32 0.0, %v4245
        %v4247 = vpop.f32.mrb[0].mxu0
        %4248 = vdwg.mxu0
        %4249 = vmatprep.subr.bf16.mxu0 0
        %4250 = vmatpush1.bf16.msra.mxu0 %v4160
        %4251 = vmatprep.subr.bf16.mxu0 0
        %4252 = vmatpush1.bf16.msra.mxu0 %v4161
        %4253 = vmatprep.subr.bf16.mxu0 0
        %4254 = vmatpush1.bf16.msra.mxu0 %v4162
        %4255 = vmatprep.subr.bf16.mxu0 0
        %4256 = vmatpush1.bf16.msra.mxu0 %v4163
        %4257 = vmatprep.subr.bf16.mxu0 0
        %4258 = vmatpush1.bf16.msra.mxu0 %v4164
        %4259 = vmatprep.subr.bf16.mxu0 0
        %4260 = vmatpush1.bf16.msra.mxu0 %v4165
        %4261 = vmatprep.subr.bf16.mxu0 0
        %4262 = vmatpush1.bf16.msra.mxu0 %v4166
        %4263 = vmatprep.subr.bf16.mxu0 0
        %4264 = vmatpush1.bf16.msra.mxu0 %v4167
        %4265 = vmatprep.subr.bf16.mxu0 0
        %4266 = vmatpush1.bf16.msra.mxu0 %v4168
        %4267 = vmatprep.subr.bf16.mxu0 0
        %4268 = vmatpush1.bf16.msra.mxu0 %v4169
        %4269 = vmatprep.subr.bf16.mxu0 0
        %4270 = vmatpush1.bf16.msra.mxu0 %v4170
        %4271 = vmatprep.subr.bf16.mxu0 0
        %4272 = vmatpush1.bf16.msra.mxu0 %v4171
        %4273 = vmatprep.subr.bf16.mxu0 0
        %4274 = vmatpush1.bf16.msra.mxu0 %v4172
        %4275 = vmatprep.subr.bf16.mxu0 0
        %4276 = vmatpush1.bf16.msra.mxu0 %v4173
        %4277 = vmatprep.subr.bf16.mxu0 0
        %4278 = vmatpush1.bf16.msra.mxu0 %v4174
        %4279 = vmatprep.subr.bf16.mxu0 0
        %4280 = vmatpush1.bf16.msra.mxu0 %v4175
        %4281 = vmatprep.mubr.bf16.mxu0 %v3949
        %4282 = vmatmul.mubr.bf16.gmra.mrb[0].mxu0 %v3948
        %v4283 = vpop.f32.mrb[0].mxu0
        %v4284 = vadd.f32 %v4243, %v4283
        %v4285 = vpop.f32.mrb[0].mxu0
        %v4286 = vpop.f32.mrb[0].mxu0
        %v4287 = vadd.f32 %v4246, %v4286
        %v4288 = vpop.f32.mrb[0].mxu0
        %4289 = vdwg.mxu0
        %v4290 = vadd.f32 %v3950, %v4284
        %v4291 = vadd.f32 %v3951, %v4287
        %4292 = vst.msk [vmem:[#allocation4] sm:$0xff] %vm3816, %v4290
        %4293 = vst.msk [vmem:[#allocation4 + $0x8] sm:$0xff] %vm3816, %v4291
        %s4294 = sand.u32 %s497, 1
        %s4295 = scalar_lea.sflag [#allocation7], %s4294
        %s4296 = sand.u32 %s497, 1
        %s4297 = smul.addr %s4296, 64
        %s4298 = scalar_lea.vmem [#allocation6], %s4297
        // Predicated region
        $region121: #{tpu_custom_call.1} parent=102 // pred_check
          %p4299 = pneg %p481
        $region122: #{tpu_custom_call.1} parent=102 // pred_check_branch
          %4301 = sbr.rel (%p4299) target = $region124
        $region123: #{tpu_custom_call.1} parent=102 // pred_region
          %s4303 = ssub.s32 256, 256
          %4304 = vsyncadd [#allocation5], %s4303
          %s4305 = sshll.u32 [#allocation4], 4
          %s4306 = int_to_ptr.vmem [resolvable:$true] %s4305
          %4311 = dma.vmem_to_hbm [thread:$0]  %s4306, 256, %s17, [#allocation5], 128, 128, 8
        $region124: #{tpu_custom_call.1} parent=102 // pred_fallthru
          _
        // Predicated region
        $region125: #{tpu_custom_call.1} parent=102 // pred_check
          %p4312 = pneg %p507
        $region126: #{tpu_custom_call.1} parent=102 // pred_check_branch
          %4314 = sbr.rel (%p4312) target = $region128
        $region127: #{tpu_custom_call.1} parent=102 // pred_region
          %s4316 = ssub.s32 1024, 1024
          %4317 = vsyncadd %s4295, %s4316
          %s4318 = smul.addr %s38, 8
          %s4319 = smul.addr %s4318, 128
          %s4320 = scalar_lea.hbm %s18, %s4319
          %s4321 = sshll.u32 %s4298, 4
          %s4322 = int_to_ptr.vmem [resolvable:$true] %s4321
          %4327 = dma.vmem_to_hbm [thread:$0]  %s4322, 1024, %s4320, %s4295, 128, 128, 8
        $region128: #{tpu_custom_call.1} parent=102 // pred_fallthru
          _
        // Predicated region
        $region129: #{tpu_custom_call.1} parent=102 // pred_check
          %p4328 = pneg %p481
        $region130: #{tpu_custom_call.1} parent=102 // pred_check_branch
          %4330 = sbr.rel (%p4328) target = $region132
        $region131: #{tpu_custom_call.1} parent=102 // pred_region
          %4331 = dma.done [#allocation5], 256
        $region132: #{tpu_custom_call.1} parent=102 // pred_fallthru
          _
      $region103: #{tpu_custom_call.1} parent=5 // pred_fallthru
        _
      %p4332 = scmp.le.s32.totalorder 2, %s29
      // Predicated region
      $region133: #{tpu_custom_call.1} parent=5 // pred_check
        %p4333 = pneg %p4332
      $region134: #{tpu_custom_call.1} parent=5 // pred_check_branch
        %4335 = sbr.rel (%p4333) target = $region136
      $region135: #{tpu_custom_call.1} parent=5 // pred_region
        %s4336 = ssub.s32 %s29, 2
        // Predicated region
        $region137: #{tpu_custom_call.1} parent=135 // pred_check
          %p4337 = pneg %p513
        $region138: #{tpu_custom_call.1} parent=135 // pred_check_branch
          %4339 = sbr.rel (%p4337) target = $region140
        $region139: #{tpu_custom_call.1} parent=135 // pred_region
          %s4340 = sand.u32 %s498, 1
          %s4341 = scalar_lea.sflag [#allocation7], %s4340
          %s4342 = sand.u32 %s498, 1
          %s4343 = smul.addr %s4342, 64
          %s4344 = scalar_lea.vmem [#allocation6], %s4343
          %4345 = dma.done %s4341, 1024
        $region140: #{tpu_custom_call.1} parent=135 // pred_fallthru
          _
      $region136: #{tpu_custom_call.1} parent=5 // pred_fallthru
        _
    $region6: #{tpu_custom_call.1} parent=1 // loop_footer
      %s33 = sadd.s32 1, %s29
    $region7: #{tpu_custom_call.1} parent=1 // loop_footer_branch
      %28 = sbr.rel target = $region3
    $region8: #{tpu_custom_call.1} parent=1 // loop_exit
      _
    %4346 = vsyncpa [#allocation5], 1
    %s4347 = scalar_lea.sflag [#allocation5], 1
    %4348 = vsyncpa %s4347, 1
    %4349 = vsyncpa [#allocation7], 1
    %s4350 = scalar_lea.sflag [#allocation7], 1
    %4351 = vsyncpa %s4350, 1

</llo_original>
